<compile_context>
chip_gen: v7x
topology: tpu7x:2x2x1
jax: 0.10.0
libtpu: 0.0.40
codegen_flags: <defaults>
</compile_context>

<pallas_src>
import functools

import jax
import jax.numpy as jnp
from jax import lax
from jax.experimental import pallas as pl
from jax.experimental.pallas import tpu as pltpu

# ---- module hyper-parameters (from __init__) --------------------------------
R_MAX = 0.5
SIGMA = 0.05
THRESHOLD = 0.5
DECAY = 0.5
N_CDF = 5          # inverse-CDF thresholds k = 0..4 ; P(X > 5 | lam <= 0.5) ~ 1.4e-5

# murmur3 fmix32 constants as plain Python ints (two's-complement int32 values).
# NOTE: these must NOT be jnp arrays -- jax.Arrays captured by the kernel
# closure are rejected by pallas_call ("captures constants").
_M1 = -2048144789     # 0x85EBCA6B
_M2 = -1028477387     # 0xC2B2AE35
_GOLD = -1640531527   # 0x9E3779B9


def _wrap_i32(v):
    """Wrap a Python int into signed int32 range (avoids out-of-range literals)."""
    v &= 0xFFFFFFFF
    return v - (1 << 32) if v >= (1 << 31) else v


def _fmix32(x):
    """murmur3 finalizer (full avalanche) on int32 values; wrapping multiplies."""
    x = x ^ lax.shift_right_logical(x, 16)
    x = x * _M1
    x = x ^ lax.shift_right_logical(x, 13)
    x = x * _M2
    x = x ^ lax.shift_right_logical(x, 16)
    return x


def _spike_pop_kernel(seed_ref, taus_ref, mus_ref, w_ref, b_ref, out_ref,
                      cnt_ref, h_ref, *, time_window, tile_m, m_sub, c_chunk,
                      padded_m, num_cosines, embedding_dim):
    c = num_cosines
    e = embedding_dim

    # per-tile whitened seed (scalar work only)
    seed = seed_ref[0]
    seed_h = _fmix32(seed * _GOLD + 1)

    # per-element counter pieces, hoisted out of all loops
    row_off = lax.broadcasted_iota(jnp.int32, (c_chunk, m_sub), 0) * padded_m
    col_off = (lax.broadcasted_iota(jnp.int32, (c_chunk, m_sub), 1)
               + pl.program_id(0) * tile_m)
    t_stride = c * padded_m          # unique counter per (cosine, global row, t)
    inv_2sig2 = -1.0 / (2.0 * SIGMA * SIGMA)

    # ---- Poisson counts -> (C, T*tile_m) bf16 slab, computed in small
    #      (c_chunk, m_sub) blocks so thresholds/temps never spill -------------
    for c0 in range(0, c, c_chunk):
        mus_c = mus_ref[c0:c0 + c_chunk, :]                    # (c_chunk, 1)
        for m0 in range(0, tile_m, m_sub):
            taus_b = taus_ref[:, m0:m0 + m_sub]                # (1, m_sub)
            diff = taus_b - mus_c                              # (c_chunk, m_sub)
            lam = R_MAX * jnp.exp(diff * diff * inv_2sig2)

            # cdf_k = exp(-lam) * sum_{j<=k} lam^j / j!, scaled to 24-bit ints.
            pmf = jnp.exp(-lam)
            cdf = pmf
            thr = []
            for k in range(N_CDF):
                thr.append((cdf * 16777216.0).astype(jnp.int32))
                pmf = pmf * lam * (1.0 / (k + 1))
                cdf = cdf + pmf

            base = row_off + col_off + _wrap_i32(c0 * padded_m + m0)
            base_s = base ^ seed_h                             # seed folded once

            for t in range(time_window):
                x = base_s + _wrap_i32(t * t_stride)
                u24 = lax.shift_right_logical(_fmix32(x), 8)   # 24 uniform bits
                cnt = (u24 >= thr[0]).astype(jnp.int32)
                for k in range(1, N_CDF):
                    cnt = cnt + (u24 >= thr[k]).astype(jnp.int32)
                col = t * tile_m + m0
                cnt_ref[c0:c0 + c_chunk, col:col + m_sub] = cnt.astype(jnp.bfloat16)

    # ---- one bf16 MXU matmul for the whole time window, result in VMEM -------
    h_ref[...] = jnp.dot(w_ref[...], cnt_ref[...],
                         preferred_element_type=jnp.float32)   # (E, T*tile_m)

    # ---- LIF recurrence over time (bias broadcast hoisted, added per slice) --
    bias = jnp.broadcast_to(b_ref[...], (e, tile_m))
    mem = jnp.zeros((e, tile_m), jnp.float32)
    spike = jnp.zeros((e, tile_m), jnp.float32)
    for t in range(time_window):
        h_t = h_ref[:, t * tile_m:(t + 1) * tile_m] + bias
        mem = DECAY * (mem - mem * spike) + h_t                # decay*mem*(1-spike)+h
        spike = (mem > THRESHOLD).astype(jnp.float32)
        out_ref[t, :, :] = spike.astype(out_ref.dtype)


def _pick_tiling(m, tile_m):
    """Lane-dense tile over flattened B*N. Prefer >=2 grid steps (v7x megacore)."""
    lane = 128
    n_blocks = max(1, pl.cdiv(m, lane))
    max_tb = max(1, min(tile_m // lane, n_blocks))
    tb = max(b for b in range(1, max_tb + 1) if n_blocks % b == 0)
    if n_blocks // tb < 2 and n_blocks >= 4:
        cands = [b for b in range(1, max_tb + 1)
                 if n_blocks % b == 0 and n_blocks // b >= 2]
        if cands:
            tb = max(cands)
    return tb * lane, n_blocks * lane


def spike_pop_encoding(taus, mus, w, b, seed, time_window, tile_m=512):
    """taus: (B, N); mus: (C,); w: (E, C) (PyTorch Linear layout); b: (E,).

    Returns (time_window, B*N, E) float32 spike trains (0/1)."""
    batch, n = taus.shape
    m = batch * n
    e, c = w.shape

    eff_tile, padded_m = _pick_tiling(m, tile_m)
    grid = (padded_m // eff_tile,)
    m_sub = min(eff_tile, 256)
    c_chunk = 16 if (c >= 16 and c % 16 == 0) else c

    taus_row = jnp.zeros((1, padded_m), jnp.float32)
    taus_row = taus_row.at[0, :m].set(taus.reshape(m).astype(jnp.float32))
    mus_col = mus.reshape(c, 1).astype(jnp.float32)
    w_bf = w.astype(jnp.bfloat16)          # half the W DMA, no in-kernel cast
    b_col = b.reshape(e, 1).astype(jnp.float32)
    seed_arr = jnp.asarray([seed], dtype=jnp.int32)

    kernel = functools.partial(
        _spike_pop_kernel, time_window=time_window, tile_m=eff_tile,
        m_sub=m_sub, c_chunk=c_chunk, padded_m=padded_m,
        num_cosines=c, embedding_dim=e)

    out = pl.pallas_call(
        kernel,
        out_shape=jax.ShapeDtypeStruct((time_window, e, padded_m),
                                       jnp.bfloat16),
        grid_spec=pltpu.PrefetchScalarGridSpec(
            num_scalar_prefetch=1,                              # seed -> SMEM
            grid=grid,
            in_specs=[
                pl.BlockSpec((1, eff_tile), lambda i, s: (0, i)),   # taus
                pl.BlockSpec((c, 1), lambda i, s: (0, 0)),          # mus
                pl.BlockSpec((e, c), lambda i, s: (0, 0)),          # W (E,C) bf16
                pl.BlockSpec((e, 1), lambda i, s: (0, 0)),          # bias
            ],
            out_specs=pl.BlockSpec((time_window, e, eff_tile),
                                   lambda i, s: (0, 0, i)),
            scratch_shapes=[
                pltpu.VMEM((c, time_window * eff_tile), jnp.bfloat16),  # counts
                pltpu.VMEM((e, time_window * eff_tile), jnp.float32),   # W@counts
            ],
        ),
        compiler_params=pltpu.CompilerParams(
            dimension_semantics=("parallel",),
            vmem_limit_bytes=32 * 1024 * 1024),
    )(seed_arr, taus_row, mus_col, w_bf, b_col)

    # (T, E, padded_M) bf16 -> PyTorch layout (T, B*N, E).  Transpose/slice in
    # bf16 and upcast to f32 only at the end (less HBM traffic than f32 first).
    return out.transpose(0, 2, 1)[:, :m, :].astype(jnp.float32)


if __name__ == "__main__":
    # Small shapes consistent with the module's forward pass.
    num_cosines = 64
    embedding_dim = 32
    time_window = 8
    batch, n_taus = 2, 8

    key = jax.random.PRNGKey(0)
    k_tau, k_w, k_b = jax.random.split(key, 3)

    # taus are IQN quantile fractions in [0, 1].
    taus = jax.random.uniform(k_tau, (batch, n_taus), dtype=jnp.float32)

    # mus = arange(num_cosines) / num_cosines (deterministic, from __init__).
    mus = jnp.arange(num_cosines, dtype=jnp.float32) / num_cosines

    # Linear(num_cosines, embedding_dim): PyTorch layout W (E, C), b (E,)
    bound = 1.0 / (num_cosines ** 0.5)
    w = jax.random.uniform(k_w, (embedding_dim, num_cosines),
                           minval=-bound, maxval=bound, dtype=jnp.float32)
    b = jax.random.uniform(k_b, (embedding_dim,),
                           minval=-bound, maxval=bound, dtype=jnp.float32)

    out = spike_pop_encoding(taus, mus, w, b, seed=1234,
                             time_window=time_window)
    out = jax.block_until_ready(out)

    assert out.shape == (time_window, batch * n_taus, embedding_dim)
    # Spikes must be binary.
    assert bool(jnp.all((out == 0.0) | (out == 1.0)))

    print("KERNEL_OK")
</pallas_src>

<mosaic_0001>
module attributes {stable_mosaic.version = 11 : i64} {
  func.func @_spike_pop_kernel(%arg0: i32, %arg1: memref<1xi32, #tpu.memory_space<smem>>, %arg2: memref<1x128xf32, #tpu.memory_space<vmem>>, %arg3: memref<64x1xf32, #tpu.memory_space<vmem>>, %arg4: memref<32x64xbf16, #tpu.memory_space<vmem>>, %arg5: memref<32x1xf32, #tpu.memory_space<vmem>>, %arg6: memref<8x32x128xbf16, #tpu.memory_space<vmem>>, %arg7: memref<64x1024xbf16, #tpu.memory_space<vmem>>, %arg8: memref<32x1024xf32, #tpu.memory_space<vmem>>) attributes {dimension_semantics = [#tpu.dimension_semantics<parallel>], iteration_bounds = array<i64: 1>, scalar_prefetch = 1 : i64, scratch_operands = 2 : i64, tpu.core_type = #tpu.core_type<tc>, window_params = [{transform_indices = @transform_0, window_bounds = array<i64: 1, 128>}, {pipeline_mode = #tpu.pipeline_mode<synchronous>, transform_indices = @transform_1, window_bounds = array<i64: 64, 1>}, {pipeline_mode = #tpu.pipeline_mode<synchronous>, transform_indices = @transform_2, window_bounds = array<i64: 32, 64>}, {pipeline_mode = #tpu.pipeline_mode<synchronous>, transform_indices = @transform_3, window_bounds = array<i64: 32, 1>}, {transform_indices = @transform_4, window_bounds = array<i64: 8, 32, 128>}]} {
    %c0 = arith.constant 0 : index
    %0 = memref.load %arg1[%c0] : memref<1xi32, #tpu.memory_space<smem>>
    %c-1640531527_i32 = arith.constant -1640531527 : i32
    %1 = arith.muli %0, %c-1640531527_i32 : i32
    %c1_i32 = arith.constant 1 : i32
    %2 = arith.addi %1, %c1_i32 : i32
    %c16_i32 = arith.constant 16 : i32
    %3 = arith.shrui %2, %c16_i32 : i32
    %4 = arith.xori %2, %3 : i32
    %c-2048144789_i32 = arith.constant -2048144789 : i32
    %5 = arith.muli %4, %c-2048144789_i32 : i32
    %c13_i32 = arith.constant 13 : i32
    %6 = arith.shrui %5, %c13_i32 : i32
    %7 = arith.xori %5, %6 : i32
    %c-1028477387_i32 = arith.constant -1028477387 : i32
    %8 = arith.muli %7, %c-1028477387_i32 : i32
    %c16_i32_0 = arith.constant 16 : i32
    %9 = arith.shrui %8, %c16_i32_0 : i32
    %10 = arith.xori %8, %9 : i32
    %11 = tpu.iota {dimensions = array<i32: 0>} : vector<16x128xi32>
    %c128_i32 = arith.constant 128 : i32
    %12 = vector.broadcast %c128_i32 : i32 to vector<16x128xi32>
    %13 = arith.muli %11, %12 : vector<16x128xi32>
    %14 = tpu.iota {dimensions = array<i32: 1>} : vector<16x128xi32>
    %c128_i32_1 = arith.constant 128 : i32
    %15 = arith.muli %arg0, %c128_i32_1 : i32
    %16 = vector.broadcast %15 : i32 to vector<16x128xi32>
    %17 = arith.addi %14, %16 : vector<16x128xi32>
    %c0_2 = arith.constant 0 : index
    %c0_3 = arith.constant 0 : index
    %18 = vector.load %arg3[%c0_2, %c0_3] : memref<64x1xf32, #tpu.memory_space<vmem>>, vector<16x1xf32>
    %c0_4 = arith.constant 0 : index
    %c0_5 = arith.constant 0 : index
    %19 = vector.load %arg2[%c0_4, %c0_5] : memref<1x128xf32, #tpu.memory_space<vmem>>, vector<1x128xf32>
    %20 = vector.broadcast %19 : vector<1x128xf32> to vector<16x128xf32>
    %21 = vector.broadcast %18 : vector<16x1xf32> to vector<16x128xf32>
    %22 = arith.subf %20, %21 : vector<16x128xf32>
    %23 = arith.mulf %22, %22 : vector<16x128xf32>
    %cst = arith.constant -2.000000e+02 : f32
    %24 = vector.broadcast %cst : f32 to vector<16x128xf32>
    %25 = arith.mulf %23, %24 : vector<16x128xf32>
    %26 = math.exp %25 : vector<16x128xf32>
    %cst_6 = arith.constant 5.000000e-01 : f32
    %27 = vector.broadcast %cst_6 : f32 to vector<16x128xf32>
    %28 = arith.mulf %27, %26 : vector<16x128xf32>
    %cst_7 = arith.constant 0.000000e+00 : f32
    %29 = vector.broadcast %cst_7 : f32 to vector<16x128xf32>
    %30 = arith.subf %29, %28 : vector<16x128xf32>
    %31 = math.exp %30 : vector<16x128xf32>
    %cst_8 = arith.constant 0x4B800000 : f32
    %32 = vector.broadcast %cst_8 : f32 to vector<16x128xf32>
    %33 = arith.mulf %31, %32 : vector<16x128xf32>
    %34 = arith.fptosi %33 : vector<16x128xf32> to vector<16x128xi32>
    %35 = arith.mulf %31, %28 : vector<16x128xf32>
    %cst_9 = arith.constant 1.000000e+00 : f32
    %36 = vector.broadcast %cst_9 : f32 to vector<16x128xf32>
    %37 = arith.mulf %35, %36 : vector<16x128xf32>
    %38 = arith.addf %31, %37 : vector<16x128xf32>
    %cst_10 = arith.constant 0x4B800000 : f32
    %39 = vector.broadcast %cst_10 : f32 to vector<16x128xf32>
    %40 = arith.mulf %38, %39 : vector<16x128xf32>
    %41 = arith.fptosi %40 : vector<16x128xf32> to vector<16x128xi32>
    %42 = arith.mulf %37, %28 : vector<16x128xf32>
    %cst_11 = arith.constant 5.000000e-01 : f32
    %43 = vector.broadcast %cst_11 : f32 to vector<16x128xf32>
    %44 = arith.mulf %42, %43 : vector<16x128xf32>
    %45 = arith.addf %38, %44 : vector<16x128xf32>
    %cst_12 = arith.constant 0x4B800000 : f32
    %46 = vector.broadcast %cst_12 : f32 to vector<16x128xf32>
    %47 = arith.mulf %45, %46 : vector<16x128xf32>
    %48 = arith.fptosi %47 : vector<16x128xf32> to vector<16x128xi32>
    %49 = arith.mulf %44, %28 : vector<16x128xf32>
    %cst_13 = arith.constant 0.333333343 : f32
    %50 = vector.broadcast %cst_13 : f32 to vector<16x128xf32>
    %51 = arith.mulf %49, %50 : vector<16x128xf32>
    %52 = arith.addf %45, %51 : vector<16x128xf32>
    %cst_14 = arith.constant 0x4B800000 : f32
    %53 = vector.broadcast %cst_14 : f32 to vector<16x128xf32>
    %54 = arith.mulf %52, %53 : vector<16x128xf32>
    %55 = arith.fptosi %54 : vector<16x128xf32> to vector<16x128xi32>
    %56 = arith.mulf %51, %28 : vector<16x128xf32>
    %cst_15 = arith.constant 2.500000e-01 : f32
    %57 = vector.broadcast %cst_15 : f32 to vector<16x128xf32>
    %58 = arith.mulf %56, %57 : vector<16x128xf32>
    %59 = arith.addf %52, %58 : vector<16x128xf32>
    %cst_16 = arith.constant 0x4B800000 : f32
    %60 = vector.broadcast %cst_16 : f32 to vector<16x128xf32>
    %61 = arith.mulf %59, %60 : vector<16x128xf32>
    %62 = arith.fptosi %61 : vector<16x128xf32> to vector<16x128xi32>
    %63 = arith.addi %13, %17 : vector<16x128xi32>
    %c0_i32 = arith.constant 0 : i32
    %64 = vector.broadcast %c0_i32 : i32 to vector<16x128xi32>
    %65 = arith.addi %63, %64 : vector<16x128xi32>
    %66 = vector.broadcast %10 : i32 to vector<16x128xi32>
    %67 = arith.xori %65, %66 : vector<16x128xi32>
    %c0_i32_17 = arith.constant 0 : i32
    %68 = vector.broadcast %c0_i32_17 : i32 to vector<16x128xi32>
    %69 = arith.addi %67, %68 : vector<16x128xi32>
    %c16_i32_18 = arith.constant 16 : i32
    %70 = vector.broadcast %c16_i32_18 : i32 to vector<16x128xi32>
    %71 = arith.shrui %69, %70 : vector<16x128xi32>
    %72 = arith.xori %69, %71 : vector<16x128xi32>
    %c-2048144789_i32_19 = arith.constant -2048144789 : i32
    %73 = vector.broadcast %c-2048144789_i32_19 : i32 to vector<16x128xi32>
    %74 = arith.muli %72, %73 : vector<16x128xi32>
    %c13_i32_20 = arith.constant 13 : i32
    %75 = vector.broadcast %c13_i32_20 : i32 to vector<16x128xi32>
    %76 = arith.shrui %74, %75 : vector<16x128xi32>
    %77 = arith.xori %74, %76 : vector<16x128xi32>
    %c-1028477387_i32_21 = arith.constant -1028477387 : i32
    %78 = vector.broadcast %c-1028477387_i32_21 : i32 to vector<16x128xi32>
    %79 = arith.muli %77, %78 : vector<16x128xi32>
    %c16_i32_22 = arith.constant 16 : i32
    %80 = vector.broadcast %c16_i32_22 : i32 to vector<16x128xi32>
    %81 = arith.shrui %79, %80 : vector<16x128xi32>
    %82 = arith.xori %79, %81 : vector<16x128xi32>
    %c8_i32 = arith.constant 8 : i32
    %83 = vector.broadcast %c8_i32 : i32 to vector<16x128xi32>
    %84 = arith.shrui %82, %83 : vector<16x128xi32>
    %85 = arith.cmpi sge, %84, %34 : vector<16x128xi32>
    %86 = arith.extui %85 : vector<16x128xi1> to vector<16x128xi32>
    %87 = arith.cmpi sge, %84, %41 : vector<16x128xi32>
    %88 = arith.extui %87 : vector<16x128xi1> to vector<16x128xi32>
    %89 = arith.addi %86, %88 : vector<16x128xi32>
    %90 = arith.cmpi sge, %84, %48 : vector<16x128xi32>
    %91 = arith.extui %90 : vector<16x128xi1> to vector<16x128xi32>
    %92 = arith.addi %89, %91 : vector<16x128xi32>
    %93 = arith.cmpi sge, %84, %55 : vector<16x128xi32>
    %94 = arith.extui %93 : vector<16x128xi1> to vector<16x128xi32>
    %95 = arith.addi %92, %94 : vector<16x128xi32>
    %96 = arith.cmpi sge, %84, %62 : vector<16x128xi32>
    %97 = arith.extui %96 : vector<16x128xi1> to vector<16x128xi32>
    %98 = arith.addi %95, %97 : vector<16x128xi32>
    %99 = arith.sitofp %98 : vector<16x128xi32> to vector<16x128xbf16>
    %c0_23 = arith.constant 0 : index
    %c0_24 = arith.constant 0 : index
    %100 = vector.load %arg7[%c0_23, %c0_24] : memref<64x1024xbf16, #tpu.memory_space<vmem>>, vector<16x128xbf16>
    tpu.vector_store %arg7[%c0_23, %c0_24], %99 {strides = array<i32>} : memref<64x1024xbf16, #tpu.memory_space<vmem>>, vector<16x128xbf16>,
    %c8192_i32 = arith.constant 8192 : i32
    %101 = vector.broadcast %c8192_i32 : i32 to vector<16x128xi32>
    %102 = arith.addi %67, %101 : vector<16x128xi32>
    %c16_i32_25 = arith.constant 16 : i32
    %103 = vector.broadcast %c16_i32_25 : i32 to vector<16x128xi32>
    %104 = arith.shrui %102, %103 : vector<16x128xi32>
    %105 = arith.xori %102, %104 : vector<16x128xi32>
    %c-2048144789_i32_26 = arith.constant -2048144789 : i32
    %106 = vector.broadcast %c-2048144789_i32_26 : i32 to vector<16x128xi32>
    %107 = arith.muli %105, %106 : vector<16x128xi32>
    %c13_i32_27 = arith.constant 13 : i32
    %108 = vector.broadcast %c13_i32_27 : i32 to vector<16x128xi32>
    %109 = arith.shrui %107, %108 : vector<16x128xi32>
    %110 = arith.xori %107, %109 : vector<16x128xi32>
    %c-1028477387_i32_28 = arith.constant -1028477387 : i32
    %111 = vector.broadcast %c-1028477387_i32_28 : i32 to vector<16x128xi32>
    %112 = arith.muli %110, %111 : vector<16x128xi32>
    %c16_i32_29 = arith.constant 16 : i32
    %113 = vector.broadcast %c16_i32_29 : i32 to vector<16x128xi32>
    %114 = arith.shrui %112, %113 : vector<16x128xi32>
    %115 = arith.xori %112, %114 : vector<16x128xi32>
    %c8_i32_30 = arith.constant 8 : i32
    %116 = vector.broadcast %c8_i32_30 : i32 to vector<16x128xi32>
    %117 = arith.shrui %115, %116 : vector<16x128xi32>
    %118 = arith.cmpi sge, %117, %34 : vector<16x128xi32>
    %119 = arith.extui %118 : vector<16x128xi1> to vector<16x128xi32>
    %120 = arith.cmpi sge, %117, %41 : vector<16x128xi32>
    %121 = arith.extui %120 : vector<16x128xi1> to vector<16x128xi32>
    %122 = arith.addi %119, %121 : vector<16x128xi32>
    %123 = arith.cmpi sge, %117, %48 : vector<16x128xi32>
    %124 = arith.extui %123 : vector<16x128xi1> to vector<16x128xi32>
    %125 = arith.addi %122, %124 : vector<16x128xi32>
    %126 = arith.cmpi sge, %117, %55 : vector<16x128xi32>
    %127 = arith.extui %126 : vector<16x128xi1> to vector<16x128xi32>
    %128 = arith.addi %125, %127 : vector<16x128xi32>
    %129 = arith.cmpi sge, %117, %62 : vector<16x128xi32>
    %130 = arith.extui %129 : vector<16x128xi1> to vector<16x128xi32>
    %131 = arith.addi %128, %130 : vector<16x128xi32>
    %132 = arith.sitofp %131 : vector<16x128xi32> to vector<16x128xbf16>
    %c0_31 = arith.constant 0 : index
    %c128 = arith.constant 128 : index
    %133 = vector.load %arg7[%c0_31, %c128] : memref<64x1024xbf16, #tpu.memory_space<vmem>>, vector<16x128xbf16>
    tpu.vector_store %arg7[%c0_31, %c128], %132 {strides = array<i32>} : memref<64x1024xbf16, #tpu.memory_space<vmem>>, vector<16x128xbf16>,
    %c16384_i32 = arith.constant 16384 : i32
    %134 = vector.broadcast %c16384_i32 : i32 to vector<16x128xi32>
    %135 = arith.addi %67, %134 : vector<16x128xi32>
    %c16_i32_32 = arith.constant 16 : i32
    %136 = vector.broadcast %c16_i32_32 : i32 to vector<16x128xi32>
    %137 = arith.shrui %135, %136 : vector<16x128xi32>
    %138 = arith.xori %135, %137 : vector<16x128xi32>
    %c-2048144789_i32_33 = arith.constant -2048144789 : i32
    %139 = vector.broadcast %c-2048144789_i32_33 : i32 to vector<16x128xi32>
    %140 = arith.muli %138, %139 : vector<16x128xi32>
    %c13_i32_34 = arith.constant 13 : i32
    %141 = vector.broadcast %c13_i32_34 : i32 to vector<16x128xi32>
    %142 = arith.shrui %140, %141 : vector<16x128xi32>
    %143 = arith.xori %140, %142 : vector<16x128xi32>
    %c-1028477387_i32_35 = arith.constant -1028477387 : i32
    %144 = vector.broadcast %c-1028477387_i32_35 : i32 to vector<16x128xi32>
    %145 = arith.muli %143, %144 : vector<16x128xi32>
    %c16_i32_36 = arith.constant 16 : i32
    %146 = vector.broadcast %c16_i32_36 : i32 to vector<16x128xi32>
    %147 = arith.shrui %145, %146 : vector<16x128xi32>
    %148 = arith.xori %145, %147 : vector<16x128xi32>
    %c8_i32_37 = arith.constant 8 : i32
    %149 = vector.broadcast %c8_i32_37 : i32 to vector<16x128xi32>
    %150 = arith.shrui %148, %149 : vector<16x128xi32>
    %151 = arith.cmpi sge, %150, %34 : vector<16x128xi32>
    %152 = arith.extui %151 : vector<16x128xi1> to vector<16x128xi32>
    %153 = arith.cmpi sge, %150, %41 : vector<16x128xi32>
    %154 = arith.extui %153 : vector<16x128xi1> to vector<16x128xi32>
    %155 = arith.addi %152, %154 : vector<16x128xi32>
    %156 = arith.cmpi sge, %150, %48 : vector<16x128xi32>
    %157 = arith.extui %156 : vector<16x128xi1> to vector<16x128xi32>
    %158 = arith.addi %155, %157 : vector<16x128xi32>
    %159 = arith.cmpi sge, %150, %55 : vector<16x128xi32>
    %160 = arith.extui %159 : vector<16x128xi1> to vector<16x128xi32>
    %161 = arith.addi %158, %160 : vector<16x128xi32>
    %162 = arith.cmpi sge, %150, %62 : vector<16x128xi32>
    %163 = arith.extui %162 : vector<16x128xi1> to vector<16x128xi32>
    %164 = arith.addi %161, %163 : vector<16x128xi32>
    %165 = arith.sitofp %164 : vector<16x128xi32> to vector<16x128xbf16>
    %c0_38 = arith.constant 0 : index
    %c256 = arith.constant 256 : index
    %166 = vector.load %arg7[%c0_38, %c256] : memref<64x1024xbf16, #tpu.memory_space<vmem>>, vector<16x128xbf16>
    tpu.vector_store %arg7[%c0_38, %c256], %165 {strides = array<i32>} : memref<64x1024xbf16, #tpu.memory_space<vmem>>, vector<16x128xbf16>,
    %c24576_i32 = arith.constant 24576 : i32
    %167 = vector.broadcast %c24576_i32 : i32 to vector<16x128xi32>
    %168 = arith.addi %67, %167 : vector<16x128xi32>
    %c16_i32_39 = arith.constant 16 : i32
    %169 = vector.broadcast %c16_i32_39 : i32 to vector<16x128xi32>
    %170 = arith.shrui %168, %169 : vector<16x128xi32>
    %171 = arith.xori %168, %170 : vector<16x128xi32>
    %c-2048144789_i32_40 = arith.constant -2048144789 : i32
    %172 = vector.broadcast %c-2048144789_i32_40 : i32 to vector<16x128xi32>
    %173 = arith.muli %171, %172 : vector<16x128xi32>
    %c13_i32_41 = arith.constant 13 : i32
    %174 = vector.broadcast %c13_i32_41 : i32 to vector<16x128xi32>
    %175 = arith.shrui %173, %174 : vector<16x128xi32>
    %176 = arith.xori %173, %175 : vector<16x128xi32>
    %c-1028477387_i32_42 = arith.constant -1028477387 : i32
    %177 = vector.broadcast %c-1028477387_i32_42 : i32 to vector<16x128xi32>
    %178 = arith.muli %176, %177 : vector<16x128xi32>
    %c16_i32_43 = arith.constant 16 : i32
    %179 = vector.broadcast %c16_i32_43 : i32 to vector<16x128xi32>
    %180 = arith.shrui %178, %179 : vector<16x128xi32>
    %181 = arith.xori %178, %180 : vector<16x128xi32>
    %c8_i32_44 = arith.constant 8 : i32
    %182 = vector.broadcast %c8_i32_44 : i32 to vector<16x128xi32>
    %183 = arith.shrui %181, %182 : vector<16x128xi32>
    %184 = arith.cmpi sge, %183, %34 : vector<16x128xi32>
    %185 = arith.extui %184 : vector<16x128xi1> to vector<16x128xi32>
    %186 = arith.cmpi sge, %183, %41 : vector<16x128xi32>
    %187 = arith.extui %186 : vector<16x128xi1> to vector<16x128xi32>
    %188 = arith.addi %185, %187 : vector<16x128xi32>
    %189 = arith.cmpi sge, %183, %48 : vector<16x128xi32>
    %190 = arith.extui %189 : vector<16x128xi1> to vector<16x128xi32>
    %191 = arith.addi %188, %190 : vector<16x128xi32>
    %192 = arith.cmpi sge, %183, %55 : vector<16x128xi32>
    %193 = arith.extui %192 : vector<16x128xi1> to vector<16x128xi32>
    %194 = arith.addi %191, %193 : vector<16x128xi32>
    %195 = arith.cmpi sge, %183, %62 : vector<16x128xi32>
    %196 = arith.extui %195 : vector<16x128xi1> to vector<16x128xi32>
    %197 = arith.addi %194, %196 : vector<16x128xi32>
    %198 = arith.sitofp %197 : vector<16x128xi32> to vector<16x128xbf16>
    %c0_45 = arith.constant 0 : index
    %c384 = arith.constant 384 : index
    %199 = vector.load %arg7[%c0_45, %c384] : memref<64x1024xbf16, #tpu.memory_space<vmem>>, vector<16x128xbf16>
    tpu.vector_store %arg7[%c0_45, %c384], %198 {strides = array<i32>} : memref<64x1024xbf16, #tpu.memory_space<vmem>>, vector<16x128xbf16>,
    %c32768_i32 = arith.constant 32768 : i32
    %200 = vector.broadcast %c32768_i32 : i32 to vector<16x128xi32>
    %201 = arith.addi %67, %200 : vector<16x128xi32>
    %c16_i32_46 = arith.constant 16 : i32
    %202 = vector.broadcast %c16_i32_46 : i32 to vector<16x128xi32>
    %203 = arith.shrui %201, %202 : vector<16x128xi32>
    %204 = arith.xori %201, %203 : vector<16x128xi32>
    %c-2048144789_i32_47 = arith.constant -2048144789 : i32
    %205 = vector.broadcast %c-2048144789_i32_47 : i32 to vector<16x128xi32>
    %206 = arith.muli %204, %205 : vector<16x128xi32>
    %c13_i32_48 = arith.constant 13 : i32
    %207 = vector.broadcast %c13_i32_48 : i32 to vector<16x128xi32>
    %208 = arith.shrui %206, %207 : vector<16x128xi32>
    %209 = arith.xori %206, %208 : vector<16x128xi32>
    %c-1028477387_i32_49 = arith.constant -1028477387 : i32
    %210 = vector.broadcast %c-1028477387_i32_49 : i32 to vector<16x128xi32>
    %211 = arith.muli %209, %210 : vector<16x128xi32>
    %c16_i32_50 = arith.constant 16 : i32
    %212 = vector.broadcast %c16_i32_50 : i32 to vector<16x128xi32>
    %213 = arith.shrui %211, %212 : vector<16x128xi32>
    %214 = arith.xori %211, %213 : vector<16x128xi32>
    %c8_i32_51 = arith.constant 8 : i32
    %215 = vector.broadcast %c8_i32_51 : i32 to vector<16x128xi32>
    %216 = arith.shrui %214, %215 : vector<16x128xi32>
    %217 = arith.cmpi sge, %216, %34 : vector<16x128xi32>
    %218 = arith.extui %217 : vector<16x128xi1> to vector<16x128xi32>
    %219 = arith.cmpi sge, %216, %41 : vector<16x128xi32>
    %220 = arith.extui %219 : vector<16x128xi1> to vector<16x128xi32>
    %221 = arith.addi %218, %220 : vector<16x128xi32>
    %222 = arith.cmpi sge, %216, %48 : vector<16x128xi32>
    %223 = arith.extui %222 : vector<16x128xi1> to vector<16x128xi32>
    %224 = arith.addi %221, %223 : vector<16x128xi32>
    %225 = arith.cmpi sge, %216, %55 : vector<16x128xi32>
    %226 = arith.extui %225 : vector<16x128xi1> to vector<16x128xi32>
    %227 = arith.addi %224, %226 : vector<16x128xi32>
    %228 = arith.cmpi sge, %216, %62 : vector<16x128xi32>
    %229 = arith.extui %228 : vector<16x128xi1> to vector<16x128xi32>
    %230 = arith.addi %227, %229 : vector<16x128xi32>
    %231 = arith.sitofp %230 : vector<16x128xi32> to vector<16x128xbf16>
    %c0_52 = arith.constant 0 : index
    %c512 = arith.constant 512 : index
    %232 = vector.load %arg7[%c0_52, %c512] : memref<64x1024xbf16, #tpu.memory_space<vmem>>, vector<16x128xbf16>
    tpu.vector_store %arg7[%c0_52, %c512], %231 {strides = array<i32>} : memref<64x1024xbf16, #tpu.memory_space<vmem>>, vector<16x128xbf16>,
    %c40960_i32 = arith.constant 40960 : i32
    %233 = vector.broadcast %c40960_i32 : i32 to vector<16x128xi32>
    %234 = arith.addi %67, %233 : vector<16x128xi32>
    %c16_i32_53 = arith.constant 16 : i32
    %235 = vector.broadcast %c16_i32_53 : i32 to vector<16x128xi32>
    %236 = arith.shrui %234, %235 : vector<16x128xi32>
    %237 = arith.xori %234, %236 : vector<16x128xi32>
    %c-2048144789_i32_54 = arith.constant -2048144789 : i32
    %238 = vector.broadcast %c-2048144789_i32_54 : i32 to vector<16x128xi32>
    %239 = arith.muli %237, %238 : vector<16x128xi32>
    %c13_i32_55 = arith.constant 13 : i32
    %240 = vector.broadcast %c13_i32_55 : i32 to vector<16x128xi32>
    %241 = arith.shrui %239, %240 : vector<16x128xi32>
    %242 = arith.xori %239, %241 : vector<16x128xi32>
    %c-1028477387_i32_56 = arith.constant -1028477387 : i32
    %243 = vector.broadcast %c-1028477387_i32_56 : i32 to vector<16x128xi32>
    %244 = arith.muli %242, %243 : vector<16x128xi32>
    %c16_i32_57 = arith.constant 16 : i32
    %245 = vector.broadcast %c16_i32_57 : i32 to vector<16x128xi32>
    %246 = arith.shrui %244, %245 : vector<16x128xi32>
    %247 = arith.xori %244, %246 : vector<16x128xi32>
    %c8_i32_58 = arith.constant 8 : i32
    %248 = vector.broadcast %c8_i32_58 : i32 to vector<16x128xi32>
    %249 = arith.shrui %247, %248 : vector<16x128xi32>
    %250 = arith.cmpi sge, %249, %34 : vector<16x128xi32>
    %251 = arith.extui %250 : vector<16x128xi1> to vector<16x128xi32>
    %252 = arith.cmpi sge, %249, %41 : vector<16x128xi32>
    %253 = arith.extui %252 : vector<16x128xi1> to vector<16x128xi32>
    %254 = arith.addi %251, %253 : vector<16x128xi32>
    %255 = arith.cmpi sge, %249, %48 : vector<16x128xi32>
    %256 = arith.extui %255 : vector<16x128xi1> to vector<16x128xi32>
    %257 = arith.addi %254, %256 : vector<16x128xi32>
    %258 = arith.cmpi sge, %249, %55 : vector<16x128xi32>
    %259 = arith.extui %258 : vector<16x128xi1> to vector<16x128xi32>
    %260 = arith.addi %257, %259 : vector<16x128xi32>
    %261 = arith.cmpi sge, %249, %62 : vector<16x128xi32>
    %262 = arith.extui %261 : vector<16x128xi1> to vector<16x128xi32>
    %263 = arith.addi %260, %262 : vector<16x128xi32>
    %264 = arith.sitofp %263 : vector<16x128xi32> to vector<16x128xbf16>
    %c0_59 = arith.constant 0 : index
    %c640 = arith.constant 640 : index
    %265 = vector.load %arg7[%c0_59, %c640] : memref<64x1024xbf16, #tpu.memory_space<vmem>>, vector<16x128xbf16>
    tpu.vector_store %arg7[%c0_59, %c640], %264 {strides = array<i32>} : memref<64x1024xbf16, #tpu.memory_space<vmem>>, vector<16x128xbf16>,
    %c49152_i32 = arith.constant 49152 : i32
    %266 = vector.broadcast %c49152_i32 : i32 to vector<16x128xi32>
    %267 = arith.addi %67, %266 : vector<16x128xi32>
    %c16_i32_60 = arith.constant 16 : i32
    %268 = vector.broadcast %c16_i32_60 : i32 to vector<16x128xi32>
    %269 = arith.shrui %267, %268 : vector<16x128xi32>
    %270 = arith.xori %267, %269 : vector<16x128xi32>
    %c-2048144789_i32_61 = arith.constant -2048144789 : i32
    %271 = vector.broadcast %c-2048144789_i32_61 : i32 to vector<16x128xi32>
    %272 = arith.muli %270, %271 : vector<16x128xi32>
    %c13_i32_62 = arith.constant 13 : i32
    %273 = vector.broadcast %c13_i32_62 : i32 to vector<16x128xi32>
    %274 = arith.shrui %272, %273 : vector<16x128xi32>
    %275 = arith.xori %272, %274 : vector<16x128xi32>
    %c-1028477387_i32_63 = arith.constant -1028477387 : i32
    %276 = vector.broadcast %c-1028477387_i32_63 : i32 to vector<16x128xi32>
    %277 = arith.muli %275, %276 : vector<16x128xi32>
    %c16_i32_64 = arith.constant 16 : i32
    %278 = vector.broadcast %c16_i32_64 : i32 to vector<16x128xi32>
    %279 = arith.shrui %277, %278 : vector<16x128xi32>
    %280 = arith.xori %277, %279 : vector<16x128xi32>
    %c8_i32_65 = arith.constant 8 : i32
    %281 = vector.broadcast %c8_i32_65 : i32 to vector<16x128xi32>
    %282 = arith.shrui %280, %281 : vector<16x128xi32>
    %283 = arith.cmpi sge, %282, %34 : vector<16x128xi32>
    %284 = arith.extui %283 : vector<16x128xi1> to vector<16x128xi32>
    %285 = arith.cmpi sge, %282, %41 : vector<16x128xi32>
    %286 = arith.extui %285 : vector<16x128xi1> to vector<16x128xi32>
    %287 = arith.addi %284, %286 : vector<16x128xi32>
    %288 = arith.cmpi sge, %282, %48 : vector<16x128xi32>
    %289 = arith.extui %288 : vector<16x128xi1> to vector<16x128xi32>
    %290 = arith.addi %287, %289 : vector<16x128xi32>
    %291 = arith.cmpi sge, %282, %55 : vector<16x128xi32>
    %292 = arith.extui %291 : vector<16x128xi1> to vector<16x128xi32>
    %293 = arith.addi %290, %292 : vector<16x128xi32>
    %294 = arith.cmpi sge, %282, %62 : vector<16x128xi32>
    %295 = arith.extui %294 : vector<16x128xi1> to vector<16x128xi32>
    %296 = arith.addi %293, %295 : vector<16x128xi32>
    %297 = arith.sitofp %296 : vector<16x128xi32> to vector<16x128xbf16>
    %c0_66 = arith.constant 0 : index
    %c768 = arith.constant 768 : index
    %298 = vector.load %arg7[%c0_66, %c768] : memref<64x1024xbf16, #tpu.memory_space<vmem>>, vector<16x128xbf16>
    tpu.vector_store %arg7[%c0_66, %c768], %297 {strides = array<i32>} : memref<64x1024xbf16, #tpu.memory_space<vmem>>, vector<16x128xbf16>,
    %c57344_i32 = arith.constant 57344 : i32
    %299 = vector.broadcast %c57344_i32 : i32 to vector<16x128xi32>
    %300 = arith.addi %67, %299 : vector<16x128xi32>
    %c16_i32_67 = arith.constant 16 : i32
    %301 = vector.broadcast %c16_i32_67 : i32 to vector<16x128xi32>
    %302 = arith.shrui %300, %301 : vector<16x128xi32>
    %303 = arith.xori %300, %302 : vector<16x128xi32>
    %c-2048144789_i32_68 = arith.constant -2048144789 : i32
    %304 = vector.broadcast %c-2048144789_i32_68 : i32 to vector<16x128xi32>
    %305 = arith.muli %303, %304 : vector<16x128xi32>
    %c13_i32_69 = arith.constant 13 : i32
    %306 = vector.broadcast %c13_i32_69 : i32 to vector<16x128xi32>
    %307 = arith.shrui %305, %306 : vector<16x128xi32>
    %308 = arith.xori %305, %307 : vector<16x128xi32>
    %c-1028477387_i32_70 = arith.constant -1028477387 : i32
    %309 = vector.broadcast %c-1028477387_i32_70 : i32 to vector<16x128xi32>
    %310 = arith.muli %308, %309 : vector<16x128xi32>
    %c16_i32_71 = arith.constant 16 : i32
    %311 = vector.broadcast %c16_i32_71 : i32 to vector<16x128xi32>
    %312 = arith.shrui %310, %311 : vector<16x128xi32>
    %313 = arith.xori %310, %312 : vector<16x128xi32>
    %c8_i32_72 = arith.constant 8 : i32
    %314 = vector.broadcast %c8_i32_72 : i32 to vector<16x128xi32>
    %315 = arith.shrui %313, %314 : vector<16x128xi32>
    %316 = arith.cmpi sge, %315, %34 : vector<16x128xi32>
    %317 = arith.extui %316 : vector<16x128xi1> to vector<16x128xi32>
    %318 = arith.cmpi sge, %315, %41 : vector<16x128xi32>
    %319 = arith.extui %318 : vector<16x128xi1> to vector<16x128xi32>
    %320 = arith.addi %317, %319 : vector<16x128xi32>
    %321 = arith.cmpi sge, %315, %48 : vector<16x128xi32>
    %322 = arith.extui %321 : vector<16x128xi1> to vector<16x128xi32>
    %323 = arith.addi %320, %322 : vector<16x128xi32>
    %324 = arith.cmpi sge, %315, %55 : vector<16x128xi32>
    %325 = arith.extui %324 : vector<16x128xi1> to vector<16x128xi32>
    %326 = arith.addi %323, %325 : vector<16x128xi32>
    %327 = arith.cmpi sge, %315, %62 : vector<16x128xi32>
    %328 = arith.extui %327 : vector<16x128xi1> to vector<16x128xi32>
    %329 = arith.addi %326, %328 : vector<16x128xi32>
    %330 = arith.sitofp %329 : vector<16x128xi32> to vector<16x128xbf16>
    %c0_73 = arith.constant 0 : index
    %c896 = arith.constant 896 : index
    %331 = vector.load %arg7[%c0_73, %c896] : memref<64x1024xbf16, #tpu.memory_space<vmem>>, vector<16x128xbf16>
    tpu.vector_store %arg7[%c0_73, %c896], %330 {strides = array<i32>} : memref<64x1024xbf16, #tpu.memory_space<vmem>>, vector<16x128xbf16>,
    %c16 = arith.constant 16 : index
    %c0_74 = arith.constant 0 : index
    %332 = vector.load %arg3[%c16, %c0_74] : memref<64x1xf32, #tpu.memory_space<vmem>>, vector<16x1xf32>
    %c0_75 = arith.constant 0 : index
    %c0_76 = arith.constant 0 : index
    %333 = vector.load %arg2[%c0_75, %c0_76] : memref<1x128xf32, #tpu.memory_space<vmem>>, vector<1x128xf32>
    %334 = vector.broadcast %333 : vector<1x128xf32> to vector<16x128xf32>
    %335 = vector.broadcast %332 : vector<16x1xf32> to vector<16x128xf32>
    %336 = arith.subf %334, %335 : vector<16x128xf32>
    %337 = arith.mulf %336, %336 : vector<16x128xf32>
    %cst_77 = arith.constant -2.000000e+02 : f32
    %338 = vector.broadcast %cst_77 : f32 to vector<16x128xf32>
    %339 = arith.mulf %337, %338 : vector<16x128xf32>
    %340 = math.exp %339 : vector<16x128xf32>
    %cst_78 = arith.constant 5.000000e-01 : f32
    %341 = vector.broadcast %cst_78 : f32 to vector<16x128xf32>
    %342 = arith.mulf %341, %340 : vector<16x128xf32>
    %cst_79 = arith.constant 0.000000e+00 : f32
    %343 = vector.broadcast %cst_79 : f32 to vector<16x128xf32>
    %344 = arith.subf %343, %342 : vector<16x128xf32>
    %345 = math.exp %344 : vector<16x128xf32>
    %cst_80 = arith.constant 0x4B800000 : f32
    %346 = vector.broadcast %cst_80 : f32 to vector<16x128xf32>
    %347 = arith.mulf %345, %346 : vector<16x128xf32>
    %348 = arith.fptosi %347 : vector<16x128xf32> to vector<16x128xi32>
    %349 = arith.mulf %345, %342 : vector<16x128xf32>
    %cst_81 = arith.constant 1.000000e+00 : f32
    %350 = vector.broadcast %cst_81 : f32 to vector<16x128xf32>
    %351 = arith.mulf %349, %350 : vector<16x128xf32>
    %352 = arith.addf %345, %351 : vector<16x128xf32>
    %cst_82 = arith.constant 0x4B800000 : f32
    %353 = vector.broadcast %cst_82 : f32 to vector<16x128xf32>
    %354 = arith.mulf %352, %353 : vector<16x128xf32>
    %355 = arith.fptosi %354 : vector<16x128xf32> to vector<16x128xi32>
    %356 = arith.mulf %351, %342 : vector<16x128xf32>
    %cst_83 = arith.constant 5.000000e-01 : f32
    %357 = vector.broadcast %cst_83 : f32 to vector<16x128xf32>
    %358 = arith.mulf %356, %357 : vector<16x128xf32>
    %359 = arith.addf %352, %358 : vector<16x128xf32>
    %cst_84 = arith.constant 0x4B800000 : f32
    %360 = vector.broadcast %cst_84 : f32 to vector<16x128xf32>
    %361 = arith.mulf %359, %360 : vector<16x128xf32>
    %362 = arith.fptosi %361 : vector<16x128xf32> to vector<16x128xi32>
    %363 = arith.mulf %358, %342 : vector<16x128xf32>
    %cst_85 = arith.constant 0.333333343 : f32
    %364 = vector.broadcast %cst_85 : f32 to vector<16x128xf32>
    %365 = arith.mulf %363, %364 : vector<16x128xf32>
    %366 = arith.addf %359, %365 : vector<16x128xf32>
    %cst_86 = arith.constant 0x4B800000 : f32
    %367 = vector.broadcast %cst_86 : f32 to vector<16x128xf32>
    %368 = arith.mulf %366, %367 : vector<16x128xf32>
    %369 = arith.fptosi %368 : vector<16x128xf32> to vector<16x128xi32>
    %370 = arith.mulf %365, %342 : vector<16x128xf32>
    %cst_87 = arith.constant 2.500000e-01 : f32
    %371 = vector.broadcast %cst_87 : f32 to vector<16x128xf32>
    %372 = arith.mulf %370, %371 : vector<16x128xf32>
    %373 = arith.addf %366, %372 : vector<16x128xf32>
    %cst_88 = arith.constant 0x4B800000 : f32
    %374 = vector.broadcast %cst_88 : f32 to vector<16x128xf32>
    %375 = arith.mulf %373, %374 : vector<16x128xf32>
    %376 = arith.fptosi %375 : vector<16x128xf32> to vector<16x128xi32>
    %377 = arith.addi %13, %17 : vector<16x128xi32>
    %c2048_i32 = arith.constant 2048 : i32
    %378 = vector.broadcast %c2048_i32 : i32 to vector<16x128xi32>
    %379 = arith.addi %377, %378 : vector<16x128xi32>
    %380 = vector.broadcast %10 : i32 to vector<16x128xi32>
    %381 = arith.xori %379, %380 : vector<16x128xi32>
    %c0_i32_89 = arith.constant 0 : i32
    %382 = vector.broadcast %c0_i32_89 : i32 to vector<16x128xi32>
    %383 = arith.addi %381, %382 : vector<16x128xi32>
    %c16_i32_90 = arith.constant 16 : i32
    %384 = vector.broadcast %c16_i32_90 : i32 to vector<16x128xi32>
    %385 = arith.shrui %383, %384 : vector<16x128xi32>
    %386 = arith.xori %383, %385 : vector<16x128xi32>
    %c-2048144789_i32_91 = arith.constant -2048144789 : i32
    %387 = vector.broadcast %c-2048144789_i32_91 : i32 to vector<16x128xi32>
    %388 = arith.muli %386, %387 : vector<16x128xi32>
    %c13_i32_92 = arith.constant 13 : i32
    %389 = vector.broadcast %c13_i32_92 : i32 to vector<16x128xi32>
    %390 = arith.shrui %388, %389 : vector<16x128xi32>
    %391 = arith.xori %388, %390 : vector<16x128xi32>
    %c-1028477387_i32_93 = arith.constant -1028477387 : i32
    %392 = vector.broadcast %c-1028477387_i32_93 : i32 to vector<16x128xi32>
    %393 = arith.muli %391, %392 : vector<16x128xi32>
    %c16_i32_94 = arith.constant 16 : i32
    %394 = vector.broadcast %c16_i32_94 : i32 to vector<16x128xi32>
    %395 = arith.shrui %393, %394 : vector<16x128xi32>
    %396 = arith.xori %393, %395 : vector<16x128xi32>
    %c8_i32_95 = arith.constant 8 : i32
    %397 = vector.broadcast %c8_i32_95 : i32 to vector<16x128xi32>
    %398 = arith.shrui %396, %397 : vector<16x128xi32>
    %399 = arith.cmpi sge, %398, %348 : vector<16x128xi32>
    %400 = arith.extui %399 : vector<16x128xi1> to vector<16x128xi32>
    %401 = arith.cmpi sge, %398, %355 : vector<16x128xi32>
    %402 = arith.extui %401 : vector<16x128xi1> to vector<16x128xi32>
    %403 = arith.addi %400, %402 : vector<16x128xi32>
    %404 = arith.cmpi sge, %398, %362 : vector<16x128xi32>
    %405 = arith.extui %404 : vector<16x128xi1> to vector<16x128xi32>
    %406 = arith.addi %403, %405 : vector<16x128xi32>
    %407 = arith.cmpi sge, %398, %369 : vector<16x128xi32>
    %408 = arith.extui %407 : vector<16x128xi1> to vector<16x128xi32>
    %409 = arith.addi %406, %408 : vector<16x128xi32>
    %410 = arith.cmpi sge, %398, %376 : vector<16x128xi32>
    %411 = arith.extui %410 : vector<16x128xi1> to vector<16x128xi32>
    %412 = arith.addi %409, %411 : vector<16x128xi32>
    %413 = arith.sitofp %412 : vector<16x128xi32> to vector<16x128xbf16>
    %c16_96 = arith.constant 16 : index
    %c0_97 = arith.constant 0 : index
    %414 = vector.load %arg7[%c16_96, %c0_97] : memref<64x1024xbf16, #tpu.memory_space<vmem>>, vector<16x128xbf16>
    tpu.vector_store %arg7[%c16_96, %c0_97], %413 {strides = array<i32>} : memref<64x1024xbf16, #tpu.memory_space<vmem>>, vector<16x128xbf16>,
    %c8192_i32_98 = arith.constant 8192 : i32
    %415 = vector.broadcast %c8192_i32_98 : i32 to vector<16x128xi32>
    %416 = arith.addi %381, %415 : vector<16x128xi32>
    %c16_i32_99 = arith.constant 16 : i32
    %417 = vector.broadcast %c16_i32_99 : i32 to vector<16x128xi32>
    %418 = arith.shrui %416, %417 : vector<16x128xi32>
    %419 = arith.xori %416, %418 : vector<16x128xi32>
    %c-2048144789_i32_100 = arith.constant -2048144789 : i32
    %420 = vector.broadcast %c-2048144789_i32_100 : i32 to vector<16x128xi32>
    %421 = arith.muli %419, %420 : vector<16x128xi32>
    %c13_i32_101 = arith.constant 13 : i32
    %422 = vector.broadcast %c13_i32_101 : i32 to vector<16x128xi32>
    %423 = arith.shrui %421, %422 : vector<16x128xi32>
    %424 = arith.xori %421, %423 : vector<16x128xi32>
    %c-1028477387_i32_102 = arith.constant -1028477387 : i32
    %425 = vector.broadcast %c-1028477387_i32_102 : i32 to vector<16x128xi32>
    %426 = arith.muli %424, %425 : vector<16x128xi32>
    %c16_i32_103 = arith.constant 16 : i32
    %427 = vector.broadcast %c16_i32_103 : i32 to vector<16x128xi32>
    %428 = arith.shrui %426, %427 : vector<16x128xi32>
    %429 = arith.xori %426, %428 : vector<16x128xi32>
    %c8_i32_104 = arith.constant 8 : i32
    %430 = vector.broadcast %c8_i32_104 : i32 to vector<16x128xi32>
    %431 = arith.shrui %429, %430 : vector<16x128xi32>
    %432 = arith.cmpi sge, %431, %348 : vector<16x128xi32>
    %433 = arith.extui %432 : vector<16x128xi1> to vector<16x128xi32>
    %434 = arith.cmpi sge, %431, %355 : vector<16x128xi32>
    %435 = arith.extui %434 : vector<16x128xi1> to vector<16x128xi32>
    %436 = arith.addi %433, %435 : vector<16x128xi32>
    %437 = arith.cmpi sge, %431, %362 : vector<16x128xi32>
    %438 = arith.extui %437 : vector<16x128xi1> to vector<16x128xi32>
    %439 = arith.addi %436, %438 : vector<16x128xi32>
    %440 = arith.cmpi sge, %431, %369 : vector<16x128xi32>
    %441 = arith.extui %440 : vector<16x128xi1> to vector<16x128xi32>
    %442 = arith.addi %439, %441 : vector<16x128xi32>
    %443 = arith.cmpi sge, %431, %376 : vector<16x128xi32>
    %444 = arith.extui %443 : vector<16x128xi1> to vector<16x128xi32>
    %445 = arith.addi %442, %444 : vector<16x128xi32>
    %446 = arith.sitofp %445 : vector<16x128xi32> to vector<16x128xbf16>
    %c16_105 = arith.constant 16 : index
    %c128_106 = arith.constant 128 : index
    %447 = vector.load %arg7[%c16_105, %c128_106] : memref<64x1024xbf16, #tpu.memory_space<vmem>>, vector<16x128xbf16>
    tpu.vector_store %arg7[%c16_105, %c128_106], %446 {strides = array<i32>} : memref<64x1024xbf16, #tpu.memory_space<vmem>>, vector<16x128xbf16>,
    %c16384_i32_107 = arith.constant 16384 : i32
    %448 = vector.broadcast %c16384_i32_107 : i32 to vector<16x128xi32>
    %449 = arith.addi %381, %448 : vector<16x128xi32>
    %c16_i32_108 = arith.constant 16 : i32
    %450 = vector.broadcast %c16_i32_108 : i32 to vector<16x128xi32>
    %451 = arith.shrui %449, %450 : vector<16x128xi32>
    %452 = arith.xori %449, %451 : vector<16x128xi32>
    %c-2048144789_i32_109 = arith.constant -2048144789 : i32
    %453 = vector.broadcast %c-2048144789_i32_109 : i32 to vector<16x128xi32>
    %454 = arith.muli %452, %453 : vector<16x128xi32>
    %c13_i32_110 = arith.constant 13 : i32
    %455 = vector.broadcast %c13_i32_110 : i32 to vector<16x128xi32>
    %456 = arith.shrui %454, %455 : vector<16x128xi32>
    %457 = arith.xori %454, %456 : vector<16x128xi32>
    %c-1028477387_i32_111 = arith.constant -1028477387 : i32
    %458 = vector.broadcast %c-1028477387_i32_111 : i32 to vector<16x128xi32>
    %459 = arith.muli %457, %458 : vector<16x128xi32>
    %c16_i32_112 = arith.constant 16 : i32
    %460 = vector.broadcast %c16_i32_112 : i32 to vector<16x128xi32>
    %461 = arith.shrui %459, %460 : vector<16x128xi32>
    %462 = arith.xori %459, %461 : vector<16x128xi32>
    %c8_i32_113 = arith.constant 8 : i32
    %463 = vector.broadcast %c8_i32_113 : i32 to vector<16x128xi32>
    %464 = arith.shrui %462, %463 : vector<16x128xi32>
    %465 = arith.cmpi sge, %464, %348 : vector<16x128xi32>
    %466 = arith.extui %465 : vector<16x128xi1> to vector<16x128xi32>
    %467 = arith.cmpi sge, %464, %355 : vector<16x128xi32>
    %468 = arith.extui %467 : vector<16x128xi1> to vector<16x128xi32>
    %469 = arith.addi %466, %468 : vector<16x128xi32>
    %470 = arith.cmpi sge, %464, %362 : vector<16x128xi32>
    %471 = arith.extui %470 : vector<16x128xi1> to vector<16x128xi32>
    %472 = arith.addi %469, %471 : vector<16x128xi32>
    %473 = arith.cmpi sge, %464, %369 : vector<16x128xi32>
    %474 = arith.extui %473 : vector<16x128xi1> to vector<16x128xi32>
    %475 = arith.addi %472, %474 : vector<16x128xi32>
    %476 = arith.cmpi sge, %464, %376 : vector<16x128xi32>
    %477 = arith.extui %476 : vector<16x128xi1> to vector<16x128xi32>
    %478 = arith.addi %475, %477 : vector<16x128xi32>
    %479 = arith.sitofp %478 : vector<16x128xi32> to vector<16x128xbf16>
    %c16_114 = arith.constant 16 : index
    %c256_115 = arith.constant 256 : index
    %480 = vector.load %arg7[%c16_114, %c256_115] : memref<64x1024xbf16, #tpu.memory_space<vmem>>, vector<16x128xbf16>
    tpu.vector_store %arg7[%c16_114, %c256_115], %479 {strides = array<i32>} : memref<64x1024xbf16, #tpu.memory_space<vmem>>, vector<16x128xbf16>,
    %c24576_i32_116 = arith.constant 24576 : i32
    %481 = vector.broadcast %c24576_i32_116 : i32 to vector<16x128xi32>
    %482 = arith.addi %381, %481 : vector<16x128xi32>
    %c16_i32_117 = arith.constant 16 : i32
    %483 = vector.broadcast %c16_i32_117 : i32 to vector<16x128xi32>
    %484 = arith.shrui %482, %483 : vector<16x128xi32>
    %485 = arith.xori %482, %484 : vector<16x128xi32>
    %c-2048144789_i32_118 = arith.constant -2048144789 : i32
    %486 = vector.broadcast %c-2048144789_i32_118 : i32 to vector<16x128xi32>
    %487 = arith.muli %485, %486 : vector<16x128xi32>
    %c13_i32_119 = arith.constant 13 : i32
    %488 = vector.broadcast %c13_i32_119 : i32 to vector<16x128xi32>
    %489 = arith.shrui %487, %488 : vector<16x128xi32>
    %490 = arith.xori %487, %489 : vector<16x128xi32>
    %c-1028477387_i32_120 = arith.constant -1028477387 : i32
    %491 = vector.broadcast %c-1028477387_i32_120 : i32 to vector<16x128xi32>
    %492 = arith.muli %490, %491 : vector<16x128xi32>
    %c16_i32_121 = arith.constant 16 : i32
    %493 = vector.broadcast %c16_i32_121 : i32 to vector<16x128xi32>
    %494 = arith.shrui %492, %493 : vector<16x128xi32>
    %495 = arith.xori %492, %494 : vector<16x128xi32>
    %c8_i32_122 = arith.constant 8 : i32
    %496 = vector.broadcast %c8_i32_122 : i32 to vector<16x128xi32>
    %497 = arith.shrui %495, %496 : vector<16x128xi32>
    %498 = arith.cmpi sge, %497, %348 : vector<16x128xi32>
    %499 = arith.extui %498 : vector<16x128xi1> to vector<16x128xi32>
    %500 = arith.cmpi sge, %497, %355 : vector<16x128xi32>
    %501 = arith.extui %500 : vector<16x128xi1> to vector<16x128xi32>
    %502 = arith.addi %499, %501 : vector<16x128xi32>
    %503 = arith.cmpi sge, %497, %362 : vector<16x128xi32>
    %504 = arith.extui %503 : vector<16x128xi1> to vector<16x128xi32>
    %505 = arith.addi %502, %504 : vector<16x128xi32>
    %506 = arith.cmpi sge, %497, %369 : vector<16x128xi32>
    %507 = arith.extui %506 : vector<16x128xi1> to vector<16x128xi32>
    %508 = arith.addi %505, %507 : vector<16x128xi32>
    %509 = arith.cmpi sge, %497, %376 : vector<16x128xi32>
    %510 = arith.extui %509 : vector<16x128xi1> to vector<16x128xi32>
    %511 = arith.addi %508, %510 : vector<16x128xi32>
    %512 = arith.sitofp %511 : vector<16x128xi32> to vector<16x128xbf16>
    %c16_123 = arith.constant 16 : index
    %c384_124 = arith.constant 384 : index
    %513 = vector.load %arg7[%c16_123, %c384_124] : memref<64x1024xbf16, #tpu.memory_space<vmem>>, vector<16x128xbf16>
    tpu.vector_store %arg7[%c16_123, %c384_124], %512 {strides = array<i32>} : memref<64x1024xbf16, #tpu.memory_space<vmem>>, vector<16x128xbf16>,
    %c32768_i32_125 = arith.constant 32768 : i32
    %514 = vector.broadcast %c32768_i32_125 : i32 to vector<16x128xi32>
    %515 = arith.addi %381, %514 : vector<16x128xi32>
    %c16_i32_126 = arith.constant 16 : i32
    %516 = vector.broadcast %c16_i32_126 : i32 to vector<16x128xi32>
    %517 = arith.shrui %515, %516 : vector<16x128xi32>
    %518 = arith.xori %515, %517 : vector<16x128xi32>
    %c-2048144789_i32_127 = arith.constant -2048144789 : i32
    %519 = vector.broadcast %c-2048144789_i32_127 : i32 to vector<16x128xi32>
    %520 = arith.muli %518, %519 : vector<16x128xi32>
    %c13_i32_128 = arith.constant 13 : i32
    %521 = vector.broadcast %c13_i32_128 : i32 to vector<16x128xi32>
    %522 = arith.shrui %520, %521 : vector<16x128xi32>
    %523 = arith.xori %520, %522 : vector<16x128xi32>
    %c-1028477387_i32_129 = arith.constant -1028477387 : i32
    %524 = vector.broadcast %c-1028477387_i32_129 : i32 to vector<16x128xi32>
    %525 = arith.muli %523, %524 : vector<16x128xi32>
    %c16_i32_130 = arith.constant 16 : i32
    %526 = vector.broadcast %c16_i32_130 : i32 to vector<16x128xi32>
    %527 = arith.shrui %525, %526 : vector<16x128xi32>
    %528 = arith.xori %525, %527 : vector<16x128xi32>
    %c8_i32_131 = arith.constant 8 : i32
    %529 = vector.broadcast %c8_i32_131 : i32 to vector<16x128xi32>
    %530 = arith.shrui %528, %529 : vector<16x128xi32>
    %531 = arith.cmpi sge, %530, %348 : vector<16x128xi32>
    %532 = arith.extui %531 : vector<16x128xi1> to vector<16x128xi32>
    %533 = arith.cmpi sge, %530, %355 : vector<16x128xi32>
    %534 = arith.extui %533 : vector<16x128xi1> to vector<16x128xi32>
    %535 = arith.addi %532, %534 : vector<16x128xi32>
    %536 = arith.cmpi sge, %530, %362 : vector<16x128xi32>
    %537 = arith.extui %536 : vector<16x128xi1> to vector<16x128xi32>
    %538 = arith.addi %535, %537 : vector<16x128xi32>
    %539 = arith.cmpi sge, %530, %369 : vector<16x128xi32>
    %540 = arith.extui %539 : vector<16x128xi1> to vector<16x128xi32>
    %541 = arith.addi %538, %540 : vector<16x128xi32>
    %542 = arith.cmpi sge, %530, %376 : vector<16x128xi32>
    %543 = arith.extui %542 : vector<16x128xi1> to vector<16x128xi32>
    %544 = arith.addi %541, %543 : vector<16x128xi32>
    %545 = arith.sitofp %544 : vector<16x128xi32> to vector<16x128xbf16>
    %c16_132 = arith.constant 16 : index
    %c512_133 = arith.constant 512 : index
    %546 = vector.load %arg7[%c16_132, %c512_133] : memref<64x1024xbf16, #tpu.memory_space<vmem>>, vector<16x128xbf16>
    tpu.vector_store %arg7[%c16_132, %c512_133], %545 {strides = array<i32>} : memref<64x1024xbf16, #tpu.memory_space<vmem>>, vector<16x128xbf16>,
    %c40960_i32_134 = arith.constant 40960 : i32
    %547 = vector.broadcast %c40960_i32_134 : i32 to vector<16x128xi32>
    %548 = arith.addi %381, %547 : vector<16x128xi32>
    %c16_i32_135 = arith.constant 16 : i32
    %549 = vector.broadcast %c16_i32_135 : i32 to vector<16x128xi32>
    %550 = arith.shrui %548, %549 : vector<16x128xi32>
    %551 = arith.xori %548, %550 : vector<16x128xi32>
    %c-2048144789_i32_136 = arith.constant -2048144789 : i32
    %552 = vector.broadcast %c-2048144789_i32_136 : i32 to vector<16x128xi32>
    %553 = arith.muli %551, %552 : vector<16x128xi32>
    %c13_i32_137 = arith.constant 13 : i32
    %554 = vector.broadcast %c13_i32_137 : i32 to vector<16x128xi32>
    %555 = arith.shrui %553, %554 : vector<16x128xi32>
    %556 = arith.xori %553, %555 : vector<16x128xi32>
    %c-1028477387_i32_138 = arith.constant -1028477387 : i32
    %557 = vector.broadcast %c-1028477387_i32_138 : i32 to vector<16x128xi32>
    %558 = arith.muli %556, %557 : vector<16x128xi32>
    %c16_i32_139 = arith.constant 16 : i32
    %559 = vector.broadcast %c16_i32_139 : i32 to vector<16x128xi32>
    %560 = arith.shrui %558, %559 : vector<16x128xi32>
    %561 = arith.xori %558, %560 : vector<16x128xi32>
    %c8_i32_140 = arith.constant 8 : i32
    %562 = vector.broadcast %c8_i32_140 : i32 to vector<16x128xi32>
    %563 = arith.shrui %561, %562 : vector<16x128xi32>
    %564 = arith.cmpi sge, %563, %348 : vector<16x128xi32>
    %565 = arith.extui %564 : vector<16x128xi1> to vector<16x128xi32>
    %566 = arith.cmpi sge, %563, %355 : vector<16x128xi32>
    %567 = arith.extui %566 : vector<16x128xi1> to vector<16x128xi32>
    %568 = arith.addi %565, %567 : vector<16x128xi32>
    %569 = arith.cmpi sge, %563, %362 : vector<16x128xi32>
    %570 = arith.extui %569 : vector<16x128xi1> to vector<16x128xi32>
    %571 = arith.addi %568, %570 : vector<16x128xi32>
    %572 = arith.cmpi sge, %563, %369 : vector<16x128xi32>
    %573 = arith.extui %572 : vector<16x128xi1> to vector<16x128xi32>
    %574 = arith.addi %571, %573 : vector<16x128xi32>
    %575 = arith.cmpi sge, %563, %376 : vector<16x128xi32>
    %576 = arith.extui %575 : vector<16x128xi1> to vector<16x128xi32>
    %577 = arith.addi %574, %576 : vector<16x128xi32>
    %578 = arith.sitofp %577 : vector<16x128xi32> to vector<16x128xbf16>
    %c16_141 = arith.constant 16 : index
    %c640_142 = arith.constant 640 : index
    %579 = vector.load %arg7[%c16_141, %c640_142] : memref<64x1024xbf16, #tpu.memory_space<vmem>>, vector<16x128xbf16>
    tpu.vector_store %arg7[%c16_141, %c640_142], %578 {strides = array<i32>} : memref<64x1024xbf16, #tpu.memory_space<vmem>>, vector<16x128xbf16>,
    %c49152_i32_143 = arith.constant 49152 : i32
    %580 = vector.broadcast %c49152_i32_143 : i32 to vector<16x128xi32>
    %581 = arith.addi %381, %580 : vector<16x128xi32>
    %c16_i32_144 = arith.constant 16 : i32
    %582 = vector.broadcast %c16_i32_144 : i32 to vector<16x128xi32>
    %583 = arith.shrui %581, %582 : vector<16x128xi32>
    %584 = arith.xori %581, %583 : vector<16x128xi32>
    %c-2048144789_i32_145 = arith.constant -2048144789 : i32
    %585 = vector.broadcast %c-2048144789_i32_145 : i32 to vector<16x128xi32>
    %586 = arith.muli %584, %585 : vector<16x128xi32>
    %c13_i32_146 = arith.constant 13 : i32
    %587 = vector.broadcast %c13_i32_146 : i32 to vector<16x128xi32>
    %588 = arith.shrui %586, %587 : vector<16x128xi32>
    %589 = arith.xori %586, %588 : vector<16x128xi32>
    %c-1028477387_i32_147 = arith.constant -1028477387 : i32
    %590 = vector.broadcast %c-1028477387_i32_147 : i32 to vector<16x128xi32>
    %591 = arith.muli %589, %590 : vector<16x128xi32>
    %c16_i32_148 = arith.constant 16 : i32
    %592 = vector.broadcast %c16_i32_148 : i32 to vector<16x128xi32>
    %593 = arith.shrui %591, %592 : vector<16x128xi32>
    %594 = arith.xori %591, %593 : vector<16x128xi32>
    %c8_i32_149 = arith.constant 8 : i32
    %595 = vector.broadcast %c8_i32_149 : i32 to vector<16x128xi32>
    %596 = arith.shrui %594, %595 : vector<16x128xi32>
    %597 = arith.cmpi sge, %596, %348 : vector<16x128xi32>
    %598 = arith.extui %597 : vector<16x128xi1> to vector<16x128xi32>
    %599 = arith.cmpi sge, %596, %355 : vector<16x128xi32>
    %600 = arith.extui %599 : vector<16x128xi1> to vector<16x128xi32>
    %601 = arith.addi %598, %600 : vector<16x128xi32>
    %602 = arith.cmpi sge, %596, %362 : vector<16x128xi32>
    %603 = arith.extui %602 : vector<16x128xi1> to vector<16x128xi32>
    %604 = arith.addi %601, %603 : vector<16x128xi32>
    %605 = arith.cmpi sge, %596, %369 : vector<16x128xi32>
    %606 = arith.extui %605 : vector<16x128xi1> to vector<16x128xi32>
    %607 = arith.addi %604, %606 : vector<16x128xi32>
    %608 = arith.cmpi sge, %596, %376 : vector<16x128xi32>
    %609 = arith.extui %608 : vector<16x128xi1> to vector<16x128xi32>
    %610 = arith.addi %607, %609 : vector<16x128xi32>
    %611 = arith.sitofp %610 : vector<16x128xi32> to vector<16x128xbf16>
    %c16_150 = arith.constant 16 : index
    %c768_151 = arith.constant 768 : index
    %612 = vector.load %arg7[%c16_150, %c768_151] : memref<64x1024xbf16, #tpu.memory_space<vmem>>, vector<16x128xbf16>
    tpu.vector_store %arg7[%c16_150, %c768_151], %611 {strides = array<i32>} : memref<64x1024xbf16, #tpu.memory_space<vmem>>, vector<16x128xbf16>,
    %c57344_i32_152 = arith.constant 57344 : i32
    %613 = vector.broadcast %c57344_i32_152 : i32 to vector<16x128xi32>
    %614 = arith.addi %381, %613 : vector<16x128xi32>
    %c16_i32_153 = arith.constant 16 : i32
    %615 = vector.broadcast %c16_i32_153 : i32 to vector<16x128xi32>
    %616 = arith.shrui %614, %615 : vector<16x128xi32>
    %617 = arith.xori %614, %616 : vector<16x128xi32>
    %c-2048144789_i32_154 = arith.constant -2048144789 : i32
    %618 = vector.broadcast %c-2048144789_i32_154 : i32 to vector<16x128xi32>
    %619 = arith.muli %617, %618 : vector<16x128xi32>
    %c13_i32_155 = arith.constant 13 : i32
    %620 = vector.broadcast %c13_i32_155 : i32 to vector<16x128xi32>
    %621 = arith.shrui %619, %620 : vector<16x128xi32>
    %622 = arith.xori %619, %621 : vector<16x128xi32>
    %c-1028477387_i32_156 = arith.constant -1028477387 : i32
    %623 = vector.broadcast %c-1028477387_i32_156 : i32 to vector<16x128xi32>
    %624 = arith.muli %622, %623 : vector<16x128xi32>
    %c16_i32_157 = arith.constant 16 : i32
    %625 = vector.broadcast %c16_i32_157 : i32 to vector<16x128xi32>
    %626 = arith.shrui %624, %625 : vector<16x128xi32>
    %627 = arith.xori %624, %626 : vector<16x128xi32>
    %c8_i32_158 = arith.constant 8 : i32
    %628 = vector.broadcast %c8_i32_158 : i32 to vector<16x128xi32>
    %629 = arith.shrui %627, %628 : vector<16x128xi32>
    %630 = arith.cmpi sge, %629, %348 : vector<16x128xi32>
    %631 = arith.extui %630 : vector<16x128xi1> to vector<16x128xi32>
    %632 = arith.cmpi sge, %629, %355 : vector<16x128xi32>
    %633 = arith.extui %632 : vector<16x128xi1> to vector<16x128xi32>
    %634 = arith.addi %631, %633 : vector<16x128xi32>
    %635 = arith.cmpi sge, %629, %362 : vector<16x128xi32>
    %636 = arith.extui %635 : vector<16x128xi1> to vector<16x128xi32>
    %637 = arith.addi %634, %636 : vector<16x128xi32>
    %638 = arith.cmpi sge, %629, %369 : vector<16x128xi32>
    %639 = arith.extui %638 : vector<16x128xi1> to vector<16x128xi32>
    %640 = arith.addi %637, %639 : vector<16x128xi32>
    %641 = arith.cmpi sge, %629, %376 : vector<16x128xi32>
    %642 = arith.extui %641 : vector<16x128xi1> to vector<16x128xi32>
    %643 = arith.addi %640, %642 : vector<16x128xi32>
    %644 = arith.sitofp %643 : vector<16x128xi32> to vector<16x128xbf16>
    %c16_159 = arith.constant 16 : index
    %c896_160 = arith.constant 896 : index
    %645 = vector.load %arg7[%c16_159, %c896_160] : memref<64x1024xbf16, #tpu.memory_space<vmem>>, vector<16x128xbf16>
    tpu.vector_store %arg7[%c16_159, %c896_160], %644 {strides = array<i32>} : memref<64x1024xbf16, #tpu.memory_space<vmem>>, vector<16x128xbf16>,
    %c32 = arith.constant 32 : index
    %c0_161 = arith.constant 0 : index
    %646 = vector.load %arg3[%c32, %c0_161] : memref<64x1xf32, #tpu.memory_space<vmem>>, vector<16x1xf32>
    %c0_162 = arith.constant 0 : index
    %c0_163 = arith.constant 0 : index
    %647 = vector.load %arg2[%c0_162, %c0_163] : memref<1x128xf32, #tpu.memory_space<vmem>>, vector<1x128xf32>
    %648 = vector.broadcast %647 : vector<1x128xf32> to vector<16x128xf32>
    %649 = vector.broadcast %646 : vector<16x1xf32> to vector<16x128xf32>
    %650 = arith.subf %648, %649 : vector<16x128xf32>
    %651 = arith.mulf %650, %650 : vector<16x128xf32>
    %cst_164 = arith.constant -2.000000e+02 : f32
    %652 = vector.broadcast %cst_164 : f32 to vector<16x128xf32>
    %653 = arith.mulf %651, %652 : vector<16x128xf32>
    %654 = math.exp %653 : vector<16x128xf32>
    %cst_165 = arith.constant 5.000000e-01 : f32
    %655 = vector.broadcast %cst_165 : f32 to vector<16x128xf32>
    %656 = arith.mulf %655, %654 : vector<16x128xf32>
    %cst_166 = arith.constant 0.000000e+00 : f32
    %657 = vector.broadcast %cst_166 : f32 to vector<16x128xf32>
    %658 = arith.subf %657, %656 : vector<16x128xf32>
    %659 = math.exp %658 : vector<16x128xf32>
    %cst_167 = arith.constant 0x4B800000 : f32
    %660 = vector.broadcast %cst_167 : f32 to vector<16x128xf32>
    %661 = arith.mulf %659, %660 : vector<16x128xf32>
    %662 = arith.fptosi %661 : vector<16x128xf32> to vector<16x128xi32>
    %663 = arith.mulf %659, %656 : vector<16x128xf32>
    %cst_168 = arith.constant 1.000000e+00 : f32
    %664 = vector.broadcast %cst_168 : f32 to vector<16x128xf32>
    %665 = arith.mulf %663, %664 : vector<16x128xf32>
    %666 = arith.addf %659, %665 : vector<16x128xf32>
    %cst_169 = arith.constant 0x4B800000 : f32
    %667 = vector.broadcast %cst_169 : f32 to vector<16x128xf32>
    %668 = arith.mulf %666, %667 : vector<16x128xf32>
    %669 = arith.fptosi %668 : vector<16x128xf32> to vector<16x128xi32>
    %670 = arith.mulf %665, %656 : vector<16x128xf32>
    %cst_170 = arith.constant 5.000000e-01 : f32
    %671 = vector.broadcast %cst_170 : f32 to vector<16x128xf32>
    %672 = arith.mulf %670, %671 : vector<16x128xf32>
    %673 = arith.addf %666, %672 : vector<16x128xf32>
    %cst_171 = arith.constant 0x4B800000 : f32
    %674 = vector.broadcast %cst_171 : f32 to vector<16x128xf32>
    %675 = arith.mulf %673, %674 : vector<16x128xf32>
    %676 = arith.fptosi %675 : vector<16x128xf32> to vector<16x128xi32>
    %677 = arith.mulf %672, %656 : vector<16x128xf32>
    %cst_172 = arith.constant 0.333333343 : f32
    %678 = vector.broadcast %cst_172 : f32 to vector<16x128xf32>
    %679 = arith.mulf %677, %678 : vector<16x128xf32>
    %680 = arith.addf %673, %679 : vector<16x128xf32>
    %cst_173 = arith.constant 0x4B800000 : f32
    %681 = vector.broadcast %cst_173 : f32 to vector<16x128xf32>
    %682 = arith.mulf %680, %681 : vector<16x128xf32>
    %683 = arith.fptosi %682 : vector<16x128xf32> to vector<16x128xi32>
    %684 = arith.mulf %679, %656 : vector<16x128xf32>
    %cst_174 = arith.constant 2.500000e-01 : f32
    %685 = vector.broadcast %cst_174 : f32 to vector<16x128xf32>
    %686 = arith.mulf %684, %685 : vector<16x128xf32>
    %687 = arith.addf %680, %686 : vector<16x128xf32>
    %cst_175 = arith.constant 0x4B800000 : f32
    %688 = vector.broadcast %cst_175 : f32 to vector<16x128xf32>
    %689 = arith.mulf %687, %688 : vector<16x128xf32>
    %690 = arith.fptosi %689 : vector<16x128xf32> to vector<16x128xi32>
    %691 = arith.addi %13, %17 : vector<16x128xi32>
    %c4096_i32 = arith.constant 4096 : i32
    %692 = vector.broadcast %c4096_i32 : i32 to vector<16x128xi32>
    %693 = arith.addi %691, %692 : vector<16x128xi32>
    %694 = vector.broadcast %10 : i32 to vector<16x128xi32>
    %695 = arith.xori %693, %694 : vector<16x128xi32>
    %c0_i32_176 = arith.constant 0 : i32
    %696 = vector.broadcast %c0_i32_176 : i32 to vector<16x128xi32>
    %697 = arith.addi %695, %696 : vector<16x128xi32>
    %c16_i32_177 = arith.constant 16 : i32
    %698 = vector.broadcast %c16_i32_177 : i32 to vector<16x128xi32>
    %699 = arith.shrui %697, %698 : vector<16x128xi32>
    %700 = arith.xori %697, %699 : vector<16x128xi32>
    %c-2048144789_i32_178 = arith.constant -2048144789 : i32
    %701 = vector.broadcast %c-2048144789_i32_178 : i32 to vector<16x128xi32>
    %702 = arith.muli %700, %701 : vector<16x128xi32>
    %c13_i32_179 = arith.constant 13 : i32
    %703 = vector.broadcast %c13_i32_179 : i32 to vector<16x128xi32>
    %704 = arith.shrui %702, %703 : vector<16x128xi32>
    %705 = arith.xori %702, %704 : vector<16x128xi32>
    %c-1028477387_i32_180 = arith.constant -1028477387 : i32
    %706 = vector.broadcast %c-1028477387_i32_180 : i32 to vector<16x128xi32>
    %707 = arith.muli %705, %706 : vector<16x128xi32>
    %c16_i32_181 = arith.constant 16 : i32
    %708 = vector.broadcast %c16_i32_181 : i32 to vector<16x128xi32>
    %709 = arith.shrui %707, %708 : vector<16x128xi32>
    %710 = arith.xori %707, %709 : vector<16x128xi32>
    %c8_i32_182 = arith.constant 8 : i32
    %711 = vector.broadcast %c8_i32_182 : i32 to vector<16x128xi32>
    %712 = arith.shrui %710, %711 : vector<16x128xi32>
    %713 = arith.cmpi sge, %712, %662 : vector<16x128xi32>
    %714 = arith.extui %713 : vector<16x128xi1> to vector<16x128xi32>
    %715 = arith.cmpi sge, %712, %669 : vector<16x128xi32>
    %716 = arith.extui %715 : vector<16x128xi1> to vector<16x128xi32>
    %717 = arith.addi %714, %716 : vector<16x128xi32>
    %718 = arith.cmpi sge, %712, %676 : vector<16x128xi32>
    %719 = arith.extui %718 : vector<16x128xi1> to vector<16x128xi32>
    %720 = arith.addi %717, %719 : vector<16x128xi32>
    %721 = arith.cmpi sge, %712, %683 : vector<16x128xi32>
    %722 = arith.extui %721 : vector<16x128xi1> to vector<16x128xi32>
    %723 = arith.addi %720, %722 : vector<16x128xi32>
    %724 = arith.cmpi sge, %712, %690 : vector<16x128xi32>
    %725 = arith.extui %724 : vector<16x128xi1> to vector<16x128xi32>
    %726 = arith.addi %723, %725 : vector<16x128xi32>
    %727 = arith.sitofp %726 : vector<16x128xi32> to vector<16x128xbf16>
    %c32_183 = arith.constant 32 : index
    %c0_184 = arith.constant 0 : index
    %728 = vector.load %arg7[%c32_183, %c0_184] : memref<64x1024xbf16, #tpu.memory_space<vmem>>, vector<16x128xbf16>
    tpu.vector_store %arg7[%c32_183, %c0_184], %727 {strides = array<i32>} : memref<64x1024xbf16, #tpu.memory_space<vmem>>, vector<16x128xbf16>,
    %c8192_i32_185 = arith.constant 8192 : i32
    %729 = vector.broadcast %c8192_i32_185 : i32 to vector<16x128xi32>
    %730 = arith.addi %695, %729 : vector<16x128xi32>
    %c16_i32_186 = arith.constant 16 : i32
    %731 = vector.broadcast %c16_i32_186 : i32 to vector<16x128xi32>
    %732 = arith.shrui %730, %731 : vector<16x128xi32>
    %733 = arith.xori %730, %732 : vector<16x128xi32>
    %c-2048144789_i32_187 = arith.constant -2048144789 : i32
    %734 = vector.broadcast %c-2048144789_i32_187 : i32 to vector<16x128xi32>
    %735 = arith.muli %733, %734 : vector<16x128xi32>
    %c13_i32_188 = arith.constant 13 : i32
    %736 = vector.broadcast %c13_i32_188 : i32 to vector<16x128xi32>
    %737 = arith.shrui %735, %736 : vector<16x128xi32>
    %738 = arith.xori %735, %737 : vector<16x128xi32>
    %c-1028477387_i32_189 = arith.constant -1028477387 : i32
    %739 = vector.broadcast %c-1028477387_i32_189 : i32 to vector<16x128xi32>
    %740 = arith.muli %738, %739 : vector<16x128xi32>
    %c16_i32_190 = arith.constant 16 : i32
    %741 = vector.broadcast %c16_i32_190 : i32 to vector<16x128xi32>
    %742 = arith.shrui %740, %741 : vector<16x128xi32>
    %743 = arith.xori %740, %742 : vector<16x128xi32>
    %c8_i32_191 = arith.constant 8 : i32
    %744 = vector.broadcast %c8_i32_191 : i32 to vector<16x128xi32>
    %745 = arith.shrui %743, %744 : vector<16x128xi32>
    %746 = arith.cmpi sge, %745, %662 : vector<16x128xi32>
    %747 = arith.extui %746 : vector<16x128xi1> to vector<16x128xi32>
    %748 = arith.cmpi sge, %745, %669 : vector<16x128xi32>
    %749 = arith.extui %748 : vector<16x128xi1> to vector<16x128xi32>
    %750 = arith.addi %747, %749 : vector<16x128xi32>
    %751 = arith.cmpi sge, %745, %676 : vector<16x128xi32>
    %752 = arith.extui %751 : vector<16x128xi1> to vector<16x128xi32>
    %753 = arith.addi %750, %752 : vector<16x128xi32>
    %754 = arith.cmpi sge, %745, %683 : vector<16x128xi32>
    %755 = arith.extui %754 : vector<16x128xi1> to vector<16x128xi32>
    %756 = arith.addi %753, %755 : vector<16x128xi32>
    %757 = arith.cmpi sge, %745, %690 : vector<16x128xi32>
    %758 = arith.extui %757 : vector<16x128xi1> to vector<16x128xi32>
    %759 = arith.addi %756, %758 : vector<16x128xi32>
    %760 = arith.sitofp %759 : vector<16x128xi32> to vector<16x128xbf16>
    %c32_192 = arith.constant 32 : index
    %c128_193 = arith.constant 128 : index
    %761 = vector.load %arg7[%c32_192, %c128_193] : memref<64x1024xbf16, #tpu.memory_space<vmem>>, vector<16x128xbf16>
    tpu.vector_store %arg7[%c32_192, %c128_193], %760 {strides = array<i32>} : memref<64x1024xbf16, #tpu.memory_space<vmem>>, vector<16x128xbf16>,
    %c16384_i32_194 = arith.constant 16384 : i32
    %762 = vector.broadcast %c16384_i32_194 : i32 to vector<16x128xi32>
    %763 = arith.addi %695, %762 : vector<16x128xi32>
    %c16_i32_195 = arith.constant 16 : i32
    %764 = vector.broadcast %c16_i32_195 : i32 to vector<16x128xi32>
    %765 = arith.shrui %763, %764 : vector<16x128xi32>
    %766 = arith.xori %763, %765 : vector<16x128xi32>
    %c-2048144789_i32_196 = arith.constant -2048144789 : i32
    %767 = vector.broadcast %c-2048144789_i32_196 : i32 to vector<16x128xi32>
    %768 = arith.muli %766, %767 : vector<16x128xi32>
    %c13_i32_197 = arith.constant 13 : i32
    %769 = vector.broadcast %c13_i32_197 : i32 to vector<16x128xi32>
    %770 = arith.shrui %768, %769 : vector<16x128xi32>
    %771 = arith.xori %768, %770 : vector<16x128xi32>
    %c-1028477387_i32_198 = arith.constant -1028477387 : i32
    %772 = vector.broadcast %c-1028477387_i32_198 : i32 to vector<16x128xi32>
    %773 = arith.muli %771, %772 : vector<16x128xi32>
    %c16_i32_199 = arith.constant 16 : i32
    %774 = vector.broadcast %c16_i32_199 : i32 to vector<16x128xi32>
    %775 = arith.shrui %773, %774 : vector<16x128xi32>
    %776 = arith.xori %773, %775 : vector<16x128xi32>
    %c8_i32_200 = arith.constant 8 : i32
    %777 = vector.broadcast %c8_i32_200 : i32 to vector<16x128xi32>
    %778 = arith.shrui %776, %777 : vector<16x128xi32>
    %779 = arith.cmpi sge, %778, %662 : vector<16x128xi32>
    %780 = arith.extui %779 : vector<16x128xi1> to vector<16x128xi32>
    %781 = arith.cmpi sge, %778, %669 : vector<16x128xi32>
    %782 = arith.extui %781 : vector<16x128xi1> to vector<16x128xi32>
    %783 = arith.addi %780, %782 : vector<16x128xi32>
    %784 = arith.cmpi sge, %778, %676 : vector<16x128xi32>
    %785 = arith.extui %784 : vector<16x128xi1> to vector<16x128xi32>
    %786 = arith.addi %783, %785 : vector<16x128xi32>
    %787 = arith.cmpi sge, %778, %683 : vector<16x128xi32>
    %788 = arith.extui %787 : vector<16x128xi1> to vector<16x128xi32>
    %789 = arith.addi %786, %788 : vector<16x128xi32>
    %790 = arith.cmpi sge, %778, %690 : vector<16x128xi32>
    %791 = arith.extui %790 : vector<16x128xi1> to vector<16x128xi32>
    %792 = arith.addi %789, %791 : vector<16x128xi32>
    %793 = arith.sitofp %792 : vector<16x128xi32> to vector<16x128xbf16>
    %c32_201 = arith.constant 32 : index
    %c256_202 = arith.constant 256 : index
    %794 = vector.load %arg7[%c32_201, %c256_202] : memref<64x1024xbf16, #tpu.memory_space<vmem>>, vector<16x128xbf16>
    tpu.vector_store %arg7[%c32_201, %c256_202], %793 {strides = array<i32>} : memref<64x1024xbf16, #tpu.memory_space<vmem>>, vector<16x128xbf16>,
    %c24576_i32_203 = arith.constant 24576 : i32
    %795 = vector.broadcast %c24576_i32_203 : i32 to vector<16x128xi32>
    %796 = arith.addi %695, %795 : vector<16x128xi32>
    %c16_i32_204 = arith.constant 16 : i32
    %797 = vector.broadcast %c16_i32_204 : i32 to vector<16x128xi32>
    %798 = arith.shrui %796, %797 : vector<16x128xi32>
    %799 = arith.xori %796, %798 : vector<16x128xi32>
    %c-2048144789_i32_205 = arith.constant -2048144789 : i32
    %800 = vector.broadcast %c-2048144789_i32_205 : i32 to vector<16x128xi32>
    %801 = arith.muli %799, %800 : vector<16x128xi32>
    %c13_i32_206 = arith.constant 13 : i32
    %802 = vector.broadcast %c13_i32_206 : i32 to vector<16x128xi32>
    %803 = arith.shrui %801, %802 : vector<16x128xi32>
    %804 = arith.xori %801, %803 : vector<16x128xi32>
    %c-1028477387_i32_207 = arith.constant -1028477387 : i32
    %805 = vector.broadcast %c-1028477387_i32_207 : i32 to vector<16x128xi32>
    %806 = arith.muli %804, %805 : vector<16x128xi32>
    %c16_i32_208 = arith.constant 16 : i32
    %807 = vector.broadcast %c16_i32_208 : i32 to vector<16x128xi32>
    %808 = arith.shrui %806, %807 : vector<16x128xi32>
    %809 = arith.xori %806, %808 : vector<16x128xi32>
    %c8_i32_209 = arith.constant 8 : i32
    %810 = vector.broadcast %c8_i32_209 : i32 to vector<16x128xi32>
    %811 = arith.shrui %809, %810 : vector<16x128xi32>
    %812 = arith.cmpi sge, %811, %662 : vector<16x128xi32>
    %813 = arith.extui %812 : vector<16x128xi1> to vector<16x128xi32>
    %814 = arith.cmpi sge, %811, %669 : vector<16x128xi32>
    %815 = arith.extui %814 : vector<16x128xi1> to vector<16x128xi32>
    %816 = arith.addi %813, %815 : vector<16x128xi32>
    %817 = arith.cmpi sge, %811, %676 : vector<16x128xi32>
    %818 = arith.extui %817 : vector<16x128xi1> to vector<16x128xi32>
    %819 = arith.addi %816, %818 : vector<16x128xi32>
    %820 = arith.cmpi sge, %811, %683 : vector<16x128xi32>
    %821 = arith.extui %820 : vector<16x128xi1> to vector<16x128xi32>
    %822 = arith.addi %819, %821 : vector<16x128xi32>
    %823 = arith.cmpi sge, %811, %690 : vector<16x128xi32>
    %824 = arith.extui %823 : vector<16x128xi1> to vector<16x128xi32>
    %825 = arith.addi %822, %824 : vector<16x128xi32>
    %826 = arith.sitofp %825 : vector<16x128xi32> to vector<16x128xbf16>
    %c32_210 = arith.constant 32 : index
    %c384_211 = arith.constant 384 : index
    %827 = vector.load %arg7[%c32_210, %c384_211] : memref<64x1024xbf16, #tpu.memory_space<vmem>>, vector<16x128xbf16>
    tpu.vector_store %arg7[%c32_210, %c384_211], %826 {strides = array<i32>} : memref<64x1024xbf16, #tpu.memory_space<vmem>>, vector<16x128xbf16>,
    %c32768_i32_212 = arith.constant 32768 : i32
    %828 = vector.broadcast %c32768_i32_212 : i32 to vector<16x128xi32>
    %829 = arith.addi %695, %828 : vector<16x128xi32>
    %c16_i32_213 = arith.constant 16 : i32
    %830 = vector.broadcast %c16_i32_213 : i32 to vector<16x128xi32>
    %831 = arith.shrui %829, %830 : vector<16x128xi32>
    %832 = arith.xori %829, %831 : vector<16x128xi32>
    %c-2048144789_i32_214 = arith.constant -2048144789 : i32
    %833 = vector.broadcast %c-2048144789_i32_214 : i32 to vector<16x128xi32>
    %834 = arith.muli %832, %833 : vector<16x128xi32>
    %c13_i32_215 = arith.constant 13 : i32
    %835 = vector.broadcast %c13_i32_215 : i32 to vector<16x128xi32>
    %836 = arith.shrui %834, %835 : vector<16x128xi32>
    %837 = arith.xori %834, %836 : vector<16x128xi32>
    %c-1028477387_i32_216 = arith.constant -1028477387 : i32
    %838 = vector.broadcast %c-1028477387_i32_216 : i32 to vector<16x128xi32>
    %839 = arith.muli %837, %838 : vector<16x128xi32>
    %c16_i32_217 = arith.constant 16 : i32
    %840 = vector.broadcast %c16_i32_217 : i32 to vector<16x128xi32>
    %841 = arith.shrui %839, %840 : vector<16x128xi32>
    %842 = arith.xori %839, %841 : vector<16x128xi32>
    %c8_i32_218 = arith.constant 8 : i32
    %843 = vector.broadcast %c8_i32_218 : i32 to vector<16x128xi32>
    %844 = arith.shrui %842, %843 : vector<16x128xi32>
    %845 = arith.cmpi sge, %844, %662 : vector<16x128xi32>
    %846 = arith.extui %845 : vector<16x128xi1> to vector<16x128xi32>
    %847 = arith.cmpi sge, %844, %669 : vector<16x128xi32>
    %848 = arith.extui %847 : vector<16x128xi1> to vector<16x128xi32>
    %849 = arith.addi %846, %848 : vector<16x128xi32>
    %850 = arith.cmpi sge, %844, %676 : vector<16x128xi32>
    %851 = arith.extui %850 : vector<16x128xi1> to vector<16x128xi32>
    %852 = arith.addi %849, %851 : vector<16x128xi32>
    %853 = arith.cmpi sge, %844, %683 : vector<16x128xi32>
    %854 = arith.extui %853 : vector<16x128xi1> to vector<16x128xi32>
    %855 = arith.addi %852, %854 : vector<16x128xi32>
    %856 = arith.cmpi sge, %844, %690 : vector<16x128xi32>
    %857 = arith.extui %856 : vector<16x128xi1> to vector<16x128xi32>
    %858 = arith.addi %855, %857 : vector<16x128xi32>
    %859 = arith.sitofp %858 : vector<16x128xi32> to vector<16x128xbf16>
    %c32_219 = arith.constant 32 : index
    %c512_220 = arith.constant 512 : index
    %860 = vector.load %arg7[%c32_219, %c512_220] : memref<64x1024xbf16, #tpu.memory_space<vmem>>, vector<16x128xbf16>
    tpu.vector_store %arg7[%c32_219, %c512_220], %859 {strides = array<i32>} : memref<64x1024xbf16, #tpu.memory_space<vmem>>, vector<16x128xbf16>,
    %c40960_i32_221 = arith.constant 40960 : i32
    %861 = vector.broadcast %c40960_i32_221 : i32 to vector<16x128xi32>
    %862 = arith.addi %695, %861 : vector<16x128xi32>
    %c16_i32_222 = arith.constant 16 : i32
    %863 = vector.broadcast %c16_i32_222 : i32 to vector<16x128xi32>
    %864 = arith.shrui %862, %863 : vector<16x128xi32>
    %865 = arith.xori %862, %864 : vector<16x128xi32>
    %c-2048144789_i32_223 = arith.constant -2048144789 : i32
    %866 = vector.broadcast %c-2048144789_i32_223 : i32 to vector<16x128xi32>
    %867 = arith.muli %865, %866 : vector<16x128xi32>
    %c13_i32_224 = arith.constant 13 : i32
    %868 = vector.broadcast %c13_i32_224 : i32 to vector<16x128xi32>
    %869 = arith.shrui %867, %868 : vector<16x128xi32>
    %870 = arith.xori %867, %869 : vector<16x128xi32>
    %c-1028477387_i32_225 = arith.constant -1028477387 : i32
    %871 = vector.broadcast %c-1028477387_i32_225 : i32 to vector<16x128xi32>
    %872 = arith.muli %870, %871 : vector<16x128xi32>
    %c16_i32_226 = arith.constant 16 : i32
    %873 = vector.broadcast %c16_i32_226 : i32 to vector<16x128xi32>
    %874 = arith.shrui %872, %873 : vector<16x128xi32>
    %875 = arith.xori %872, %874 : vector<16x128xi32>
    %c8_i32_227 = arith.constant 8 : i32
    %876 = vector.broadcast %c8_i32_227 : i32 to vector<16x128xi32>
    %877 = arith.shrui %875, %876 : vector<16x128xi32>
    %878 = arith.cmpi sge, %877, %662 : vector<16x128xi32>
    %879 = arith.extui %878 : vector<16x128xi1> to vector<16x128xi32>
    %880 = arith.cmpi sge, %877, %669 : vector<16x128xi32>
    %881 = arith.extui %880 : vector<16x128xi1> to vector<16x128xi32>
    %882 = arith.addi %879, %881 : vector<16x128xi32>
    %883 = arith.cmpi sge, %877, %676 : vector<16x128xi32>
    %884 = arith.extui %883 : vector<16x128xi1> to vector<16x128xi32>
    %885 = arith.addi %882, %884 : vector<16x128xi32>
    %886 = arith.cmpi sge, %877, %683 : vector<16x128xi32>
    %887 = arith.extui %886 : vector<16x128xi1> to vector<16x128xi32>
    %888 = arith.addi %885, %887 : vector<16x128xi32>
    %889 = arith.cmpi sge, %877, %690 : vector<16x128xi32>
    %890 = arith.extui %889 : vector<16x128xi1> to vector<16x128xi32>
    %891 = arith.addi %888, %890 : vector<16x128xi32>
    %892 = arith.sitofp %891 : vector<16x128xi32> to vector<16x128xbf16>
    %c32_228 = arith.constant 32 : index
    %c640_229 = arith.constant 640 : index
    %893 = vector.load %arg7[%c32_228, %c640_229] : memref<64x1024xbf16, #tpu.memory_space<vmem>>, vector<16x128xbf16>
    tpu.vector_store %arg7[%c32_228, %c640_229], %892 {strides = array<i32>} : memref<64x1024xbf16, #tpu.memory_space<vmem>>, vector<16x128xbf16>,
    %c49152_i32_230 = arith.constant 49152 : i32
    %894 = vector.broadcast %c49152_i32_230 : i32 to vector<16x128xi32>
    %895 = arith.addi %695, %894 : vector<16x128xi32>
    %c16_i32_231 = arith.constant 16 : i32
    %896 = vector.broadcast %c16_i32_231 : i32 to vector<16x128xi32>
    %897 = arith.shrui %895, %896 : vector<16x128xi32>
    %898 = arith.xori %895, %897 : vector<16x128xi32>
    %c-2048144789_i32_232 = arith.constant -2048144789 : i32
    %899 = vector.broadcast %c-2048144789_i32_232 : i32 to vector<16x128xi32>
    %900 = arith.muli %898, %899 : vector<16x128xi32>
    %c13_i32_233 = arith.constant 13 : i32
    %901 = vector.broadcast %c13_i32_233 : i32 to vector<16x128xi32>
    %902 = arith.shrui %900, %901 : vector<16x128xi32>
    %903 = arith.xori %900, %902 : vector<16x128xi32>
    %c-1028477387_i32_234 = arith.constant -1028477387 : i32
    %904 = vector.broadcast %c-1028477387_i32_234 : i32 to vector<16x128xi32>
    %905 = arith.muli %903, %904 : vector<16x128xi32>
    %c16_i32_235 = arith.constant 16 : i32
    %906 = vector.broadcast %c16_i32_235 : i32 to vector<16x128xi32>
    %907 = arith.shrui %905, %906 : vector<16x128xi32>
    %908 = arith.xori %905, %907 : vector<16x128xi32>
    %c8_i32_236 = arith.constant 8 : i32
    %909 = vector.broadcast %c8_i32_236 : i32 to vector<16x128xi32>
    %910 = arith.shrui %908, %909 : vector<16x128xi32>
    %911 = arith.cmpi sge, %910, %662 : vector<16x128xi32>
    %912 = arith.extui %911 : vector<16x128xi1> to vector<16x128xi32>
    %913 = arith.cmpi sge, %910, %669 : vector<16x128xi32>
    %914 = arith.extui %913 : vector<16x128xi1> to vector<16x128xi32>
    %915 = arith.addi %912, %914 : vector<16x128xi32>
    %916 = arith.cmpi sge, %910, %676 : vector<16x128xi32>
    %917 = arith.extui %916 : vector<16x128xi1> to vector<16x128xi32>
    %918 = arith.addi %915, %917 : vector<16x128xi32>
    %919 = arith.cmpi sge, %910, %683 : vector<16x128xi32>
    %920 = arith.extui %919 : vector<16x128xi1> to vector<16x128xi32>
    %921 = arith.addi %918, %920 : vector<16x128xi32>
    %922 = arith.cmpi sge, %910, %690 : vector<16x128xi32>
    %923 = arith.extui %922 : vector<16x128xi1> to vector<16x128xi32>
    %924 = arith.addi %921, %923 : vector<16x128xi32>
    %925 = arith.sitofp %924 : vector<16x128xi32> to vector<16x128xbf16>
    %c32_237 = arith.constant 32 : index
    %c768_238 = arith.constant 768 : index
    %926 = vector.load %arg7[%c32_237, %c768_238] : memref<64x1024xbf16, #tpu.memory_space<vmem>>, vector<16x128xbf16>
    tpu.vector_store %arg7[%c32_237, %c768_238], %925 {strides = array<i32>} : memref<64x1024xbf16, #tpu.memory_space<vmem>>, vector<16x128xbf16>,
    %c57344_i32_239 = arith.constant 57344 : i32
    %927 = vector.broadcast %c57344_i32_239 : i32 to vector<16x128xi32>
    %928 = arith.addi %695, %927 : vector<16x128xi32>
    %c16_i32_240 = arith.constant 16 : i32
    %929 = vector.broadcast %c16_i32_240 : i32 to vector<16x128xi32>
    %930 = arith.shrui %928, %929 : vector<16x128xi32>
    %931 = arith.xori %928, %930 : vector<16x128xi32>
    %c-2048144789_i32_241 = arith.constant -2048144789 : i32
    %932 = vector.broadcast %c-2048144789_i32_241 : i32 to vector<16x128xi32>
    %933 = arith.muli %931, %932 : vector<16x128xi32>
    %c13_i32_242 = arith.constant 13 : i32
    %934 = vector.broadcast %c13_i32_242 : i32 to vector<16x128xi32>
    %935 = arith.shrui %933, %934 : vector<16x128xi32>
    %936 = arith.xori %933, %935 : vector<16x128xi32>
    %c-1028477387_i32_243 = arith.constant -1028477387 : i32
    %937 = vector.broadcast %c-1028477387_i32_243 : i32 to vector<16x128xi32>
    %938 = arith.muli %936, %937 : vector<16x128xi32>
    %c16_i32_244 = arith.constant 16 : i32
    %939 = vector.broadcast %c16_i32_244 : i32 to vector<16x128xi32>
    %940 = arith.shrui %938, %939 : vector<16x128xi32>
    %941 = arith.xori %938, %940 : vector<16x128xi32>
    %c8_i32_245 = arith.constant 8 : i32
    %942 = vector.broadcast %c8_i32_245 : i32 to vector<16x128xi32>
    %943 = arith.shrui %941, %942 : vector<16x128xi32>
    %944 = arith.cmpi sge, %943, %662 : vector<16x128xi32>
    %945 = arith.extui %944 : vector<16x128xi1> to vector<16x128xi32>
    %946 = arith.cmpi sge, %943, %669 : vector<16x128xi32>
    %947 = arith.extui %946 : vector<16x128xi1> to vector<16x128xi32>
    %948 = arith.addi %945, %947 : vector<16x128xi32>
    %949 = arith.cmpi sge, %943, %676 : vector<16x128xi32>
    %950 = arith.extui %949 : vector<16x128xi1> to vector<16x128xi32>
    %951 = arith.addi %948, %950 : vector<16x128xi32>
    %952 = arith.cmpi sge, %943, %683 : vector<16x128xi32>
    %953 = arith.extui %952 : vector<16x128xi1> to vector<16x128xi32>
    %954 = arith.addi %951, %953 : vector<16x128xi32>
    %955 = arith.cmpi sge, %943, %690 : vector<16x128xi32>
    %956 = arith.extui %955 : vector<16x128xi1> to vector<16x128xi32>
    %957 = arith.addi %954, %956 : vector<16x128xi32>
    %958 = arith.sitofp %957 : vector<16x128xi32> to vector<16x128xbf16>
    %c32_246 = arith.constant 32 : index
    %c896_247 = arith.constant 896 : index
    %959 = vector.load %arg7[%c32_246, %c896_247] : memref<64x1024xbf16, #tpu.memory_space<vmem>>, vector<16x128xbf16>
    tpu.vector_store %arg7[%c32_246, %c896_247], %958 {strides = array<i32>} : memref<64x1024xbf16, #tpu.memory_space<vmem>>, vector<16x128xbf16>,
    %c48 = arith.constant 48 : index
    %c0_248 = arith.constant 0 : index
    %960 = vector.load %arg3[%c48, %c0_248] : memref<64x1xf32, #tpu.memory_space<vmem>>, vector<16x1xf32>
    %c0_249 = arith.constant 0 : index
    %c0_250 = arith.constant 0 : index
    %961 = vector.load %arg2[%c0_249, %c0_250] : memref<1x128xf32, #tpu.memory_space<vmem>>, vector<1x128xf32>
    %962 = vector.broadcast %961 : vector<1x128xf32> to vector<16x128xf32>
    %963 = vector.broadcast %960 : vector<16x1xf32> to vector<16x128xf32>
    %964 = arith.subf %962, %963 : vector<16x128xf32>
    %965 = arith.mulf %964, %964 : vector<16x128xf32>
    %cst_251 = arith.constant -2.000000e+02 : f32
    %966 = vector.broadcast %cst_251 : f32 to vector<16x128xf32>
    %967 = arith.mulf %965, %966 : vector<16x128xf32>
    %968 = math.exp %967 : vector<16x128xf32>
    %cst_252 = arith.constant 5.000000e-01 : f32
    %969 = vector.broadcast %cst_252 : f32 to vector<16x128xf32>
    %970 = arith.mulf %969, %968 : vector<16x128xf32>
    %cst_253 = arith.constant 0.000000e+00 : f32
    %971 = vector.broadcast %cst_253 : f32 to vector<16x128xf32>
    %972 = arith.subf %971, %970 : vector<16x128xf32>
    %973 = math.exp %972 : vector<16x128xf32>
    %cst_254 = arith.constant 0x4B800000 : f32
    %974 = vector.broadcast %cst_254 : f32 to vector<16x128xf32>
    %975 = arith.mulf %973, %974 : vector<16x128xf32>
    %976 = arith.fptosi %975 : vector<16x128xf32> to vector<16x128xi32>
    %977 = arith.mulf %973, %970 : vector<16x128xf32>
    %cst_255 = arith.constant 1.000000e+00 : f32
    %978 = vector.broadcast %cst_255 : f32 to vector<16x128xf32>
    %979 = arith.mulf %977, %978 : vector<16x128xf32>
    %980 = arith.addf %973, %979 : vector<16x128xf32>
    %cst_256 = arith.constant 0x4B800000 : f32
    %981 = vector.broadcast %cst_256 : f32 to vector<16x128xf32>
    %982 = arith.mulf %980, %981 : vector<16x128xf32>
    %983 = arith.fptosi %982 : vector<16x128xf32> to vector<16x128xi32>
    %984 = arith.mulf %979, %970 : vector<16x128xf32>
    %cst_257 = arith.constant 5.000000e-01 : f32
    %985 = vector.broadcast %cst_257 : f32 to vector<16x128xf32>
    %986 = arith.mulf %984, %985 : vector<16x128xf32>
    %987 = arith.addf %980, %986 : vector<16x128xf32>
    %cst_258 = arith.constant 0x4B800000 : f32
    %988 = vector.broadcast %cst_258 : f32 to vector<16x128xf32>
    %989 = arith.mulf %987, %988 : vector<16x128xf32>
    %990 = arith.fptosi %989 : vector<16x128xf32> to vector<16x128xi32>
    %991 = arith.mulf %986, %970 : vector<16x128xf32>
    %cst_259 = arith.constant 0.333333343 : f32
    %992 = vector.broadcast %cst_259 : f32 to vector<16x128xf32>
    %993 = arith.mulf %991, %992 : vector<16x128xf32>
    %994 = arith.addf %987, %993 : vector<16x128xf32>
    %cst_260 = arith.constant 0x4B800000 : f32
    %995 = vector.broadcast %cst_260 : f32 to vector<16x128xf32>
    %996 = arith.mulf %994, %995 : vector<16x128xf32>
    %997 = arith.fptosi %996 : vector<16x128xf32> to vector<16x128xi32>
    %998 = arith.mulf %993, %970 : vector<16x128xf32>
    %cst_261 = arith.constant 2.500000e-01 : f32
    %999 = vector.broadcast %cst_261 : f32 to vector<16x128xf32>
    %1000 = arith.mulf %998, %999 : vector<16x128xf32>
    %1001 = arith.addf %994, %1000 : vector<16x128xf32>
    %cst_262 = arith.constant 0x4B800000 : f32
    %1002 = vector.broadcast %cst_262 : f32 to vector<16x128xf32>
    %1003 = arith.mulf %1001, %1002 : vector<16x128xf32>
    %1004 = arith.fptosi %1003 : vector<16x128xf32> to vector<16x128xi32>
    %1005 = arith.addi %13, %17 : vector<16x128xi32>
    %c6144_i32 = arith.constant 6144 : i32
    %1006 = vector.broadcast %c6144_i32 : i32 to vector<16x128xi32>
    %1007 = arith.addi %1005, %1006 : vector<16x128xi32>
    %1008 = vector.broadcast %10 : i32 to vector<16x128xi32>
    %1009 = arith.xori %1007, %1008 : vector<16x128xi32>
    %c0_i32_263 = arith.constant 0 : i32
    %1010 = vector.broadcast %c0_i32_263 : i32 to vector<16x128xi32>
    %1011 = arith.addi %1009, %1010 : vector<16x128xi32>
    %c16_i32_264 = arith.constant 16 : i32
    %1012 = vector.broadcast %c16_i32_264 : i32 to vector<16x128xi32>
    %1013 = arith.shrui %1011, %1012 : vector<16x128xi32>
    %1014 = arith.xori %1011, %1013 : vector<16x128xi32>
    %c-2048144789_i32_265 = arith.constant -2048144789 : i32
    %1015 = vector.broadcast %c-2048144789_i32_265 : i32 to vector<16x128xi32>
    %1016 = arith.muli %1014, %1015 : vector<16x128xi32>
    %c13_i32_266 = arith.constant 13 : i32
    %1017 = vector.broadcast %c13_i32_266 : i32 to vector<16x128xi32>
    %1018 = arith.shrui %1016, %1017 : vector<16x128xi32>
    %1019 = arith.xori %1016, %1018 : vector<16x128xi32>
    %c-1028477387_i32_267 = arith.constant -1028477387 : i32
    %1020 = vector.broadcast %c-1028477387_i32_267 : i32 to vector<16x128xi32>
    %1021 = arith.muli %1019, %1020 : vector<16x128xi32>
    %c16_i32_268 = arith.constant 16 : i32
    %1022 = vector.broadcast %c16_i32_268 : i32 to vector<16x128xi32>
    %1023 = arith.shrui %1021, %1022 : vector<16x128xi32>
    %1024 = arith.xori %1021, %1023 : vector<16x128xi32>
    %c8_i32_269 = arith.constant 8 : i32
    %1025 = vector.broadcast %c8_i32_269 : i32 to vector<16x128xi32>
    %1026 = arith.shrui %1024, %1025 : vector<16x128xi32>
    %1027 = arith.cmpi sge, %1026, %976 : vector<16x128xi32>
    %1028 = arith.extui %1027 : vector<16x128xi1> to vector<16x128xi32>
    %1029 = arith.cmpi sge, %1026, %983 : vector<16x128xi32>
    %1030 = arith.extui %1029 : vector<16x128xi1> to vector<16x128xi32>
    %1031 = arith.addi %1028, %1030 : vector<16x128xi32>
    %1032 = arith.cmpi sge, %1026, %990 : vector<16x128xi32>
    %1033 = arith.extui %1032 : vector<16x128xi1> to vector<16x128xi32>
    %1034 = arith.addi %1031, %1033 : vector<16x128xi32>
    %1035 = arith.cmpi sge, %1026, %997 : vector<16x128xi32>
    %1036 = arith.extui %1035 : vector<16x128xi1> to vector<16x128xi32>
    %1037 = arith.addi %1034, %1036 : vector<16x128xi32>
    %1038 = arith.cmpi sge, %1026, %1004 : vector<16x128xi32>
    %1039 = arith.extui %1038 : vector<16x128xi1> to vector<16x128xi32>
    %1040 = arith.addi %1037, %1039 : vector<16x128xi32>
    %1041 = arith.sitofp %1040 : vector<16x128xi32> to vector<16x128xbf16>
    %c48_270 = arith.constant 48 : index
    %c0_271 = arith.constant 0 : index
    %1042 = vector.load %arg7[%c48_270, %c0_271] : memref<64x1024xbf16, #tpu.memory_space<vmem>>, vector<16x128xbf16>
    tpu.vector_store %arg7[%c48_270, %c0_271], %1041 {strides = array<i32>} : memref<64x1024xbf16, #tpu.memory_space<vmem>>, vector<16x128xbf16>,
    %c8192_i32_272 = arith.constant 8192 : i32
    %1043 = vector.broadcast %c8192_i32_272 : i32 to vector<16x128xi32>
    %1044 = arith.addi %1009, %1043 : vector<16x128xi32>
    %c16_i32_273 = arith.constant 16 : i32
    %1045 = vector.broadcast %c16_i32_273 : i32 to vector<16x128xi32>
    %1046 = arith.shrui %1044, %1045 : vector<16x128xi32>
    %1047 = arith.xori %1044, %1046 : vector<16x128xi32>
    %c-2048144789_i32_274 = arith.constant -2048144789 : i32
    %1048 = vector.broadcast %c-2048144789_i32_274 : i32 to vector<16x128xi32>
    %1049 = arith.muli %1047, %1048 : vector<16x128xi32>
    %c13_i32_275 = arith.constant 13 : i32
    %1050 = vector.broadcast %c13_i32_275 : i32 to vector<16x128xi32>
    %1051 = arith.shrui %1049, %1050 : vector<16x128xi32>
    %1052 = arith.xori %1049, %1051 : vector<16x128xi32>
    %c-1028477387_i32_276 = arith.constant -1028477387 : i32
    %1053 = vector.broadcast %c-1028477387_i32_276 : i32 to vector<16x128xi32>
    %1054 = arith.muli %1052, %1053 : vector<16x128xi32>
    %c16_i32_277 = arith.constant 16 : i32
    %1055 = vector.broadcast %c16_i32_277 : i32 to vector<16x128xi32>
    %1056 = arith.shrui %1054, %1055 : vector<16x128xi32>
    %1057 = arith.xori %1054, %1056 : vector<16x128xi32>
    %c8_i32_278 = arith.constant 8 : i32
    %1058 = vector.broadcast %c8_i32_278 : i32 to vector<16x128xi32>
    %1059 = arith.shrui %1057, %1058 : vector<16x128xi32>
    %1060 = arith.cmpi sge, %1059, %976 : vector<16x128xi32>
    %1061 = arith.extui %1060 : vector<16x128xi1> to vector<16x128xi32>
    %1062 = arith.cmpi sge, %1059, %983 : vector<16x128xi32>
    %1063 = arith.extui %1062 : vector<16x128xi1> to vector<16x128xi32>
    %1064 = arith.addi %1061, %1063 : vector<16x128xi32>
    %1065 = arith.cmpi sge, %1059, %990 : vector<16x128xi32>
    %1066 = arith.extui %1065 : vector<16x128xi1> to vector<16x128xi32>
    %1067 = arith.addi %1064, %1066 : vector<16x128xi32>
    %1068 = arith.cmpi sge, %1059, %997 : vector<16x128xi32>
    %1069 = arith.extui %1068 : vector<16x128xi1> to vector<16x128xi32>
    %1070 = arith.addi %1067, %1069 : vector<16x128xi32>
    %1071 = arith.cmpi sge, %1059, %1004 : vector<16x128xi32>
    %1072 = arith.extui %1071 : vector<16x128xi1> to vector<16x128xi32>
    %1073 = arith.addi %1070, %1072 : vector<16x128xi32>
    %1074 = arith.sitofp %1073 : vector<16x128xi32> to vector<16x128xbf16>
    %c48_279 = arith.constant 48 : index
    %c128_280 = arith.constant 128 : index
    %1075 = vector.load %arg7[%c48_279, %c128_280] : memref<64x1024xbf16, #tpu.memory_space<vmem>>, vector<16x128xbf16>
    tpu.vector_store %arg7[%c48_279, %c128_280], %1074 {strides = array<i32>} : memref<64x1024xbf16, #tpu.memory_space<vmem>>, vector<16x128xbf16>,
    %c16384_i32_281 = arith.constant 16384 : i32
    %1076 = vector.broadcast %c16384_i32_281 : i32 to vector<16x128xi32>
    %1077 = arith.addi %1009, %1076 : vector<16x128xi32>
    %c16_i32_282 = arith.constant 16 : i32
    %1078 = vector.broadcast %c16_i32_282 : i32 to vector<16x128xi32>
    %1079 = arith.shrui %1077, %1078 : vector<16x128xi32>
    %1080 = arith.xori %1077, %1079 : vector<16x128xi32>
    %c-2048144789_i32_283 = arith.constant -2048144789 : i32
    %1081 = vector.broadcast %c-2048144789_i32_283 : i32 to vector<16x128xi32>
    %1082 = arith.muli %1080, %1081 : vector<16x128xi32>
    %c13_i32_284 = arith.constant 13 : i32
    %1083 = vector.broadcast %c13_i32_284 : i32 to vector<16x128xi32>
    %1084 = arith.shrui %1082, %1083 : vector<16x128xi32>
    %1085 = arith.xori %1082, %1084 : vector<16x128xi32>
    %c-1028477387_i32_285 = arith.constant -1028477387 : i32
    %1086 = vector.broadcast %c-1028477387_i32_285 : i32 to vector<16x128xi32>
    %1087 = arith.muli %1085, %1086 : vector<16x128xi32>
    %c16_i32_286 = arith.constant 16 : i32
    %1088 = vector.broadcast %c16_i32_286 : i32 to vector<16x128xi32>
    %1089 = arith.shrui %1087, %1088 : vector<16x128xi32>
    %1090 = arith.xori %1087, %1089 : vector<16x128xi32>
    %c8_i32_287 = arith.constant 8 : i32
    %1091 = vector.broadcast %c8_i32_287 : i32 to vector<16x128xi32>
    %1092 = arith.shrui %1090, %1091 : vector<16x128xi32>
    %1093 = arith.cmpi sge, %1092, %976 : vector<16x128xi32>
    %1094 = arith.extui %1093 : vector<16x128xi1> to vector<16x128xi32>
    %1095 = arith.cmpi sge, %1092, %983 : vector<16x128xi32>
    %1096 = arith.extui %1095 : vector<16x128xi1> to vector<16x128xi32>
    %1097 = arith.addi %1094, %1096 : vector<16x128xi32>
    %1098 = arith.cmpi sge, %1092, %990 : vector<16x128xi32>
    %1099 = arith.extui %1098 : vector<16x128xi1> to vector<16x128xi32>
    %1100 = arith.addi %1097, %1099 : vector<16x128xi32>
    %1101 = arith.cmpi sge, %1092, %997 : vector<16x128xi32>
    %1102 = arith.extui %1101 : vector<16x128xi1> to vector<16x128xi32>
    %1103 = arith.addi %1100, %1102 : vector<16x128xi32>
    %1104 = arith.cmpi sge, %1092, %1004 : vector<16x128xi32>
    %1105 = arith.extui %1104 : vector<16x128xi1> to vector<16x128xi32>
    %1106 = arith.addi %1103, %1105 : vector<16x128xi32>
    %1107 = arith.sitofp %1106 : vector<16x128xi32> to vector<16x128xbf16>
    %c48_288 = arith.constant 48 : index
    %c256_289 = arith.constant 256 : index
    %1108 = vector.load %arg7[%c48_288, %c256_289] : memref<64x1024xbf16, #tpu.memory_space<vmem>>, vector<16x128xbf16>
    tpu.vector_store %arg7[%c48_288, %c256_289], %1107 {strides = array<i32>} : memref<64x1024xbf16, #tpu.memory_space<vmem>>, vector<16x128xbf16>,
    %c24576_i32_290 = arith.constant 24576 : i32
    %1109 = vector.broadcast %c24576_i32_290 : i32 to vector<16x128xi32>
    %1110 = arith.addi %1009, %1109 : vector<16x128xi32>
    %c16_i32_291 = arith.constant 16 : i32
    %1111 = vector.broadcast %c16_i32_291 : i32 to vector<16x128xi32>
    %1112 = arith.shrui %1110, %1111 : vector<16x128xi32>
    %1113 = arith.xori %1110, %1112 : vector<16x128xi32>
    %c-2048144789_i32_292 = arith.constant -2048144789 : i32
    %1114 = vector.broadcast %c-2048144789_i32_292 : i32 to vector<16x128xi32>
    %1115 = arith.muli %1113, %1114 : vector<16x128xi32>
    %c13_i32_293 = arith.constant 13 : i32
    %1116 = vector.broadcast %c13_i32_293 : i32 to vector<16x128xi32>
    %1117 = arith.shrui %1115, %1116 : vector<16x128xi32>
    %1118 = arith.xori %1115, %1117 : vector<16x128xi32>
    %c-1028477387_i32_294 = arith.constant -1028477387 : i32
    %1119 = vector.broadcast %c-1028477387_i32_294 : i32 to vector<16x128xi32>
    %1120 = arith.muli %1118, %1119 : vector<16x128xi32>
    %c16_i32_295 = arith.constant 16 : i32
    %1121 = vector.broadcast %c16_i32_295 : i32 to vector<16x128xi32>
    %1122 = arith.shrui %1120, %1121 : vector<16x128xi32>
    %1123 = arith.xori %1120, %1122 : vector<16x128xi32>
    %c8_i32_296 = arith.constant 8 : i32
    %1124 = vector.broadcast %c8_i32_296 : i32 to vector<16x128xi32>
    %1125 = arith.shrui %1123, %1124 : vector<16x128xi32>
    %1126 = arith.cmpi sge, %1125, %976 : vector<16x128xi32>
    %1127 = arith.extui %1126 : vector<16x128xi1> to vector<16x128xi32>
    %1128 = arith.cmpi sge, %1125, %983 : vector<16x128xi32>
    %1129 = arith.extui %1128 : vector<16x128xi1> to vector<16x128xi32>
    %1130 = arith.addi %1127, %1129 : vector<16x128xi32>
    %1131 = arith.cmpi sge, %1125, %990 : vector<16x128xi32>
    %1132 = arith.extui %1131 : vector<16x128xi1> to vector<16x128xi32>
    %1133 = arith.addi %1130, %1132 : vector<16x128xi32>
    %1134 = arith.cmpi sge, %1125, %997 : vector<16x128xi32>
    %1135 = arith.extui %1134 : vector<16x128xi1> to vector<16x128xi32>
    %1136 = arith.addi %1133, %1135 : vector<16x128xi32>
    %1137 = arith.cmpi sge, %1125, %1004 : vector<16x128xi32>
    %1138 = arith.extui %1137 : vector<16x128xi1> to vector<16x128xi32>
    %1139 = arith.addi %1136, %1138 : vector<16x128xi32>
    %1140 = arith.sitofp %1139 : vector<16x128xi32> to vector<16x128xbf16>
    %c48_297 = arith.constant 48 : index
    %c384_298 = arith.constant 384 : index
    %1141 = vector.load %arg7[%c48_297, %c384_298] : memref<64x1024xbf16, #tpu.memory_space<vmem>>, vector<16x128xbf16>
    tpu.vector_store %arg7[%c48_297, %c384_298], %1140 {strides = array<i32>} : memref<64x1024xbf16, #tpu.memory_space<vmem>>, vector<16x128xbf16>,
    %c32768_i32_299 = arith.constant 32768 : i32
    %1142 = vector.broadcast %c32768_i32_299 : i32 to vector<16x128xi32>
    %1143 = arith.addi %1009, %1142 : vector<16x128xi32>
    %c16_i32_300 = arith.constant 16 : i32
    %1144 = vector.broadcast %c16_i32_300 : i32 to vector<16x128xi32>
    %1145 = arith.shrui %1143, %1144 : vector<16x128xi32>
    %1146 = arith.xori %1143, %1145 : vector<16x128xi32>
    %c-2048144789_i32_301 = arith.constant -2048144789 : i32
    %1147 = vector.broadcast %c-2048144789_i32_301 : i32 to vector<16x128xi32>
    %1148 = arith.muli %1146, %1147 : vector<16x128xi32>
    %c13_i32_302 = arith.constant 13 : i32
    %1149 = vector.broadcast %c13_i32_302 : i32 to vector<16x128xi32>
    %1150 = arith.shrui %1148, %1149 : vector<16x128xi32>
    %1151 = arith.xori %1148, %1150 : vector<16x128xi32>
    %c-1028477387_i32_303 = arith.constant -1028477387 : i32
    %1152 = vector.broadcast %c-1028477387_i32_303 : i32 to vector<16x128xi32>
    %1153 = arith.muli %1151, %1152 : vector<16x128xi32>
    %c16_i32_304 = arith.constant 16 : i32
    %1154 = vector.broadcast %c16_i32_304 : i32 to vector<16x128xi32>
    %1155 = arith.shrui %1153, %1154 : vector<16x128xi32>
    %1156 = arith.xori %1153, %1155 : vector<16x128xi32>
    %c8_i32_305 = arith.constant 8 : i32
    %1157 = vector.broadcast %c8_i32_305 : i32 to vector<16x128xi32>
    %1158 = arith.shrui %1156, %1157 : vector<16x128xi32>
    %1159 = arith.cmpi sge, %1158, %976 : vector<16x128xi32>
    %1160 = arith.extui %1159 : vector<16x128xi1> to vector<16x128xi32>
    %1161 = arith.cmpi sge, %1158, %983 : vector<16x128xi32>
    %1162 = arith.extui %1161 : vector<16x128xi1> to vector<16x128xi32>
    %1163 = arith.addi %1160, %1162 : vector<16x128xi32>
    %1164 = arith.cmpi sge, %1158, %990 : vector<16x128xi32>
    %1165 = arith.extui %1164 : vector<16x128xi1> to vector<16x128xi32>
    %1166 = arith.addi %1163, %1165 : vector<16x128xi32>
    %1167 = arith.cmpi sge, %1158, %997 : vector<16x128xi32>
    %1168 = arith.extui %1167 : vector<16x128xi1> to vector<16x128xi32>
    %1169 = arith.addi %1166, %1168 : vector<16x128xi32>
    %1170 = arith.cmpi sge, %1158, %1004 : vector<16x128xi32>
    %1171 = arith.extui %1170 : vector<16x128xi1> to vector<16x128xi32>
    %1172 = arith.addi %1169, %1171 : vector<16x128xi32>
    %1173 = arith.sitofp %1172 : vector<16x128xi32> to vector<16x128xbf16>
    %c48_306 = arith.constant 48 : index
    %c512_307 = arith.constant 512 : index
    %1174 = vector.load %arg7[%c48_306, %c512_307] : memref<64x1024xbf16, #tpu.memory_space<vmem>>, vector<16x128xbf16>
    tpu.vector_store %arg7[%c48_306, %c512_307], %1173 {strides = array<i32>} : memref<64x1024xbf16, #tpu.memory_space<vmem>>, vector<16x128xbf16>,
    %c40960_i32_308 = arith.constant 40960 : i32
    %1175 = vector.broadcast %c40960_i32_308 : i32 to vector<16x128xi32>
    %1176 = arith.addi %1009, %1175 : vector<16x128xi32>
    %c16_i32_309 = arith.constant 16 : i32
    %1177 = vector.broadcast %c16_i32_309 : i32 to vector<16x128xi32>
    %1178 = arith.shrui %1176, %1177 : vector<16x128xi32>
    %1179 = arith.xori %1176, %1178 : vector<16x128xi32>
    %c-2048144789_i32_310 = arith.constant -2048144789 : i32
    %1180 = vector.broadcast %c-2048144789_i32_310 : i32 to vector<16x128xi32>
    %1181 = arith.muli %1179, %1180 : vector<16x128xi32>
    %c13_i32_311 = arith.constant 13 : i32
    %1182 = vector.broadcast %c13_i32_311 : i32 to vector<16x128xi32>
    %1183 = arith.shrui %1181, %1182 : vector<16x128xi32>
    %1184 = arith.xori %1181, %1183 : vector<16x128xi32>
    %c-1028477387_i32_312 = arith.constant -1028477387 : i32
    %1185 = vector.broadcast %c-1028477387_i32_312 : i32 to vector<16x128xi32>
    %1186 = arith.muli %1184, %1185 : vector<16x128xi32>
    %c16_i32_313 = arith.constant 16 : i32
    %1187 = vector.broadcast %c16_i32_313 : i32 to vector<16x128xi32>
    %1188 = arith.shrui %1186, %1187 : vector<16x128xi32>
    %1189 = arith.xori %1186, %1188 : vector<16x128xi32>
    %c8_i32_314 = arith.constant 8 : i32
    %1190 = vector.broadcast %c8_i32_314 : i32 to vector<16x128xi32>
    %1191 = arith.shrui %1189, %1190 : vector<16x128xi32>
    %1192 = arith.cmpi sge, %1191, %976 : vector<16x128xi32>
    %1193 = arith.extui %1192 : vector<16x128xi1> to vector<16x128xi32>
    %1194 = arith.cmpi sge, %1191, %983 : vector<16x128xi32>
    %1195 = arith.extui %1194 : vector<16x128xi1> to vector<16x128xi32>
    %1196 = arith.addi %1193, %1195 : vector<16x128xi32>
    %1197 = arith.cmpi sge, %1191, %990 : vector<16x128xi32>
    %1198 = arith.extui %1197 : vector<16x128xi1> to vector<16x128xi32>
    %1199 = arith.addi %1196, %1198 : vector<16x128xi32>
    %1200 = arith.cmpi sge, %1191, %997 : vector<16x128xi32>
    %1201 = arith.extui %1200 : vector<16x128xi1> to vector<16x128xi32>
    %1202 = arith.addi %1199, %1201 : vector<16x128xi32>
    %1203 = arith.cmpi sge, %1191, %1004 : vector<16x128xi32>
    %1204 = arith.extui %1203 : vector<16x128xi1> to vector<16x128xi32>
    %1205 = arith.addi %1202, %1204 : vector<16x128xi32>
    %1206 = arith.sitofp %1205 : vector<16x128xi32> to vector<16x128xbf16>
    %c48_315 = arith.constant 48 : index
    %c640_316 = arith.constant 640 : index
    %1207 = vector.load %arg7[%c48_315, %c640_316] : memref<64x1024xbf16, #tpu.memory_space<vmem>>, vector<16x128xbf16>
    tpu.vector_store %arg7[%c48_315, %c640_316], %1206 {strides = array<i32>} : memref<64x1024xbf16, #tpu.memory_space<vmem>>, vector<16x128xbf16>,
    %c49152_i32_317 = arith.constant 49152 : i32
    %1208 = vector.broadcast %c49152_i32_317 : i32 to vector<16x128xi32>
    %1209 = arith.addi %1009, %1208 : vector<16x128xi32>
    %c16_i32_318 = arith.constant 16 : i32
    %1210 = vector.broadcast %c16_i32_318 : i32 to vector<16x128xi32>
    %1211 = arith.shrui %1209, %1210 : vector<16x128xi32>
    %1212 = arith.xori %1209, %1211 : vector<16x128xi32>
    %c-2048144789_i32_319 = arith.constant -2048144789 : i32
    %1213 = vector.broadcast %c-2048144789_i32_319 : i32 to vector<16x128xi32>
    %1214 = arith.muli %1212, %1213 : vector<16x128xi32>
    %c13_i32_320 = arith.constant 13 : i32
    %1215 = vector.broadcast %c13_i32_320 : i32 to vector<16x128xi32>
    %1216 = arith.shrui %1214, %1215 : vector<16x128xi32>
    %1217 = arith.xori %1214, %1216 : vector<16x128xi32>
    %c-1028477387_i32_321 = arith.constant -1028477387 : i32
    %1218 = vector.broadcast %c-1028477387_i32_321 : i32 to vector<16x128xi32>
    %1219 = arith.muli %1217, %1218 : vector<16x128xi32>
    %c16_i32_322 = arith.constant 16 : i32
    %1220 = vector.broadcast %c16_i32_322 : i32 to vector<16x128xi32>
    %1221 = arith.shrui %1219, %1220 : vector<16x128xi32>
    %1222 = arith.xori %1219, %1221 : vector<16x128xi32>
    %c8_i32_323 = arith.constant 8 : i32
    %1223 = vector.broadcast %c8_i32_323 : i32 to vector<16x128xi32>
    %1224 = arith.shrui %1222, %1223 : vector<16x128xi32>
    %1225 = arith.cmpi sge, %1224, %976 : vector<16x128xi32>
    %1226 = arith.extui %1225 : vector<16x128xi1> to vector<16x128xi32>
    %1227 = arith.cmpi sge, %1224, %983 : vector<16x128xi32>
    %1228 = arith.extui %1227 : vector<16x128xi1> to vector<16x128xi32>
    %1229 = arith.addi %1226, %1228 : vector<16x128xi32>
    %1230 = arith.cmpi sge, %1224, %990 : vector<16x128xi32>
    %1231 = arith.extui %1230 : vector<16x128xi1> to vector<16x128xi32>
    %1232 = arith.addi %1229, %1231 : vector<16x128xi32>
    %1233 = arith.cmpi sge, %1224, %997 : vector<16x128xi32>
    %1234 = arith.extui %1233 : vector<16x128xi1> to vector<16x128xi32>
    %1235 = arith.addi %1232, %1234 : vector<16x128xi32>
    %1236 = arith.cmpi sge, %1224, %1004 : vector<16x128xi32>
    %1237 = arith.extui %1236 : vector<16x128xi1> to vector<16x128xi32>
    %1238 = arith.addi %1235, %1237 : vector<16x128xi32>
    %1239 = arith.sitofp %1238 : vector<16x128xi32> to vector<16x128xbf16>
    %c48_324 = arith.constant 48 : index
    %c768_325 = arith.constant 768 : index
    %1240 = vector.load %arg7[%c48_324, %c768_325] : memref<64x1024xbf16, #tpu.memory_space<vmem>>, vector<16x128xbf16>
    tpu.vector_store %arg7[%c48_324, %c768_325], %1239 {strides = array<i32>} : memref<64x1024xbf16, #tpu.memory_space<vmem>>, vector<16x128xbf16>,
    %c57344_i32_326 = arith.constant 57344 : i32
    %1241 = vector.broadcast %c57344_i32_326 : i32 to vector<16x128xi32>
    %1242 = arith.addi %1009, %1241 : vector<16x128xi32>
    %c16_i32_327 = arith.constant 16 : i32
    %1243 = vector.broadcast %c16_i32_327 : i32 to vector<16x128xi32>
    %1244 = arith.shrui %1242, %1243 : vector<16x128xi32>
    %1245 = arith.xori %1242, %1244 : vector<16x128xi32>
    %c-2048144789_i32_328 = arith.constant -2048144789 : i32
    %1246 = vector.broadcast %c-2048144789_i32_328 : i32 to vector<16x128xi32>
    %1247 = arith.muli %1245, %1246 : vector<16x128xi32>
    %c13_i32_329 = arith.constant 13 : i32
    %1248 = vector.broadcast %c13_i32_329 : i32 to vector<16x128xi32>
    %1249 = arith.shrui %1247, %1248 : vector<16x128xi32>
    %1250 = arith.xori %1247, %1249 : vector<16x128xi32>
    %c-1028477387_i32_330 = arith.constant -1028477387 : i32
    %1251 = vector.broadcast %c-1028477387_i32_330 : i32 to vector<16x128xi32>
    %1252 = arith.muli %1250, %1251 : vector<16x128xi32>
    %c16_i32_331 = arith.constant 16 : i32
    %1253 = vector.broadcast %c16_i32_331 : i32 to vector<16x128xi32>
    %1254 = arith.shrui %1252, %1253 : vector<16x128xi32>
    %1255 = arith.xori %1252, %1254 : vector<16x128xi32>
    %c8_i32_332 = arith.constant 8 : i32
    %1256 = vector.broadcast %c8_i32_332 : i32 to vector<16x128xi32>
    %1257 = arith.shrui %1255, %1256 : vector<16x128xi32>
    %1258 = arith.cmpi sge, %1257, %976 : vector<16x128xi32>
    %1259 = arith.extui %1258 : vector<16x128xi1> to vector<16x128xi32>
    %1260 = arith.cmpi sge, %1257, %983 : vector<16x128xi32>
    %1261 = arith.extui %1260 : vector<16x128xi1> to vector<16x128xi32>
    %1262 = arith.addi %1259, %1261 : vector<16x128xi32>
    %1263 = arith.cmpi sge, %1257, %990 : vector<16x128xi32>
    %1264 = arith.extui %1263 : vector<16x128xi1> to vector<16x128xi32>
    %1265 = arith.addi %1262, %1264 : vector<16x128xi32>
    %1266 = arith.cmpi sge, %1257, %997 : vector<16x128xi32>
    %1267 = arith.extui %1266 : vector<16x128xi1> to vector<16x128xi32>
    %1268 = arith.addi %1265, %1267 : vector<16x128xi32>
    %1269 = arith.cmpi sge, %1257, %1004 : vector<16x128xi32>
    %1270 = arith.extui %1269 : vector<16x128xi1> to vector<16x128xi32>
    %1271 = arith.addi %1268, %1270 : vector<16x128xi32>
    %1272 = arith.sitofp %1271 : vector<16x128xi32> to vector<16x128xbf16>
    %c48_333 = arith.constant 48 : index
    %c896_334 = arith.constant 896 : index
    %1273 = vector.load %arg7[%c48_333, %c896_334] : memref<64x1024xbf16, #tpu.memory_space<vmem>>, vector<16x128xbf16>
    tpu.vector_store %arg7[%c48_333, %c896_334], %1272 {strides = array<i32>} : memref<64x1024xbf16, #tpu.memory_space<vmem>>, vector<16x128xbf16>,
    %c0_335 = arith.constant 0 : index
    %c0_336 = arith.constant 0 : index
    %1274 = vector.load %arg4[%c0_335, %c0_336] : memref<32x64xbf16, #tpu.memory_space<vmem>>, vector<32x64xbf16>
    %c0_337 = arith.constant 0 : index
    %c0_338 = arith.constant 0 : index
    %1275 = vector.load %arg7[%c0_337, %c0_338] : memref<64x1024xbf16, #tpu.memory_space<vmem>>, vector<64x1024xbf16>
    %cst_339 = arith.constant dense<0.000000e+00> : vector<32x1024xf32>
    %1276 = tpu.matmul %1274, %1275, %cst_339 {dimension_numbers = #tpu.dot_dimension_numbers<[1], [0], [0], [1], [0, 0, 1, 1], [], []>} : vector<32x64xbf16>, vector<64x1024xbf16>, vector<32x1024xf32> -> vector<32x1024xf32>
    %c0_340 = arith.constant 0 : index
    %c0_341 = arith.constant 0 : index
    %1277 = vector.load %arg8[%c0_340, %c0_341] : memref<32x1024xf32, #tpu.memory_space<vmem>>, vector<32x1024xf32>
    tpu.vector_store %arg8[%c0_340, %c0_341], %1276 {strides = array<i32>} : memref<32x1024xf32, #tpu.memory_space<vmem>>, vector<32x1024xf32>,
    %c0_342 = arith.constant 0 : index
    %c0_343 = arith.constant 0 : index
    %1278 = vector.load %arg5[%c0_342, %c0_343] : memref<32x1xf32, #tpu.memory_space<vmem>>, vector<32x1xf32>
    %1279 = vector.shape_cast %1278 : vector<32x1xf32> to vector<32x1xf32>
    %1280 = vector.broadcast %1279 : vector<32x1xf32> to vector<32x128xf32>
    %cst_344 = arith.constant 0.000000e+00 : f32
    %1281 = vector.broadcast %cst_344 : f32 to vector<32x128xf32>
    %cst_345 = arith.constant 0.000000e+00 : f32
    %1282 = vector.broadcast %cst_345 : f32 to vector<32x128xf32>
    %c0_346 = arith.constant 0 : index
    %c0_347 = arith.constant 0 : index
    %1283 = vector.load %arg8[%c0_346, %c0_347] : memref<32x1024xf32, #tpu.memory_space<vmem>>, vector<32x128xf32>
    %1284 = arith.addf %1283, %1280 : vector<32x128xf32>
    %1285 = arith.mulf %1281, %1282 : vector<32x128xf32>
    %1286 = arith.subf %1281, %1285 : vector<32x128xf32>
    %cst_348 = arith.constant 5.000000e-01 : f32
    %1287 = vector.broadcast %cst_348 : f32 to vector<32x128xf32>
    %1288 = arith.mulf %1287, %1286 : vector<32x128xf32>
    %1289 = arith.addf %1288, %1284 : vector<32x128xf32>
    %cst_349 = arith.constant 5.000000e-01 : f32
    %1290 = vector.broadcast %cst_349 : f32 to vector<32x128xf32>
    %1291 = arith.cmpf ogt, %1289, %1290 : vector<32x128xf32>
    %1292 = arith.extui %1291 : vector<32x128xi1> to vector<32x128xi32>
    %1293 = arith.sitofp %1292 : vector<32x128xi32> to vector<32x128xf32>
    %1294 = arith.truncf %1293 : vector<32x128xf32> to vector<32x128xbf16>
    %c0_350 = arith.constant 0 : index
    %c0_351 = arith.constant 0 : index
    %c0_352 = arith.constant 0 : index
    %1295 = vector.load %arg6[%c0_350, %c0_351, %c0_352] : memref<8x32x128xbf16, #tpu.memory_space<vmem>>, vector<1x32x128xbf16>
    %1296 = vector.shape_cast %1295 : vector<1x32x128xbf16> to vector<32x128xbf16>
    %1297 = vector.shape_cast %1294 : vector<32x128xbf16> to vector<1x32x128xbf16>
    tpu.vector_store %arg6[%c0_350, %c0_351, %c0_352], %1297 {strides = array<i32>} : memref<8x32x128xbf16, #tpu.memory_space<vmem>>, vector<1x32x128xbf16>,
    %c0_353 = arith.constant 0 : index
    %c128_354 = arith.constant 128 : index
    %1298 = vector.load %arg8[%c0_353, %c128_354] : memref<32x1024xf32, #tpu.memory_space<vmem>>, vector<32x128xf32>
    %1299 = arith.addf %1298, %1280 : vector<32x128xf32>
    %1300 = arith.mulf %1289, %1293 : vector<32x128xf32>
    %1301 = arith.subf %1289, %1300 : vector<32x128xf32>
    %cst_355 = arith.constant 5.000000e-01 : f32
    %1302 = vector.broadcast %cst_355 : f32 to vector<32x128xf32>
    %1303 = arith.mulf %1302, %1301 : vector<32x128xf32>
    %1304 = arith.addf %1303, %1299 : vector<32x128xf32>
    %cst_356 = arith.constant 5.000000e-01 : f32
    %1305 = vector.broadcast %cst_356 : f32 to vector<32x128xf32>
    %1306 = arith.cmpf ogt, %1304, %1305 : vector<32x128xf32>
    %1307 = arith.extui %1306 : vector<32x128xi1> to vector<32x128xi32>
    %1308 = arith.sitofp %1307 : vector<32x128xi32> to vector<32x128xf32>
    %1309 = arith.truncf %1308 : vector<32x128xf32> to vector<32x128xbf16>
    %c1 = arith.constant 1 : index
    %c0_357 = arith.constant 0 : index
    %c0_358 = arith.constant 0 : index
    %1310 = vector.load %arg6[%c1, %c0_357, %c0_358] : memref<8x32x128xbf16, #tpu.memory_space<vmem>>, vector<1x32x128xbf16>
    %1311 = vector.shape_cast %1310 : vector<1x32x128xbf16> to vector<32x128xbf16>
    %1312 = vector.shape_cast %1309 : vector<32x128xbf16> to vector<1x32x128xbf16>
    tpu.vector_store %arg6[%c1, %c0_357, %c0_358], %1312 {strides = array<i32>} : memref<8x32x128xbf16, #tpu.memory_space<vmem>>, vector<1x32x128xbf16>,
    %c0_359 = arith.constant 0 : index
    %c256_360 = arith.constant 256 : index
    %1313 = vector.load %arg8[%c0_359, %c256_360] : memref<32x1024xf32, #tpu.memory_space<vmem>>, vector<32x128xf32>
    %1314 = arith.addf %1313, %1280 : vector<32x128xf32>
    %1315 = arith.mulf %1304, %1308 : vector<32x128xf32>
    %1316 = arith.subf %1304, %1315 : vector<32x128xf32>
    %cst_361 = arith.constant 5.000000e-01 : f32
    %1317 = vector.broadcast %cst_361 : f32 to vector<32x128xf32>
    %1318 = arith.mulf %1317, %1316 : vector<32x128xf32>
    %1319 = arith.addf %1318, %1314 : vector<32x128xf32>
    %cst_362 = arith.constant 5.000000e-01 : f32
    %1320 = vector.broadcast %cst_362 : f32 to vector<32x128xf32>
    %1321 = arith.cmpf ogt, %1319, %1320 : vector<32x128xf32>
    %1322 = arith.extui %1321 : vector<32x128xi1> to vector<32x128xi32>
    %1323 = arith.sitofp %1322 : vector<32x128xi32> to vector<32x128xf32>
    %1324 = arith.truncf %1323 : vector<32x128xf32> to vector<32x128xbf16>
    %c2 = arith.constant 2 : index
    %c0_363 = arith.constant 0 : index
    %c0_364 = arith.constant 0 : index
    %1325 = vector.load %arg6[%c2, %c0_363, %c0_364] : memref<8x32x128xbf16, #tpu.memory_space<vmem>>, vector<1x32x128xbf16>
    %1326 = vector.shape_cast %1325 : vector<1x32x128xbf16> to vector<32x128xbf16>
    %1327 = vector.shape_cast %1324 : vector<32x128xbf16> to vector<1x32x128xbf16>
    tpu.vector_store %arg6[%c2, %c0_363, %c0_364], %1327 {strides = array<i32>} : memref<8x32x128xbf16, #tpu.memory_space<vmem>>, vector<1x32x128xbf16>,
    %c0_365 = arith.constant 0 : index
    %c384_366 = arith.constant 384 : index
    %1328 = vector.load %arg8[%c0_365, %c384_366] : memref<32x1024xf32, #tpu.memory_space<vmem>>, vector<32x128xf32>
    %1329 = arith.addf %1328, %1280 : vector<32x128xf32>
    %1330 = arith.mulf %1319, %1323 : vector<32x128xf32>
    %1331 = arith.subf %1319, %1330 : vector<32x128xf32>
    %cst_367 = arith.constant 5.000000e-01 : f32
    %1332 = vector.broadcast %cst_367 : f32 to vector<32x128xf32>
    %1333 = arith.mulf %1332, %1331 : vector<32x128xf32>
    %1334 = arith.addf %1333, %1329 : vector<32x128xf32>
    %cst_368 = arith.constant 5.000000e-01 : f32
    %1335 = vector.broadcast %cst_368 : f32 to vector<32x128xf32>
    %1336 = arith.cmpf ogt, %1334, %1335 : vector<32x128xf32>
    %1337 = arith.extui %1336 : vector<32x128xi1> to vector<32x128xi32>
    %1338 = arith.sitofp %1337 : vector<32x128xi32> to vector<32x128xf32>
    %1339 = arith.truncf %1338 : vector<32x128xf32> to vector<32x128xbf16>
    %c3 = arith.constant 3 : index
    %c0_369 = arith.constant 0 : index
    %c0_370 = arith.constant 0 : index
    %1340 = vector.load %arg6[%c3, %c0_369, %c0_370] : memref<8x32x128xbf16, #tpu.memory_space<vmem>>, vector<1x32x128xbf16>
    %1341 = vector.shape_cast %1340 : vector<1x32x128xbf16> to vector<32x128xbf16>
    %1342 = vector.shape_cast %1339 : vector<32x128xbf16> to vector<1x32x128xbf16>
    tpu.vector_store %arg6[%c3, %c0_369, %c0_370], %1342 {strides = array<i32>} : memref<8x32x128xbf16, #tpu.memory_space<vmem>>, vector<1x32x128xbf16>,
    %c0_371 = arith.constant 0 : index
    %c512_372 = arith.constant 512 : index
    %1343 = vector.load %arg8[%c0_371, %c512_372] : memref<32x1024xf32, #tpu.memory_space<vmem>>, vector<32x128xf32>
    %1344 = arith.addf %1343, %1280 : vector<32x128xf32>
    %1345 = arith.mulf %1334, %1338 : vector<32x128xf32>
    %1346 = arith.subf %1334, %1345 : vector<32x128xf32>
    %cst_373 = arith.constant 5.000000e-01 : f32
    %1347 = vector.broadcast %cst_373 : f32 to vector<32x128xf32>
    %1348 = arith.mulf %1347, %1346 : vector<32x128xf32>
    %1349 = arith.addf %1348, %1344 : vector<32x128xf32>
    %cst_374 = arith.constant 5.000000e-01 : f32
    %1350 = vector.broadcast %cst_374 : f32 to vector<32x128xf32>
    %1351 = arith.cmpf ogt, %1349, %1350 : vector<32x128xf32>
    %1352 = arith.extui %1351 : vector<32x128xi1> to vector<32x128xi32>
    %1353 = arith.sitofp %1352 : vector<32x128xi32> to vector<32x128xf32>
    %1354 = arith.truncf %1353 : vector<32x128xf32> to vector<32x128xbf16>
    %c4 = arith.constant 4 : index
    %c0_375 = arith.constant 0 : index
    %c0_376 = arith.constant 0 : index
    %1355 = vector.load %arg6[%c4, %c0_375, %c0_376] : memref<8x32x128xbf16, #tpu.memory_space<vmem>>, vector<1x32x128xbf16>
    %1356 = vector.shape_cast %1355 : vector<1x32x128xbf16> to vector<32x128xbf16>
    %1357 = vector.shape_cast %1354 : vector<32x128xbf16> to vector<1x32x128xbf16>
    tpu.vector_store %arg6[%c4, %c0_375, %c0_376], %1357 {strides = array<i32>} : memref<8x32x128xbf16, #tpu.memory_space<vmem>>, vector<1x32x128xbf16>,
    %c0_377 = arith.constant 0 : index
    %c640_378 = arith.constant 640 : index
    %1358 = vector.load %arg8[%c0_377, %c640_378] : memref<32x1024xf32, #tpu.memory_space<vmem>>, vector<32x128xf32>
    %1359 = arith.addf %1358, %1280 : vector<32x128xf32>
    %1360 = arith.mulf %1349, %1353 : vector<32x128xf32>
    %1361 = arith.subf %1349, %1360 : vector<32x128xf32>
    %cst_379 = arith.constant 5.000000e-01 : f32
    %1362 = vector.broadcast %cst_379 : f32 to vector<32x128xf32>
    %1363 = arith.mulf %1362, %1361 : vector<32x128xf32>
    %1364 = arith.addf %1363, %1359 : vector<32x128xf32>
    %cst_380 = arith.constant 5.000000e-01 : f32
    %1365 = vector.broadcast %cst_380 : f32 to vector<32x128xf32>
    %1366 = arith.cmpf ogt, %1364, %1365 : vector<32x128xf32>
    %1367 = arith.extui %1366 : vector<32x128xi1> to vector<32x128xi32>
    %1368 = arith.sitofp %1367 : vector<32x128xi32> to vector<32x128xf32>
    %1369 = arith.truncf %1368 : vector<32x128xf32> to vector<32x128xbf16>
    %c5 = arith.constant 5 : index
    %c0_381 = arith.constant 0 : index
    %c0_382 = arith.constant 0 : index
    %1370 = vector.load %arg6[%c5, %c0_381, %c0_382] : memref<8x32x128xbf16, #tpu.memory_space<vmem>>, vector<1x32x128xbf16>
    %1371 = vector.shape_cast %1370 : vector<1x32x128xbf16> to vector<32x128xbf16>
    %1372 = vector.shape_cast %1369 : vector<32x128xbf16> to vector<1x32x128xbf16>
    tpu.vector_store %arg6[%c5, %c0_381, %c0_382], %1372 {strides = array<i32>} : memref<8x32x128xbf16, #tpu.memory_space<vmem>>, vector<1x32x128xbf16>,
    %c0_383 = arith.constant 0 : index
    %c768_384 = arith.constant 768 : index
    %1373 = vector.load %arg8[%c0_383, %c768_384] : memref<32x1024xf32, #tpu.memory_space<vmem>>, vector<32x128xf32>
    %1374 = arith.addf %1373, %1280 : vector<32x128xf32>
    %1375 = arith.mulf %1364, %1368 : vector<32x128xf32>
    %1376 = arith.subf %1364, %1375 : vector<32x128xf32>
    %cst_385 = arith.constant 5.000000e-01 : f32
    %1377 = vector.broadcast %cst_385 : f32 to vector<32x128xf32>
    %1378 = arith.mulf %1377, %1376 : vector<32x128xf32>
    %1379 = arith.addf %1378, %1374 : vector<32x128xf32>
    %cst_386 = arith.constant 5.000000e-01 : f32
    %1380 = vector.broadcast %cst_386 : f32 to vector<32x128xf32>
    %1381 = arith.cmpf ogt, %1379, %1380 : vector<32x128xf32>
    %1382 = arith.extui %1381 : vector<32x128xi1> to vector<32x128xi32>
    %1383 = arith.sitofp %1382 : vector<32x128xi32> to vector<32x128xf32>
    %1384 = arith.truncf %1383 : vector<32x128xf32> to vector<32x128xbf16>
    %c6 = arith.constant 6 : index
    %c0_387 = arith.constant 0 : index
    %c0_388 = arith.constant 0 : index
    %1385 = vector.load %arg6[%c6, %c0_387, %c0_388] : memref<8x32x128xbf16, #tpu.memory_space<vmem>>, vector<1x32x128xbf16>
    %1386 = vector.shape_cast %1385 : vector<1x32x128xbf16> to vector<32x128xbf16>
    %1387 = vector.shape_cast %1384 : vector<32x128xbf16> to vector<1x32x128xbf16>
    tpu.vector_store %arg6[%c6, %c0_387, %c0_388], %1387 {strides = array<i32>} : memref<8x32x128xbf16, #tpu.memory_space<vmem>>, vector<1x32x128xbf16>,
    %c0_389 = arith.constant 0 : index
    %c896_390 = arith.constant 896 : index
    %1388 = vector.load %arg8[%c0_389, %c896_390] : memref<32x1024xf32, #tpu.memory_space<vmem>>, vector<32x128xf32>
    %1389 = arith.addf %1388, %1280 : vector<32x128xf32>
    %1390 = arith.mulf %1379, %1383 : vector<32x128xf32>
    %1391 = arith.subf %1379, %1390 : vector<32x128xf32>
    %cst_391 = arith.constant 5.000000e-01 : f32
    %1392 = vector.broadcast %cst_391 : f32 to vector<32x128xf32>
    %1393 = arith.mulf %1392, %1391 : vector<32x128xf32>
    %1394 = arith.addf %1393, %1389 : vector<32x128xf32>
    %cst_392 = arith.constant 5.000000e-01 : f32
    %1395 = vector.broadcast %cst_392 : f32 to vector<32x128xf32>
    %1396 = arith.cmpf ogt, %1394, %1395 : vector<32x128xf32>
    %1397 = arith.extui %1396 : vector<32x128xi1> to vector<32x128xi32>
    %1398 = arith.sitofp %1397 : vector<32x128xi32> to vector<32x128xf32>
    %1399 = arith.truncf %1398 : vector<32x128xf32> to vector<32x128xbf16>
    %c7 = arith.constant 7 : index
    %c0_393 = arith.constant 0 : index
    %c0_394 = arith.constant 0 : index
    %1400 = vector.load %arg6[%c7, %c0_393, %c0_394] : memref<8x32x128xbf16, #tpu.memory_space<vmem>>, vector<1x32x128xbf16>
    %1401 = vector.shape_cast %1400 : vector<1x32x128xbf16> to vector<32x128xbf16>
    %1402 = vector.shape_cast %1399 : vector<32x128xbf16> to vector<1x32x128xbf16>
    tpu.vector_store %arg6[%c7, %c0_393, %c0_394], %1402 {strides = array<i32>} : memref<8x32x128xbf16, #tpu.memory_space<vmem>>, vector<1x32x128xbf16>,
    return
  }
  func.func @transform_0(%arg0: i32, %arg1: memref<1xi32, #tpu.memory_space<smem>>) -> (i32, i32) {
    %c0_i32 = arith.constant 0 : i32
    %c0_i32_0 = arith.constant 0 : i32
    return %c0_i32, %arg0 : i32, i32
  }
  func.func @transform_1(%arg0: i32, %arg1: memref<1xi32, #tpu.memory_space<smem>>) -> (i32, i32) {
    %c0_i32 = arith.constant 0 : i32
    %c0_i32_0 = arith.constant 0 : i32
    %c0_i32_1 = arith.constant 0 : i32
    return %c0_i32, %c0_i32_0 : i32, i32
  }
  func.func @transform_2(%arg0: i32, %arg1: memref<1xi32, #tpu.memory_space<smem>>) -> (i32, i32) {
    %c0_i32 = arith.constant 0 : i32
    %c0_i32_0 = arith.constant 0 : i32
    %c0_i32_1 = arith.constant 0 : i32
    return %c0_i32, %c0_i32_0 : i32, i32
  }
  func.func @transform_3(%arg0: i32, %arg1: memref<1xi32, #tpu.memory_space<smem>>) -> (i32, i32) {
    %c0_i32 = arith.constant 0 : i32
    %c0_i32_0 = arith.constant 0 : i32
    %c0_i32_1 = arith.constant 0 : i32
    return %c0_i32, %c0_i32_0 : i32, i32
  }
  func.func @transform_4(%arg0: i32, %arg1: memref<1xi32, #tpu.memory_space<smem>>) -> (i32, i32, i32) {
    %c0_i32 = arith.constant 0 : i32
    %c0_i32_0 = arith.constant 0 : i32
    %c0_i32_1 = arith.constant 0 : i32
    return %c0_i32, %c0_i32_0, %arg0 : i32, i32, i32
  }
}

</mosaic_0001>

<llo_original>
// kernel: tpu_custom_call.1
$region0: #{tpu_custom_call.1}
  #allocation0 [shape = 'u32[]', space=smem, size = 0x4, offset = 0x4, fixed_abs, tag = 'smem constant byte address 0x4 - core index']
  #allocation1 [shape = 'u32[144,128]{1,0:T(1,128)}', space=vmem, size = 0x12000, scoped, tag = 'internal scratch']
  #allocation2 [shape = 'bf16[64,1024]{1,0:T(16,128)(2,1)}', space=vmem, size = 0x20000, scoped, tag = 'scratch operand']
  #allocation3 [shape = 'f32[32,1024]{1,0:T(8,128)}', space=vmem, size = 0x20000, scoped, tag = 'scratch operand']
  #allocation4 [shape = 's32[1]{0}', space=sflag, size = 0x4, scoped, tag = 'scoped memory for tpu_custom_call.1']
  #allocation5 [shape = 's32[1]{0:T(128)S(6)}', space=smem, size = 0x200, scoped, tag = 'prefetched SMEM operand 0']
  %s0 = inlined_call_operand.<no memory space> [shape: s32[1], index: 0, kind: input, shape index: {}]
  %s1 = inlined_call_operand.vmem [shape: f32[1,128], index: 1, kind: input, shape index: {}]
  %s2 = inlined_call_operand.vmem [shape: f32[64,1], index: 2, kind: input, shape index: {}]
  %s3 = inlined_call_operand.vmem [shape: bf16[32,64], index: 3, kind: input, shape index: {}]
  %s4 = inlined_call_operand.vmem [shape: f32[32,1], index: 4, kind: input, shape index: {}]
  %s5 = inlined_call_operand.hbm [shape: bf16[8,32,128], index: 5, kind: output, shape index: {}]
  %s6 = sld [smem:[#allocation0]]
  $region26: #{tpu_custom_call.1} parent=0
    _
  %s8 = ssub.s32 1, %s6
  %s9 = scalar_select 0, %s8, %s6
  %10 = sst [smem:[#allocation5]] %s0
  $region1: #{tpu_custom_call.1} parent=0
    #allocation6 [shape = 'u8[65536]{0}', space=vmem, size = 0x10000, scoped, tag = 'output window, operand 0, single buffered']
    #allocation7 [shape = 's32[1]{0}', space=sflag, size = 0x4, scoped, tag = 'scoped memory for tpu_custom_call.1']
    %11 = vsyncpa [#allocation7], 0
    // Predicated region
    $region2: #{tpu_custom_call.1} parent=1 // pred_check
      _
    $region3: #{tpu_custom_call.1} parent=1 // pred_check_branch
      %13 = sbr.rel (0) target = $region5
    $region4: #{tpu_custom_call.1} parent=1 // pred_region
      _
    $region5: #{tpu_custom_call.1} parent=1 // pred_fallthru
      _
    // Predicated region
    $region6: #{tpu_custom_call.1} parent=1 // pred_check
      _
    $region7: #{tpu_custom_call.1} parent=1 // pred_check_branch
      %15 = sbr.rel (0) target = $region9
    $region8: #{tpu_custom_call.1} parent=1 // pred_region
      _
    $region9: #{tpu_custom_call.1} parent=1 // pred_fallthru
      _
    // Predicated region
    $region10: #{tpu_custom_call.1} parent=1 // pred_check
      _
    $region11: #{tpu_custom_call.1} parent=1 // pred_check_branch
      %17 = sbr.rel (0) target = $region13
    $region12: #{tpu_custom_call.1} parent=1 // pred_region
      _
    $region13: #{tpu_custom_call.1} parent=1 // pred_fallthru
      _
    // Predicated region
    $region14: #{tpu_custom_call.1} parent=1 // pred_check
      _
    $region15: #{tpu_custom_call.1} parent=1 // pred_check_branch
      %19 = sbr.rel (0) target = $region17
    $region16: #{tpu_custom_call.1} parent=1 // pred_region
      _
    $region17: #{tpu_custom_call.1} parent=1 // pred_fallthru
      _
    %s21 = sld [smem:[#allocation5]]
    %s22 = smul.u32 %s21, 2654435769
    %s23 = sadd.s32 %s22, 1
    %s24 = sshrl.u32 %s23, 16
    %s25 = sxor.u32 %s23, %s24
    %s26 = smul.u32 %s25, 2246822507
    %s27 = sshrl.u32 %s26, 13
    %s28 = sxor.u32 %s26, %s27
    %s29 = smul.u32 %s28, 3266489909
    %s30 = sshrl.u32 %s29, 16
    %s31 = sxor.u32 %s29, %s30
    %v32 = vlaneseq
    %v33 = vshrl.u32 %v32, 7
    %v34 = vadd.s32 %v33, 8
    %v35 = vmul.u32 %v33, 128
    %v36 = vmul.u32 %v34, 128
    %v37 = vlaneseq
    %v38 = vand.u32 %v37, 127
    %s39 = smul.u32 0, 128
    %v40 = vstv %s39
    %v41 = vadd.s32 %v38, %v40
    %v42 = vld [vmem:[%s2] sm:$0xff]
    %v43 = vld [vmem:[%s2 + $0x8] sm:$0xff]
    %v44 = vld [vmem:[%s1] sm:$0x1]
    %v46 = vlaneseq
    %v47 = vshrl.u32 %v46, 7
    %v48 = vsub.s32 0, %v47
    %v49 = vrot.slane %v44, %v48
    %52 = vset.pattern.permute.xlu0 0
    %53 = vperm.xlu0 %52, %v42
    %v54 = vpop.permute.xlu0 %53
    %57 = vset.pattern.permute.xlu0 0
    %58 = vperm.xlu0 %57, %v43
    %v59 = vpop.permute.xlu0 %58
    %v61 = vsub.f32 %v49, %v54
    %v62 = vsub.f32 %v49, %v59
    %v63 = vmul.f32 %v61, %v61
    %v64 = vmul.f32 %v62, %v62
    %v65 = vmul.f32 %v63, -200.0
    %v66 = vmul.f32 %v64, -200.0
    %v67 = vmul.f32 %v65, 1.442695
    %v68 = vpow.pop %v67
    %v69 = vmul.f32 %v66, 1.442695
    %v70 = vpow.pop %v69
    %v71 = vmul.f32 %v68, 0.5
    %v72 = vmul.f32 %v70, 0.5
    %v73 = vsub.f32 0.0, %v71
    %v74 = vsub.f32 0.0, %v72
    %v75 = vmul.f32 %v73, 1.442695
    %v76 = vpow.pop %v75
    %v77 = vmul.f32 %v74, 1.442695
    %v78 = vpow.pop %v77
    %v79 = vmul.f32 %v76, 16777216.0
    %v80 = vmul.f32 %v78, 16777216.0
    %v81 = vcvt.f32.s32.to.zero.pseudo %v79
    %v82 = vcvt.f32.s32.to.zero.pseudo %v80
    %v83 = vmul.f32 %v76, %v71
    %v84 = vmul.f32 %v78, %v72
    %v85 = vadd.f32 %v76, %v83
    %v86 = vadd.f32 %v78, %v84
    %v87 = vmul.f32 %v85, 16777216.0
    %v88 = vmul.f32 %v86, 16777216.0
    %v89 = vcvt.f32.s32.to.zero.pseudo %v87
    %v90 = vcvt.f32.s32.to.zero.pseudo %v88
    %v91 = vmul.f32 %v83, %v71
    %v92 = vmul.f32 %v84, %v72
    %v93 = vmul.f32 %v91, 0.5
    %v94 = vmul.f32 %v92, 0.5
    %v95 = vadd.f32 %v85, %v93
    %v96 = vadd.f32 %v86, %v94
    %v97 = vmul.f32 %v95, 16777216.0
    %v98 = vmul.f32 %v96, 16777216.0
    %v99 = vcvt.f32.s32.to.zero.pseudo %v97
    %v100 = vcvt.f32.s32.to.zero.pseudo %v98
    %v101 = vmul.f32 %v93, %v71
    %v102 = vmul.f32 %v94, %v72
    %v103 = vmul.f32 %v101, 0.33333334
    %v104 = vmul.f32 %v102, 0.33333334
    %v105 = vadd.f32 %v95, %v103
    %v106 = vadd.f32 %v96, %v104
    %v107 = vmul.f32 %v105, 16777216.0
    %v108 = vmul.f32 %v106, 16777216.0
    %v109 = vcvt.f32.s32.to.zero.pseudo %v107
    %v110 = vcvt.f32.s32.to.zero.pseudo %v108
    %v111 = vmul.f32 %v103, %v71
    %v112 = vmul.f32 %v104, %v72
    %v113 = vmul.f32 %v111, 0.25
    %v114 = vmul.f32 %v112, 0.25
    %v115 = vadd.f32 %v105, %v113
    %v116 = vadd.f32 %v106, %v114
    %v117 = vmul.f32 %v115, 16777216.0
    %v118 = vmul.f32 %v116, 16777216.0
    %v119 = vcvt.f32.s32.to.zero.pseudo %v117
    %v120 = vcvt.f32.s32.to.zero.pseudo %v118
    %v121 = vadd.s32 %v35, %v41
    %v122 = vadd.s32 %v36, %v41
    %v123 = vstv %s31
    %v124 = vxor.u32 %v121, %v123
    %v125 = vxor.u32 %v122, %v123
    %v126 = vshrl.u32 %v124, 16
    %v127 = vshrl.u32 %v125, 16
    %v128 = vxor.u32 %v124, %v126
    %v129 = vxor.u32 %v125, %v127
    %v130 = vmul.u32 %v128, 2246822507
    %v131 = vmul.u32 %v129, 2246822507
    %v132 = vshrl.u32 %v130, 13
    %v133 = vshrl.u32 %v131, 13
    %v134 = vxor.u32 %v130, %v132
    %v135 = vxor.u32 %v131, %v133
    %v136 = vmul.u32 %v134, 3266489909
    %v137 = vmul.u32 %v135, 3266489909
    %v138 = vshrl.u32 %v136, 16
    %v139 = vshrl.u32 %v137, 16
    %v140 = vxor.u32 %v136, %v138
    %v141 = vxor.u32 %v137, %v139
    %v142 = vshrl.u32 %v140, 8
    %v143 = vshrl.u32 %v141, 8
    %vm144 = vcmp.ge.s32.totalorder %v142, %v81
    %vm145 = vcmp.ge.s32.totalorder %v143, %v82
    %v146 = vsel %vm144, 1, 0
    %v147 = vsel %vm145, 1, 0
    %vm148 = vcmp.ge.s32.totalorder %v142, %v89
    %vm149 = vcmp.ge.s32.totalorder %v143, %v90
    %v150 = vsel %vm148, 1, 0
    %v151 = vsel %vm149, 1, 0
    %v152 = vadd.s32 %v146, %v150
    %v153 = vadd.s32 %v147, %v151
    %vm154 = vcmp.ge.s32.totalorder %v142, %v99
    %vm155 = vcmp.ge.s32.totalorder %v143, %v100
    %v156 = vsel %vm154, 1, 0
    %v157 = vsel %vm155, 1, 0
    %v158 = vadd.s32 %v152, %v156
    %v159 = vadd.s32 %v153, %v157
    %vm160 = vcmp.ge.s32.totalorder %v142, %v109
    %vm161 = vcmp.ge.s32.totalorder %v143, %v110
    %v162 = vsel %vm160, 1, 0
    %v163 = vsel %vm161, 1, 0
    %v164 = vadd.s32 %v158, %v162
    %v165 = vadd.s32 %v159, %v163
    %vm166 = vcmp.ge.s32.totalorder %v142, %v119
    %vm167 = vcmp.ge.s32.totalorder %v143, %v120
    %v168 = vsel %vm166, 1, 0
    %v169 = vsel %vm167, 1, 0
    %v170 = vadd.s32 %v164, %v168
    %v171 = vadd.s32 %v165, %v169
    %v172 = vcvt.s32.f32 %v170
    %v173 = vcvt.s32.f32 %v171
    %v174 = vpack.c.bf16 %v173, %v172
    %175 = vst [vmem:[#allocation2] sm:$0xff] %v174
    %v176 = vadd.s32 %v124, 8192
    %v177 = vadd.s32 %v125, 8192
    %v178 = vshrl.u32 %v176, 16
    %v179 = vshrl.u32 %v177, 16
    %v180 = vxor.u32 %v176, %v178
    %v181 = vxor.u32 %v177, %v179
    %v182 = vmul.u32 %v180, 2246822507
    %v183 = vmul.u32 %v181, 2246822507
    %v184 = vshrl.u32 %v182, 13
    %v185 = vshrl.u32 %v183, 13
    %v186 = vxor.u32 %v182, %v184
    %v187 = vxor.u32 %v183, %v185
    %v188 = vmul.u32 %v186, 3266489909
    %v189 = vmul.u32 %v187, 3266489909
    %v190 = vshrl.u32 %v188, 16
    %v191 = vshrl.u32 %v189, 16
    %v192 = vxor.u32 %v188, %v190
    %v193 = vxor.u32 %v189, %v191
    %v194 = vshrl.u32 %v192, 8
    %v195 = vshrl.u32 %v193, 8
    %vm196 = vcmp.ge.s32.totalorder %v194, %v81
    %vm197 = vcmp.ge.s32.totalorder %v195, %v82
    %v198 = vsel %vm196, 1, 0
    %v199 = vsel %vm197, 1, 0
    %vm200 = vcmp.ge.s32.totalorder %v194, %v89
    %vm201 = vcmp.ge.s32.totalorder %v195, %v90
    %v202 = vsel %vm200, 1, 0
    %v203 = vsel %vm201, 1, 0
    %v204 = vadd.s32 %v198, %v202
    %v205 = vadd.s32 %v199, %v203
    %vm206 = vcmp.ge.s32.totalorder %v194, %v99
    %vm207 = vcmp.ge.s32.totalorder %v195, %v100
    %v208 = vsel %vm206, 1, 0
    %v209 = vsel %vm207, 1, 0
    %v210 = vadd.s32 %v204, %v208
    %v211 = vadd.s32 %v205, %v209
    %vm212 = vcmp.ge.s32.totalorder %v194, %v109
    %vm213 = vcmp.ge.s32.totalorder %v195, %v110
    %v214 = vsel %vm212, 1, 0
    %v215 = vsel %vm213, 1, 0
    %v216 = vadd.s32 %v210, %v214
    %v217 = vadd.s32 %v211, %v215
    %vm218 = vcmp.ge.s32.totalorder %v194, %v119
    %vm219 = vcmp.ge.s32.totalorder %v195, %v120
    %v220 = vsel %vm218, 1, 0
    %v221 = vsel %vm219, 1, 0
    %v222 = vadd.s32 %v216, %v220
    %v223 = vadd.s32 %v217, %v221
    %v224 = vcvt.s32.f32 %v222
    %v225 = vcvt.s32.f32 %v223
    %v226 = vpack.c.bf16 %v225, %v224
    %227 = vst [vmem:[#allocation2 + $0x8] sm:$0xff] %v226
    %v228 = vadd.s32 %v124, 16384
    %v229 = vadd.s32 %v125, 16384
    %v230 = vshrl.u32 %v228, 16
    %v231 = vshrl.u32 %v229, 16
    %v232 = vxor.u32 %v228, %v230
    %v233 = vxor.u32 %v229, %v231
    %v234 = vmul.u32 %v232, 2246822507
    %v235 = vmul.u32 %v233, 2246822507
    %v236 = vshrl.u32 %v234, 13
    %v237 = vshrl.u32 %v235, 13
    %v238 = vxor.u32 %v234, %v236
    %v239 = vxor.u32 %v235, %v237
    %v240 = vmul.u32 %v238, 3266489909
    %v241 = vmul.u32 %v239, 3266489909
    %v242 = vshrl.u32 %v240, 16
    %v243 = vshrl.u32 %v241, 16
    %v244 = vxor.u32 %v240, %v242
    %v245 = vxor.u32 %v241, %v243
    %v246 = vshrl.u32 %v244, 8
    %v247 = vshrl.u32 %v245, 8
    %vm248 = vcmp.ge.s32.totalorder %v246, %v81
    %vm249 = vcmp.ge.s32.totalorder %v247, %v82
    %v250 = vsel %vm248, 1, 0
    %v251 = vsel %vm249, 1, 0
    %vm252 = vcmp.ge.s32.totalorder %v246, %v89
    %vm253 = vcmp.ge.s32.totalorder %v247, %v90
    %v254 = vsel %vm252, 1, 0
    %v255 = vsel %vm253, 1, 0
    %v256 = vadd.s32 %v250, %v254
    %v257 = vadd.s32 %v251, %v255
    %vm258 = vcmp.ge.s32.totalorder %v246, %v99
    %vm259 = vcmp.ge.s32.totalorder %v247, %v100
    %v260 = vsel %vm258, 1, 0
    %v261 = vsel %vm259, 1, 0
    %v262 = vadd.s32 %v256, %v260
    %v263 = vadd.s32 %v257, %v261
    %vm264 = vcmp.ge.s32.totalorder %v246, %v109
    %vm265 = vcmp.ge.s32.totalorder %v247, %v110
    %v266 = vsel %vm264, 1, 0
    %v267 = vsel %vm265, 1, 0
    %v268 = vadd.s32 %v262, %v266
    %v269 = vadd.s32 %v263, %v267
    %vm270 = vcmp.ge.s32.totalorder %v246, %v119
    %vm271 = vcmp.ge.s32.totalorder %v247, %v120
    %v272 = vsel %vm270, 1, 0
    %v273 = vsel %vm271, 1, 0
    %v274 = vadd.s32 %v268, %v272
    %v275 = vadd.s32 %v269, %v273
    %v276 = vcvt.s32.f32 %v274
    %v277 = vcvt.s32.f32 %v275
    %v278 = vpack.c.bf16 %v277, %v276
    %279 = vst [vmem:[#allocation2 + $0x10] sm:$0xff] %v278
    %v280 = vadd.s32 %v124, 24576
    %v281 = vadd.s32 %v125, 24576
    %v282 = vshrl.u32 %v280, 16
    %v283 = vshrl.u32 %v281, 16
    %v284 = vxor.u32 %v280, %v282
    %v285 = vxor.u32 %v281, %v283
    %v286 = vmul.u32 %v284, 2246822507
    %v287 = vmul.u32 %v285, 2246822507
    %v288 = vshrl.u32 %v286, 13
    %v289 = vshrl.u32 %v287, 13
    %v290 = vxor.u32 %v286, %v288
    %v291 = vxor.u32 %v287, %v289
    %v292 = vmul.u32 %v290, 3266489909
    %v293 = vmul.u32 %v291, 3266489909
    %v294 = vshrl.u32 %v292, 16
    %v295 = vshrl.u32 %v293, 16
    %v296 = vxor.u32 %v292, %v294
    %v297 = vxor.u32 %v293, %v295
    %v298 = vshrl.u32 %v296, 8
    %v299 = vshrl.u32 %v297, 8
    %vm300 = vcmp.ge.s32.totalorder %v298, %v81
    %vm301 = vcmp.ge.s32.totalorder %v299, %v82
    %v302 = vsel %vm300, 1, 0
    %v303 = vsel %vm301, 1, 0
    %vm304 = vcmp.ge.s32.totalorder %v298, %v89
    %vm305 = vcmp.ge.s32.totalorder %v299, %v90
    %v306 = vsel %vm304, 1, 0
    %v307 = vsel %vm305, 1, 0
    %v308 = vadd.s32 %v302, %v306
    %v309 = vadd.s32 %v303, %v307
    %vm310 = vcmp.ge.s32.totalorder %v298, %v99
    %vm311 = vcmp.ge.s32.totalorder %v299, %v100
    %v312 = vsel %vm310, 1, 0
    %v313 = vsel %vm311, 1, 0
    %v314 = vadd.s32 %v308, %v312
    %v315 = vadd.s32 %v309, %v313
    %vm316 = vcmp.ge.s32.totalorder %v298, %v109
    %vm317 = vcmp.ge.s32.totalorder %v299, %v110
    %v318 = vsel %vm316, 1, 0
    %v319 = vsel %vm317, 1, 0
    %v320 = vadd.s32 %v314, %v318
    %v321 = vadd.s32 %v315, %v319
    %vm322 = vcmp.ge.s32.totalorder %v298, %v119
    %vm323 = vcmp.ge.s32.totalorder %v299, %v120
    %v324 = vsel %vm322, 1, 0
    %v325 = vsel %vm323, 1, 0
    %v326 = vadd.s32 %v320, %v324
    %v327 = vadd.s32 %v321, %v325
    %v328 = vcvt.s32.f32 %v326
    %v329 = vcvt.s32.f32 %v327
    %v330 = vpack.c.bf16 %v329, %v328
    %331 = vst [vmem:[#allocation2 + $0x18] sm:$0xff] %v330
    %v332 = vadd.s32 %v124, 32768
    %v333 = vadd.s32 %v125, 32768
    %v334 = vshrl.u32 %v332, 16
    %v335 = vshrl.u32 %v333, 16
    %v336 = vxor.u32 %v332, %v334
    %v337 = vxor.u32 %v333, %v335
    %v338 = vmul.u32 %v336, 2246822507
    %v339 = vmul.u32 %v337, 2246822507
    %v340 = vshrl.u32 %v338, 13
    %v341 = vshrl.u32 %v339, 13
    %v342 = vxor.u32 %v338, %v340
    %v343 = vxor.u32 %v339, %v341
    %v344 = vmul.u32 %v342, 3266489909
    %v345 = vmul.u32 %v343, 3266489909
    %v346 = vshrl.u32 %v344, 16
    %v347 = vshrl.u32 %v345, 16
    %v348 = vxor.u32 %v344, %v346
    %v349 = vxor.u32 %v345, %v347
    %v350 = vshrl.u32 %v348, 8
    %v351 = vshrl.u32 %v349, 8
    %vm352 = vcmp.ge.s32.totalorder %v350, %v81
    %vm353 = vcmp.ge.s32.totalorder %v351, %v82
    %v354 = vsel %vm352, 1, 0
    %v355 = vsel %vm353, 1, 0
    %vm356 = vcmp.ge.s32.totalorder %v350, %v89
    %vm357 = vcmp.ge.s32.totalorder %v351, %v90
    %v358 = vsel %vm356, 1, 0
    %v359 = vsel %vm357, 1, 0
    %v360 = vadd.s32 %v354, %v358
    %v361 = vadd.s32 %v355, %v359
    %vm362 = vcmp.ge.s32.totalorder %v350, %v99
    %vm363 = vcmp.ge.s32.totalorder %v351, %v100
    %v364 = vsel %vm362, 1, 0
    %v365 = vsel %vm363, 1, 0
    %v366 = vadd.s32 %v360, %v364
    %v367 = vadd.s32 %v361, %v365
    %vm368 = vcmp.ge.s32.totalorder %v350, %v109
    %vm369 = vcmp.ge.s32.totalorder %v351, %v110
    %v370 = vsel %vm368, 1, 0
    %v371 = vsel %vm369, 1, 0
    %v372 = vadd.s32 %v366, %v370
    %v373 = vadd.s32 %v367, %v371
    %vm374 = vcmp.ge.s32.totalorder %v350, %v119
    %vm375 = vcmp.ge.s32.totalorder %v351, %v120
    %v376 = vsel %vm374, 1, 0
    %v377 = vsel %vm375, 1, 0
    %v378 = vadd.s32 %v372, %v376
    %v379 = vadd.s32 %v373, %v377
    %v380 = vcvt.s32.f32 %v378
    %v381 = vcvt.s32.f32 %v379
    %v382 = vpack.c.bf16 %v381, %v380
    %383 = vst [vmem:[#allocation2 + $0x20] sm:$0xff] %v382
    %v384 = vadd.s32 %v124, 40960
    %v385 = vadd.s32 %v125, 40960
    %v386 = vshrl.u32 %v384, 16
    %v387 = vshrl.u32 %v385, 16
    %v388 = vxor.u32 %v384, %v386
    %v389 = vxor.u32 %v385, %v387
    %v390 = vmul.u32 %v388, 2246822507
    %v391 = vmul.u32 %v389, 2246822507
    %v392 = vshrl.u32 %v390, 13
    %v393 = vshrl.u32 %v391, 13
    %v394 = vxor.u32 %v390, %v392
    %v395 = vxor.u32 %v391, %v393
    %v396 = vmul.u32 %v394, 3266489909
    %v397 = vmul.u32 %v395, 3266489909
    %v398 = vshrl.u32 %v396, 16
    %v399 = vshrl.u32 %v397, 16
    %v400 = vxor.u32 %v396, %v398
    %v401 = vxor.u32 %v397, %v399
    %v402 = vshrl.u32 %v400, 8
    %v403 = vshrl.u32 %v401, 8
    %vm404 = vcmp.ge.s32.totalorder %v402, %v81
    %vm405 = vcmp.ge.s32.totalorder %v403, %v82
    %v406 = vsel %vm404, 1, 0
    %v407 = vsel %vm405, 1, 0
    %vm408 = vcmp.ge.s32.totalorder %v402, %v89
    %vm409 = vcmp.ge.s32.totalorder %v403, %v90
    %v410 = vsel %vm408, 1, 0
    %v411 = vsel %vm409, 1, 0
    %v412 = vadd.s32 %v406, %v410
    %v413 = vadd.s32 %v407, %v411
    %vm414 = vcmp.ge.s32.totalorder %v402, %v99
    %vm415 = vcmp.ge.s32.totalorder %v403, %v100
    %v416 = vsel %vm414, 1, 0
    %v417 = vsel %vm415, 1, 0
    %v418 = vadd.s32 %v412, %v416
    %v419 = vadd.s32 %v413, %v417
    %vm420 = vcmp.ge.s32.totalorder %v402, %v109
    %vm421 = vcmp.ge.s32.totalorder %v403, %v110
    %v422 = vsel %vm420, 1, 0
    %v423 = vsel %vm421, 1, 0
    %v424 = vadd.s32 %v418, %v422
    %v425 = vadd.s32 %v419, %v423
    %vm426 = vcmp.ge.s32.totalorder %v402, %v119
    %vm427 = vcmp.ge.s32.totalorder %v403, %v120
    %v428 = vsel %vm426, 1, 0
    %v429 = vsel %vm427, 1, 0
    %v430 = vadd.s32 %v424, %v428
    %v431 = vadd.s32 %v425, %v429
    %v432 = vcvt.s32.f32 %v430
    %v433 = vcvt.s32.f32 %v431
    %v434 = vpack.c.bf16 %v433, %v432
    %435 = vst [vmem:[#allocation2 + $0x28] sm:$0xff] %v434
    %v436 = vadd.s32 %v124, 49152
    %v437 = vadd.s32 %v125, 49152
    %v438 = vshrl.u32 %v436, 16
    %v439 = vshrl.u32 %v437, 16
    %v440 = vxor.u32 %v436, %v438
    %v441 = vxor.u32 %v437, %v439
    %v442 = vmul.u32 %v440, 2246822507
    %v443 = vmul.u32 %v441, 2246822507
    %v444 = vshrl.u32 %v442, 13
    %v445 = vshrl.u32 %v443, 13
    %v446 = vxor.u32 %v442, %v444
    %v447 = vxor.u32 %v443, %v445
    %v448 = vmul.u32 %v446, 3266489909
    %v449 = vmul.u32 %v447, 3266489909
    %v450 = vshrl.u32 %v448, 16
    %v451 = vshrl.u32 %v449, 16
    %v452 = vxor.u32 %v448, %v450
    %v453 = vxor.u32 %v449, %v451
    %v454 = vshrl.u32 %v452, 8
    %v455 = vshrl.u32 %v453, 8
    %vm456 = vcmp.ge.s32.totalorder %v454, %v81
    %vm457 = vcmp.ge.s32.totalorder %v455, %v82
    %v458 = vsel %vm456, 1, 0
    %v459 = vsel %vm457, 1, 0
    %vm460 = vcmp.ge.s32.totalorder %v454, %v89
    %vm461 = vcmp.ge.s32.totalorder %v455, %v90
    %v462 = vsel %vm460, 1, 0
    %v463 = vsel %vm461, 1, 0
    %v464 = vadd.s32 %v458, %v462
    %v465 = vadd.s32 %v459, %v463
    %vm466 = vcmp.ge.s32.totalorder %v454, %v99
    %vm467 = vcmp.ge.s32.totalorder %v455, %v100
    %v468 = vsel %vm466, 1, 0
    %v469 = vsel %vm467, 1, 0
    %v470 = vadd.s32 %v464, %v468
    %v471 = vadd.s32 %v465, %v469
    %vm472 = vcmp.ge.s32.totalorder %v454, %v109
    %vm473 = vcmp.ge.s32.totalorder %v455, %v110
    %v474 = vsel %vm472, 1, 0
    %v475 = vsel %vm473, 1, 0
    %v476 = vadd.s32 %v470, %v474
    %v477 = vadd.s32 %v471, %v475
    %vm478 = vcmp.ge.s32.totalorder %v454, %v119
    %vm479 = vcmp.ge.s32.totalorder %v455, %v120
    %v480 = vsel %vm478, 1, 0
    %v481 = vsel %vm479, 1, 0
    %v482 = vadd.s32 %v476, %v480
    %v483 = vadd.s32 %v477, %v481
    %v484 = vcvt.s32.f32 %v482
    %v485 = vcvt.s32.f32 %v483
    %v486 = vpack.c.bf16 %v485, %v484
    %487 = vst [vmem:[#allocation2 + $0x30] sm:$0xff] %v486
    %v488 = vadd.s32 %v124, 57344
    %v489 = vadd.s32 %v125, 57344
    %v490 = vshrl.u32 %v488, 16
    %v491 = vshrl.u32 %v489, 16
    %v492 = vxor.u32 %v488, %v490
    %v493 = vxor.u32 %v489, %v491
    %v494 = vmul.u32 %v492, 2246822507
    %v495 = vmul.u32 %v493, 2246822507
    %v496 = vshrl.u32 %v494, 13
    %v497 = vshrl.u32 %v495, 13
    %v498 = vxor.u32 %v494, %v496
    %v499 = vxor.u32 %v495, %v497
    %v500 = vmul.u32 %v498, 3266489909
    %v501 = vmul.u32 %v499, 3266489909
    %v502 = vshrl.u32 %v500, 16
    %v503 = vshrl.u32 %v501, 16
    %v504 = vxor.u32 %v500, %v502
    %v505 = vxor.u32 %v501, %v503
    %v506 = vshrl.u32 %v504, 8
    %v507 = vshrl.u32 %v505, 8
    %vm508 = vcmp.ge.s32.totalorder %v506, %v81
    %vm509 = vcmp.ge.s32.totalorder %v507, %v82
    %v510 = vsel %vm508, 1, 0
    %v511 = vsel %vm509, 1, 0
    %vm512 = vcmp.ge.s32.totalorder %v506, %v89
    %vm513 = vcmp.ge.s32.totalorder %v507, %v90
    %v514 = vsel %vm512, 1, 0
    %v515 = vsel %vm513, 1, 0
    %v516 = vadd.s32 %v510, %v514
    %v517 = vadd.s32 %v511, %v515
    %vm518 = vcmp.ge.s32.totalorder %v506, %v99
    %vm519 = vcmp.ge.s32.totalorder %v507, %v100
    %v520 = vsel %vm518, 1, 0
    %v521 = vsel %vm519, 1, 0
    %v522 = vadd.s32 %v516, %v520
    %v523 = vadd.s32 %v517, %v521
    %vm524 = vcmp.ge.s32.totalorder %v506, %v109
    %vm525 = vcmp.ge.s32.totalorder %v507, %v110
    %v526 = vsel %vm524, 1, 0
    %v527 = vsel %vm525, 1, 0
    %v528 = vadd.s32 %v522, %v526
    %v529 = vadd.s32 %v523, %v527
    %vm530 = vcmp.ge.s32.totalorder %v506, %v119
    %vm531 = vcmp.ge.s32.totalorder %v507, %v120
    %v532 = vsel %vm530, 1, 0
    %v533 = vsel %vm531, 1, 0
    %v534 = vadd.s32 %v528, %v532
    %v535 = vadd.s32 %v529, %v533
    %v536 = vcvt.s32.f32 %v534
    %v537 = vcvt.s32.f32 %v535
    %v538 = vpack.c.bf16 %v537, %v536
    %539 = vst [vmem:[#allocation2 + $0x38] sm:$0xff] %v538
    %v540 = vld [vmem:[%s2 + $0x10] sm:$0xff]
    %v541 = vld [vmem:[%s2 + $0x18] sm:$0xff]
    %v542 = vld [vmem:[%s1] sm:$0x1]
    %v544 = vlaneseq
    %v545 = vshrl.u32 %v544, 7
    %v546 = vsub.s32 0, %v545
    %v547 = vrot.slane %v542, %v546
    %550 = vset.pattern.permute.xlu0 0
    %551 = vperm.xlu0 %550, %v540
    %v552 = vpop.permute.xlu0 %551
    %555 = vset.pattern.permute.xlu0 0
    %556 = vperm.xlu0 %555, %v541
    %v557 = vpop.permute.xlu0 %556
    %v559 = vsub.f32 %v547, %v552
    %v560 = vsub.f32 %v547, %v557
    %v561 = vmul.f32 %v559, %v559
    %v562 = vmul.f32 %v560, %v560
    %v563 = vmul.f32 %v561, -200.0
    %v564 = vmul.f32 %v562, -200.0
    %v565 = vmul.f32 %v563, 1.442695
    %v566 = vpow.pop %v565
    %v567 = vmul.f32 %v564, 1.442695
    %v568 = vpow.pop %v567
    %v569 = vmul.f32 %v566, 0.5
    %v570 = vmul.f32 %v568, 0.5
    %v571 = vsub.f32 0.0, %v569
    %v572 = vsub.f32 0.0, %v570
    %v573 = vmul.f32 %v571, 1.442695
    %v574 = vpow.pop %v573
    %v575 = vmul.f32 %v572, 1.442695
    %v576 = vpow.pop %v575
    %v577 = vmul.f32 %v574, 16777216.0
    %v578 = vmul.f32 %v576, 16777216.0
    %v579 = vcvt.f32.s32.to.zero.pseudo %v577
    %v580 = vcvt.f32.s32.to.zero.pseudo %v578
    %v581 = vmul.f32 %v574, %v569
    %v582 = vmul.f32 %v576, %v570
    %v583 = vadd.f32 %v574, %v581
    %v584 = vadd.f32 %v576, %v582
    %v585 = vmul.f32 %v583, 16777216.0
    %v586 = vmul.f32 %v584, 16777216.0
    %v587 = vcvt.f32.s32.to.zero.pseudo %v585
    %v588 = vcvt.f32.s32.to.zero.pseudo %v586
    %v589 = vmul.f32 %v581, %v569
    %v590 = vmul.f32 %v582, %v570
    %v591 = vmul.f32 %v589, 0.5
    %v592 = vmul.f32 %v590, 0.5
    %v593 = vadd.f32 %v583, %v591
    %v594 = vadd.f32 %v584, %v592
    %v595 = vmul.f32 %v593, 16777216.0
    %v596 = vmul.f32 %v594, 16777216.0
    %v597 = vcvt.f32.s32.to.zero.pseudo %v595
    %v598 = vcvt.f32.s32.to.zero.pseudo %v596
    %v599 = vmul.f32 %v591, %v569
    %v600 = vmul.f32 %v592, %v570
    %v601 = vmul.f32 %v599, 0.33333334
    %v602 = vmul.f32 %v600, 0.33333334
    %v603 = vadd.f32 %v593, %v601
    %v604 = vadd.f32 %v594, %v602
    %v605 = vmul.f32 %v603, 16777216.0
    %v606 = vmul.f32 %v604, 16777216.0
    %v607 = vcvt.f32.s32.to.zero.pseudo %v605
    %v608 = vcvt.f32.s32.to.zero.pseudo %v606
    %v609 = vmul.f32 %v601, %v569
    %v610 = vmul.f32 %v602, %v570
    %v611 = vmul.f32 %v609, 0.25
    %v612 = vmul.f32 %v610, 0.25
    %v613 = vadd.f32 %v603, %v611
    %v614 = vadd.f32 %v604, %v612
    %v615 = vmul.f32 %v613, 16777216.0
    %v616 = vmul.f32 %v614, 16777216.0
    %v617 = vcvt.f32.s32.to.zero.pseudo %v615
    %v618 = vcvt.f32.s32.to.zero.pseudo %v616
    %v619 = vadd.s32 %v121, 2048
    %v620 = vadd.s32 %v122, 2048
    %v621 = vxor.u32 %v619, %v123
    %v622 = vxor.u32 %v620, %v123
    %v623 = vshrl.u32 %v621, 16
    %v624 = vshrl.u32 %v622, 16
    %v625 = vxor.u32 %v621, %v623
    %v626 = vxor.u32 %v622, %v624
    %v627 = vmul.u32 %v625, 2246822507
    %v628 = vmul.u32 %v626, 2246822507
    %v629 = vshrl.u32 %v627, 13
    %v630 = vshrl.u32 %v628, 13
    %v631 = vxor.u32 %v627, %v629
    %v632 = vxor.u32 %v628, %v630
    %v633 = vmul.u32 %v631, 3266489909
    %v634 = vmul.u32 %v632, 3266489909
    %v635 = vshrl.u32 %v633, 16
    %v636 = vshrl.u32 %v634, 16
    %v637 = vxor.u32 %v633, %v635
    %v638 = vxor.u32 %v634, %v636
    %v639 = vshrl.u32 %v637, 8
    %v640 = vshrl.u32 %v638, 8
    %vm641 = vcmp.ge.s32.totalorder %v639, %v579
    %vm642 = vcmp.ge.s32.totalorder %v640, %v580
    %v643 = vsel %vm641, 1, 0
    %v644 = vsel %vm642, 1, 0
    %vm645 = vcmp.ge.s32.totalorder %v639, %v587
    %vm646 = vcmp.ge.s32.totalorder %v640, %v588
    %v647 = vsel %vm645, 1, 0
    %v648 = vsel %vm646, 1, 0
    %v649 = vadd.s32 %v643, %v647
    %v650 = vadd.s32 %v644, %v648
    %vm651 = vcmp.ge.s32.totalorder %v639, %v597
    %vm652 = vcmp.ge.s32.totalorder %v640, %v598
    %v653 = vsel %vm651, 1, 0
    %v654 = vsel %vm652, 1, 0
    %v655 = vadd.s32 %v649, %v653
    %v656 = vadd.s32 %v650, %v654
    %vm657 = vcmp.ge.s32.totalorder %v639, %v607
    %vm658 = vcmp.ge.s32.totalorder %v640, %v608
    %v659 = vsel %vm657, 1, 0
    %v660 = vsel %vm658, 1, 0
    %v661 = vadd.s32 %v655, %v659
    %v662 = vadd.s32 %v656, %v660
    %vm663 = vcmp.ge.s32.totalorder %v639, %v617
    %vm664 = vcmp.ge.s32.totalorder %v640, %v618
    %v665 = vsel %vm663, 1, 0
    %v666 = vsel %vm664, 1, 0
    %v667 = vadd.s32 %v661, %v665
    %v668 = vadd.s32 %v662, %v666
    %v669 = vcvt.s32.f32 %v667
    %v670 = vcvt.s32.f32 %v668
    %v671 = vpack.c.bf16 %v670, %v669
    %672 = vst [vmem:[#allocation2 + $0x40] sm:$0xff] %v671
    %v673 = vadd.s32 %v621, 8192
    %v674 = vadd.s32 %v622, 8192
    %v675 = vshrl.u32 %v673, 16
    %v676 = vshrl.u32 %v674, 16
    %v677 = vxor.u32 %v673, %v675
    %v678 = vxor.u32 %v674, %v676
    %v679 = vmul.u32 %v677, 2246822507
    %v680 = vmul.u32 %v678, 2246822507
    %v681 = vshrl.u32 %v679, 13
    %v682 = vshrl.u32 %v680, 13
    %v683 = vxor.u32 %v679, %v681
    %v684 = vxor.u32 %v680, %v682
    %v685 = vmul.u32 %v683, 3266489909
    %v686 = vmul.u32 %v684, 3266489909
    %v687 = vshrl.u32 %v685, 16
    %v688 = vshrl.u32 %v686, 16
    %v689 = vxor.u32 %v685, %v687
    %v690 = vxor.u32 %v686, %v688
    %v691 = vshrl.u32 %v689, 8
    %v692 = vshrl.u32 %v690, 8
    %vm693 = vcmp.ge.s32.totalorder %v691, %v579
    %vm694 = vcmp.ge.s32.totalorder %v692, %v580
    %v695 = vsel %vm693, 1, 0
    %v696 = vsel %vm694, 1, 0
    %vm697 = vcmp.ge.s32.totalorder %v691, %v587
    %vm698 = vcmp.ge.s32.totalorder %v692, %v588
    %v699 = vsel %vm697, 1, 0
    %v700 = vsel %vm698, 1, 0
    %v701 = vadd.s32 %v695, %v699
    %v702 = vadd.s32 %v696, %v700
    %vm703 = vcmp.ge.s32.totalorder %v691, %v597
    %vm704 = vcmp.ge.s32.totalorder %v692, %v598
    %v705 = vsel %vm703, 1, 0
    %v706 = vsel %vm704, 1, 0
    %v707 = vadd.s32 %v701, %v705
    %v708 = vadd.s32 %v702, %v706
    %vm709 = vcmp.ge.s32.totalorder %v691, %v607
    %vm710 = vcmp.ge.s32.totalorder %v692, %v608
    %v711 = vsel %vm709, 1, 0
    %v712 = vsel %vm710, 1, 0
    %v713 = vadd.s32 %v707, %v711
    %v714 = vadd.s32 %v708, %v712
    %vm715 = vcmp.ge.s32.totalorder %v691, %v617
    %vm716 = vcmp.ge.s32.totalorder %v692, %v618
    %v717 = vsel %vm715, 1, 0
    %v718 = vsel %vm716, 1, 0
    %v719 = vadd.s32 %v713, %v717
    %v720 = vadd.s32 %v714, %v718
    %v721 = vcvt.s32.f32 %v719
    %v722 = vcvt.s32.f32 %v720
    %v723 = vpack.c.bf16 %v722, %v721
    %724 = vst [vmem:[#allocation2 + $0x48] sm:$0xff] %v723
    %v725 = vadd.s32 %v621, 16384
    %v726 = vadd.s32 %v622, 16384
    %v727 = vshrl.u32 %v725, 16
    %v728 = vshrl.u32 %v726, 16
    %v729 = vxor.u32 %v725, %v727
    %v730 = vxor.u32 %v726, %v728
    %v731 = vmul.u32 %v729, 2246822507
    %v732 = vmul.u32 %v730, 2246822507
    %v733 = vshrl.u32 %v731, 13
    %v734 = vshrl.u32 %v732, 13
    %v735 = vxor.u32 %v731, %v733
    %v736 = vxor.u32 %v732, %v734
    %v737 = vmul.u32 %v735, 3266489909
    %v738 = vmul.u32 %v736, 3266489909
    %v739 = vshrl.u32 %v737, 16
    %v740 = vshrl.u32 %v738, 16
    %v741 = vxor.u32 %v737, %v739
    %v742 = vxor.u32 %v738, %v740
    %v743 = vshrl.u32 %v741, 8
    %v744 = vshrl.u32 %v742, 8
    %vm745 = vcmp.ge.s32.totalorder %v743, %v579
    %vm746 = vcmp.ge.s32.totalorder %v744, %v580
    %v747 = vsel %vm745, 1, 0
    %v748 = vsel %vm746, 1, 0
    %vm749 = vcmp.ge.s32.totalorder %v743, %v587
    %vm750 = vcmp.ge.s32.totalorder %v744, %v588
    %v751 = vsel %vm749, 1, 0
    %v752 = vsel %vm750, 1, 0
    %v753 = vadd.s32 %v747, %v751
    %v754 = vadd.s32 %v748, %v752
    %vm755 = vcmp.ge.s32.totalorder %v743, %v597
    %vm756 = vcmp.ge.s32.totalorder %v744, %v598
    %v757 = vsel %vm755, 1, 0
    %v758 = vsel %vm756, 1, 0
    %v759 = vadd.s32 %v753, %v757
    %v760 = vadd.s32 %v754, %v758
    %vm761 = vcmp.ge.s32.totalorder %v743, %v607
    %vm762 = vcmp.ge.s32.totalorder %v744, %v608
    %v763 = vsel %vm761, 1, 0
    %v764 = vsel %vm762, 1, 0
    %v765 = vadd.s32 %v759, %v763
    %v766 = vadd.s32 %v760, %v764
    %vm767 = vcmp.ge.s32.totalorder %v743, %v617
    %vm768 = vcmp.ge.s32.totalorder %v744, %v618
    %v769 = vsel %vm767, 1, 0
    %v770 = vsel %vm768, 1, 0
    %v771 = vadd.s32 %v765, %v769
    %v772 = vadd.s32 %v766, %v770
    %v773 = vcvt.s32.f32 %v771
    %v774 = vcvt.s32.f32 %v772
    %v775 = vpack.c.bf16 %v774, %v773
    %776 = vst [vmem:[#allocation2 + $0x50] sm:$0xff] %v775
    %v777 = vadd.s32 %v621, 24576
    %v778 = vadd.s32 %v622, 24576
    %v779 = vshrl.u32 %v777, 16
    %v780 = vshrl.u32 %v778, 16
    %v781 = vxor.u32 %v777, %v779
    %v782 = vxor.u32 %v778, %v780
    %v783 = vmul.u32 %v781, 2246822507
    %v784 = vmul.u32 %v782, 2246822507
    %v785 = vshrl.u32 %v783, 13
    %v786 = vshrl.u32 %v784, 13
    %v787 = vxor.u32 %v783, %v785
    %v788 = vxor.u32 %v784, %v786
    %v789 = vmul.u32 %v787, 3266489909
    %v790 = vmul.u32 %v788, 3266489909
    %v791 = vshrl.u32 %v789, 16
    %v792 = vshrl.u32 %v790, 16
    %v793 = vxor.u32 %v789, %v791
    %v794 = vxor.u32 %v790, %v792
    %v795 = vshrl.u32 %v793, 8
    %v796 = vshrl.u32 %v794, 8
    %vm797 = vcmp.ge.s32.totalorder %v795, %v579
    %vm798 = vcmp.ge.s32.totalorder %v796, %v580
    %v799 = vsel %vm797, 1, 0
    %v800 = vsel %vm798, 1, 0
    %vm801 = vcmp.ge.s32.totalorder %v795, %v587
    %vm802 = vcmp.ge.s32.totalorder %v796, %v588
    %v803 = vsel %vm801, 1, 0
    %v804 = vsel %vm802, 1, 0
    %v805 = vadd.s32 %v799, %v803
    %v806 = vadd.s32 %v800, %v804
    %vm807 = vcmp.ge.s32.totalorder %v795, %v597
    %vm808 = vcmp.ge.s32.totalorder %v796, %v598
    %v809 = vsel %vm807, 1, 0
    %v810 = vsel %vm808, 1, 0
    %v811 = vadd.s32 %v805, %v809
    %v812 = vadd.s32 %v806, %v810
    %vm813 = vcmp.ge.s32.totalorder %v795, %v607
    %vm814 = vcmp.ge.s32.totalorder %v796, %v608
    %v815 = vsel %vm813, 1, 0
    %v816 = vsel %vm814, 1, 0
    %v817 = vadd.s32 %v811, %v815
    %v818 = vadd.s32 %v812, %v816
    %vm819 = vcmp.ge.s32.totalorder %v795, %v617
    %vm820 = vcmp.ge.s32.totalorder %v796, %v618
    %v821 = vsel %vm819, 1, 0
    %v822 = vsel %vm820, 1, 0
    %v823 = vadd.s32 %v817, %v821
    %v824 = vadd.s32 %v818, %v822
    %v825 = vcvt.s32.f32 %v823
    %v826 = vcvt.s32.f32 %v824
    %v827 = vpack.c.bf16 %v826, %v825
    %828 = vst [vmem:[#allocation2 + $0x58] sm:$0xff] %v827
    %v829 = vadd.s32 %v621, 32768
    %v830 = vadd.s32 %v622, 32768
    %v831 = vshrl.u32 %v829, 16
    %v832 = vshrl.u32 %v830, 16
    %v833 = vxor.u32 %v829, %v831
    %v834 = vxor.u32 %v830, %v832
    %v835 = vmul.u32 %v833, 2246822507
    %v836 = vmul.u32 %v834, 2246822507
    %v837 = vshrl.u32 %v835, 13
    %v838 = vshrl.u32 %v836, 13
    %v839 = vxor.u32 %v835, %v837
    %v840 = vxor.u32 %v836, %v838
    %v841 = vmul.u32 %v839, 3266489909
    %v842 = vmul.u32 %v840, 3266489909
    %v843 = vshrl.u32 %v841, 16
    %v844 = vshrl.u32 %v842, 16
    %v845 = vxor.u32 %v841, %v843
    %v846 = vxor.u32 %v842, %v844
    %v847 = vshrl.u32 %v845, 8
    %v848 = vshrl.u32 %v846, 8
    %vm849 = vcmp.ge.s32.totalorder %v847, %v579
    %vm850 = vcmp.ge.s32.totalorder %v848, %v580
    %v851 = vsel %vm849, 1, 0
    %v852 = vsel %vm850, 1, 0
    %vm853 = vcmp.ge.s32.totalorder %v847, %v587
    %vm854 = vcmp.ge.s32.totalorder %v848, %v588
    %v855 = vsel %vm853, 1, 0
    %v856 = vsel %vm854, 1, 0
    %v857 = vadd.s32 %v851, %v855
    %v858 = vadd.s32 %v852, %v856
    %vm859 = vcmp.ge.s32.totalorder %v847, %v597
    %vm860 = vcmp.ge.s32.totalorder %v848, %v598
    %v861 = vsel %vm859, 1, 0
    %v862 = vsel %vm860, 1, 0
    %v863 = vadd.s32 %v857, %v861
    %v864 = vadd.s32 %v858, %v862
    %vm865 = vcmp.ge.s32.totalorder %v847, %v607
    %vm866 = vcmp.ge.s32.totalorder %v848, %v608
    %v867 = vsel %vm865, 1, 0
    %v868 = vsel %vm866, 1, 0
    %v869 = vadd.s32 %v863, %v867
    %v870 = vadd.s32 %v864, %v868
    %vm871 = vcmp.ge.s32.totalorder %v847, %v617
    %vm872 = vcmp.ge.s32.totalorder %v848, %v618
    %v873 = vsel %vm871, 1, 0
    %v874 = vsel %vm872, 1, 0
    %v875 = vadd.s32 %v869, %v873
    %v876 = vadd.s32 %v870, %v874
    %v877 = vcvt.s32.f32 %v875
    %v878 = vcvt.s32.f32 %v876
    %v879 = vpack.c.bf16 %v878, %v877
    %880 = vst [vmem:[#allocation2 + $0x60] sm:$0xff] %v879
    %v881 = vadd.s32 %v621, 40960
    %v882 = vadd.s32 %v622, 40960
    %v883 = vshrl.u32 %v881, 16
    %v884 = vshrl.u32 %v882, 16
    %v885 = vxor.u32 %v881, %v883
    %v886 = vxor.u32 %v882, %v884
    %v887 = vmul.u32 %v885, 2246822507
    %v888 = vmul.u32 %v886, 2246822507
    %v889 = vshrl.u32 %v887, 13
    %v890 = vshrl.u32 %v888, 13
    %v891 = vxor.u32 %v887, %v889
    %v892 = vxor.u32 %v888, %v890
    %v893 = vmul.u32 %v891, 3266489909
    %v894 = vmul.u32 %v892, 3266489909
    %v895 = vshrl.u32 %v893, 16
    %v896 = vshrl.u32 %v894, 16
    %v897 = vxor.u32 %v893, %v895
    %v898 = vxor.u32 %v894, %v896
    %v899 = vshrl.u32 %v897, 8
    %v900 = vshrl.u32 %v898, 8
    %vm901 = vcmp.ge.s32.totalorder %v899, %v579
    %vm902 = vcmp.ge.s32.totalorder %v900, %v580
    %v903 = vsel %vm901, 1, 0
    %v904 = vsel %vm902, 1, 0
    %vm905 = vcmp.ge.s32.totalorder %v899, %v587
    %vm906 = vcmp.ge.s32.totalorder %v900, %v588
    %v907 = vsel %vm905, 1, 0
    %v908 = vsel %vm906, 1, 0
    %v909 = vadd.s32 %v903, %v907
    %v910 = vadd.s32 %v904, %v908
    %vm911 = vcmp.ge.s32.totalorder %v899, %v597
    %vm912 = vcmp.ge.s32.totalorder %v900, %v598
    %v913 = vsel %vm911, 1, 0
    %v914 = vsel %vm912, 1, 0
    %v915 = vadd.s32 %v909, %v913
    %v916 = vadd.s32 %v910, %v914
    %vm917 = vcmp.ge.s32.totalorder %v899, %v607
    %vm918 = vcmp.ge.s32.totalorder %v900, %v608
    %v919 = vsel %vm917, 1, 0
    %v920 = vsel %vm918, 1, 0
    %v921 = vadd.s32 %v915, %v919
    %v922 = vadd.s32 %v916, %v920
    %vm923 = vcmp.ge.s32.totalorder %v899, %v617
    %vm924 = vcmp.ge.s32.totalorder %v900, %v618
    %v925 = vsel %vm923, 1, 0
    %v926 = vsel %vm924, 1, 0
    %v927 = vadd.s32 %v921, %v925
    %v928 = vadd.s32 %v922, %v926
    %v929 = vcvt.s32.f32 %v927
    %v930 = vcvt.s32.f32 %v928
    %v931 = vpack.c.bf16 %v930, %v929
    %932 = vst [vmem:[#allocation2 + $0x68] sm:$0xff] %v931
    %v933 = vadd.s32 %v621, 49152
    %v934 = vadd.s32 %v622, 49152
    %v935 = vshrl.u32 %v933, 16
    %v936 = vshrl.u32 %v934, 16
    %v937 = vxor.u32 %v933, %v935
    %v938 = vxor.u32 %v934, %v936
    %v939 = vmul.u32 %v937, 2246822507
    %v940 = vmul.u32 %v938, 2246822507
    %v941 = vshrl.u32 %v939, 13
    %v942 = vshrl.u32 %v940, 13
    %v943 = vxor.u32 %v939, %v941
    %v944 = vxor.u32 %v940, %v942
    %v945 = vmul.u32 %v943, 3266489909
    %v946 = vmul.u32 %v944, 3266489909
    %v947 = vshrl.u32 %v945, 16
    %v948 = vshrl.u32 %v946, 16
    %v949 = vxor.u32 %v945, %v947
    %v950 = vxor.u32 %v946, %v948
    %v951 = vshrl.u32 %v949, 8
    %v952 = vshrl.u32 %v950, 8
    %vm953 = vcmp.ge.s32.totalorder %v951, %v579
    %vm954 = vcmp.ge.s32.totalorder %v952, %v580
    %v955 = vsel %vm953, 1, 0
    %v956 = vsel %vm954, 1, 0
    %vm957 = vcmp.ge.s32.totalorder %v951, %v587
    %vm958 = vcmp.ge.s32.totalorder %v952, %v588
    %v959 = vsel %vm957, 1, 0
    %v960 = vsel %vm958, 1, 0
    %v961 = vadd.s32 %v955, %v959
    %v962 = vadd.s32 %v956, %v960
    %vm963 = vcmp.ge.s32.totalorder %v951, %v597
    %vm964 = vcmp.ge.s32.totalorder %v952, %v598
    %v965 = vsel %vm963, 1, 0
    %v966 = vsel %vm964, 1, 0
    %v967 = vadd.s32 %v961, %v965
    %v968 = vadd.s32 %v962, %v966
    %vm969 = vcmp.ge.s32.totalorder %v951, %v607
    %vm970 = vcmp.ge.s32.totalorder %v952, %v608
    %v971 = vsel %vm969, 1, 0
    %v972 = vsel %vm970, 1, 0
    %v973 = vadd.s32 %v967, %v971
    %v974 = vadd.s32 %v968, %v972
    %vm975 = vcmp.ge.s32.totalorder %v951, %v617
    %vm976 = vcmp.ge.s32.totalorder %v952, %v618
    %v977 = vsel %vm975, 1, 0
    %v978 = vsel %vm976, 1, 0
    %v979 = vadd.s32 %v973, %v977
    %v980 = vadd.s32 %v974, %v978
    %v981 = vcvt.s32.f32 %v979
    %v982 = vcvt.s32.f32 %v980
    %v983 = vpack.c.bf16 %v982, %v981
    %984 = vst [vmem:[#allocation2 + $0x70] sm:$0xff] %v983
    %v985 = vadd.s32 %v621, 57344
    %v986 = vadd.s32 %v622, 57344
    %v987 = vshrl.u32 %v985, 16
    %v988 = vshrl.u32 %v986, 16
    %v989 = vxor.u32 %v985, %v987
    %v990 = vxor.u32 %v986, %v988
    %v991 = vmul.u32 %v989, 2246822507
    %v992 = vmul.u32 %v990, 2246822507
    %v993 = vshrl.u32 %v991, 13
    %v994 = vshrl.u32 %v992, 13
    %v995 = vxor.u32 %v991, %v993
    %v996 = vxor.u32 %v992, %v994
    %v997 = vmul.u32 %v995, 3266489909
    %v998 = vmul.u32 %v996, 3266489909
    %v999 = vshrl.u32 %v997, 16
    %v1000 = vshrl.u32 %v998, 16
    %v1001 = vxor.u32 %v997, %v999
    %v1002 = vxor.u32 %v998, %v1000
    %v1003 = vshrl.u32 %v1001, 8
    %v1004 = vshrl.u32 %v1002, 8
    %vm1005 = vcmp.ge.s32.totalorder %v1003, %v579
    %vm1006 = vcmp.ge.s32.totalorder %v1004, %v580
    %v1007 = vsel %vm1005, 1, 0
    %v1008 = vsel %vm1006, 1, 0
    %vm1009 = vcmp.ge.s32.totalorder %v1003, %v587
    %vm1010 = vcmp.ge.s32.totalorder %v1004, %v588
    %v1011 = vsel %vm1009, 1, 0
    %v1012 = vsel %vm1010, 1, 0
    %v1013 = vadd.s32 %v1007, %v1011
    %v1014 = vadd.s32 %v1008, %v1012
    %vm1015 = vcmp.ge.s32.totalorder %v1003, %v597
    %vm1016 = vcmp.ge.s32.totalorder %v1004, %v598
    %v1017 = vsel %vm1015, 1, 0
    %v1018 = vsel %vm1016, 1, 0
    %v1019 = vadd.s32 %v1013, %v1017
    %v1020 = vadd.s32 %v1014, %v1018
    %vm1021 = vcmp.ge.s32.totalorder %v1003, %v607
    %vm1022 = vcmp.ge.s32.totalorder %v1004, %v608
    %v1023 = vsel %vm1021, 1, 0
    %v1024 = vsel %vm1022, 1, 0
    %v1025 = vadd.s32 %v1019, %v1023
    %v1026 = vadd.s32 %v1020, %v1024
    %vm1027 = vcmp.ge.s32.totalorder %v1003, %v617
    %vm1028 = vcmp.ge.s32.totalorder %v1004, %v618
    %v1029 = vsel %vm1027, 1, 0
    %v1030 = vsel %vm1028, 1, 0
    %v1031 = vadd.s32 %v1025, %v1029
    %v1032 = vadd.s32 %v1026, %v1030
    %v1033 = vcvt.s32.f32 %v1031
    %v1034 = vcvt.s32.f32 %v1032
    %v1035 = vpack.c.bf16 %v1034, %v1033
    %1036 = vst [vmem:[#allocation2 + $0x78] sm:$0xff] %v1035
    %v1037 = vld [vmem:[%s2 + $0x20] sm:$0xff]
    %v1038 = vld [vmem:[%s2 + $0x28] sm:$0xff]
    %v1039 = vld [vmem:[%s1] sm:$0x1]
    %v1041 = vlaneseq
    %v1042 = vshrl.u32 %v1041, 7
    %v1043 = vsub.s32 0, %v1042
    %v1044 = vrot.slane %v1039, %v1043
    %1047 = vset.pattern.permute.xlu0 0
    %1048 = vperm.xlu0 %1047, %v1037
    %v1049 = vpop.permute.xlu0 %1048
    %1052 = vset.pattern.permute.xlu0 0
    %1053 = vperm.xlu0 %1052, %v1038
    %v1054 = vpop.permute.xlu0 %1053
    %v1056 = vsub.f32 %v1044, %v1049
    %v1057 = vsub.f32 %v1044, %v1054
    %v1058 = vmul.f32 %v1056, %v1056
    %v1059 = vmul.f32 %v1057, %v1057
    %v1060 = vmul.f32 %v1058, -200.0
    %v1061 = vmul.f32 %v1059, -200.0
    %v1062 = vmul.f32 %v1060, 1.442695
    %v1063 = vpow.pop %v1062
    %v1064 = vmul.f32 %v1061, 1.442695
    %v1065 = vpow.pop %v1064
    %v1066 = vmul.f32 %v1063, 0.5
    %v1067 = vmul.f32 %v1065, 0.5
    %v1068 = vsub.f32 0.0, %v1066
    %v1069 = vsub.f32 0.0, %v1067
    %v1070 = vmul.f32 %v1068, 1.442695
    %v1071 = vpow.pop %v1070
    %v1072 = vmul.f32 %v1069, 1.442695
    %v1073 = vpow.pop %v1072
    %v1074 = vmul.f32 %v1071, 16777216.0
    %v1075 = vmul.f32 %v1073, 16777216.0
    %v1076 = vcvt.f32.s32.to.zero.pseudo %v1074
    %v1077 = vcvt.f32.s32.to.zero.pseudo %v1075
    %v1078 = vmul.f32 %v1071, %v1066
    %v1079 = vmul.f32 %v1073, %v1067
    %v1080 = vadd.f32 %v1071, %v1078
    %v1081 = vadd.f32 %v1073, %v1079
    %v1082 = vmul.f32 %v1080, 16777216.0
    %v1083 = vmul.f32 %v1081, 16777216.0
    %v1084 = vcvt.f32.s32.to.zero.pseudo %v1082
    %v1085 = vcvt.f32.s32.to.zero.pseudo %v1083
    %v1086 = vmul.f32 %v1078, %v1066
    %v1087 = vmul.f32 %v1079, %v1067
    %v1088 = vmul.f32 %v1086, 0.5
    %v1089 = vmul.f32 %v1087, 0.5
    %v1090 = vadd.f32 %v1080, %v1088
    %v1091 = vadd.f32 %v1081, %v1089
    %v1092 = vmul.f32 %v1090, 16777216.0
    %v1093 = vmul.f32 %v1091, 16777216.0
    %v1094 = vcvt.f32.s32.to.zero.pseudo %v1092
    %v1095 = vcvt.f32.s32.to.zero.pseudo %v1093
    %v1096 = vmul.f32 %v1088, %v1066
    %v1097 = vmul.f32 %v1089, %v1067
    %v1098 = vmul.f32 %v1096, 0.33333334
    %v1099 = vmul.f32 %v1097, 0.33333334
    %v1100 = vadd.f32 %v1090, %v1098
    %v1101 = vadd.f32 %v1091, %v1099
    %v1102 = vmul.f32 %v1100, 16777216.0
    %v1103 = vmul.f32 %v1101, 16777216.0
    %v1104 = vcvt.f32.s32.to.zero.pseudo %v1102
    %v1105 = vcvt.f32.s32.to.zero.pseudo %v1103
    %v1106 = vmul.f32 %v1098, %v1066
    %v1107 = vmul.f32 %v1099, %v1067
    %v1108 = vmul.f32 %v1106, 0.25
    %v1109 = vmul.f32 %v1107, 0.25
    %v1110 = vadd.f32 %v1100, %v1108
    %v1111 = vadd.f32 %v1101, %v1109
    %v1112 = vmul.f32 %v1110, 16777216.0
    %v1113 = vmul.f32 %v1111, 16777216.0
    %v1114 = vcvt.f32.s32.to.zero.pseudo %v1112
    %v1115 = vcvt.f32.s32.to.zero.pseudo %v1113
    %v1116 = vadd.s32 %v121, 4096
    %v1117 = vadd.s32 %v122, 4096
    %v1118 = vxor.u32 %v1116, %v123
    %v1119 = vxor.u32 %v1117, %v123
    %v1120 = vshrl.u32 %v1118, 16
    %v1121 = vshrl.u32 %v1119, 16
    %v1122 = vxor.u32 %v1118, %v1120
    %v1123 = vxor.u32 %v1119, %v1121
    %v1124 = vmul.u32 %v1122, 2246822507
    %v1125 = vmul.u32 %v1123, 2246822507
    %v1126 = vshrl.u32 %v1124, 13
    %v1127 = vshrl.u32 %v1125, 13
    %v1128 = vxor.u32 %v1124, %v1126
    %v1129 = vxor.u32 %v1125, %v1127
    %v1130 = vmul.u32 %v1128, 3266489909
    %v1131 = vmul.u32 %v1129, 3266489909
    %v1132 = vshrl.u32 %v1130, 16
    %v1133 = vshrl.u32 %v1131, 16
    %v1134 = vxor.u32 %v1130, %v1132
    %v1135 = vxor.u32 %v1131, %v1133
    %v1136 = vshrl.u32 %v1134, 8
    %v1137 = vshrl.u32 %v1135, 8
    %vm1138 = vcmp.ge.s32.totalorder %v1136, %v1076
    %vm1139 = vcmp.ge.s32.totalorder %v1137, %v1077
    %v1140 = vsel %vm1138, 1, 0
    %v1141 = vsel %vm1139, 1, 0
    %vm1142 = vcmp.ge.s32.totalorder %v1136, %v1084
    %vm1143 = vcmp.ge.s32.totalorder %v1137, %v1085
    %v1144 = vsel %vm1142, 1, 0
    %v1145 = vsel %vm1143, 1, 0
    %v1146 = vadd.s32 %v1140, %v1144
    %v1147 = vadd.s32 %v1141, %v1145
    %vm1148 = vcmp.ge.s32.totalorder %v1136, %v1094
    %vm1149 = vcmp.ge.s32.totalorder %v1137, %v1095
    %v1150 = vsel %vm1148, 1, 0
    %v1151 = vsel %vm1149, 1, 0
    %v1152 = vadd.s32 %v1146, %v1150
    %v1153 = vadd.s32 %v1147, %v1151
    %vm1154 = vcmp.ge.s32.totalorder %v1136, %v1104
    %vm1155 = vcmp.ge.s32.totalorder %v1137, %v1105
    %v1156 = vsel %vm1154, 1, 0
    %v1157 = vsel %vm1155, 1, 0
    %v1158 = vadd.s32 %v1152, %v1156
    %v1159 = vadd.s32 %v1153, %v1157
    %vm1160 = vcmp.ge.s32.totalorder %v1136, %v1114
    %vm1161 = vcmp.ge.s32.totalorder %v1137, %v1115
    %v1162 = vsel %vm1160, 1, 0
    %v1163 = vsel %vm1161, 1, 0
    %v1164 = vadd.s32 %v1158, %v1162
    %v1165 = vadd.s32 %v1159, %v1163
    %v1166 = vcvt.s32.f32 %v1164
    %v1167 = vcvt.s32.f32 %v1165
    %v1168 = vpack.c.bf16 %v1167, %v1166
    %1169 = vst [vmem:[#allocation2 + $0x80] sm:$0xff] %v1168
    %v1170 = vadd.s32 %v1118, 8192
    %v1171 = vadd.s32 %v1119, 8192
    %v1172 = vshrl.u32 %v1170, 16
    %v1173 = vshrl.u32 %v1171, 16
    %v1174 = vxor.u32 %v1170, %v1172
    %v1175 = vxor.u32 %v1171, %v1173
    %v1176 = vmul.u32 %v1174, 2246822507
    %v1177 = vmul.u32 %v1175, 2246822507
    %v1178 = vshrl.u32 %v1176, 13
    %v1179 = vshrl.u32 %v1177, 13
    %v1180 = vxor.u32 %v1176, %v1178
    %v1181 = vxor.u32 %v1177, %v1179
    %v1182 = vmul.u32 %v1180, 3266489909
    %v1183 = vmul.u32 %v1181, 3266489909
    %v1184 = vshrl.u32 %v1182, 16
    %v1185 = vshrl.u32 %v1183, 16
    %v1186 = vxor.u32 %v1182, %v1184
    %v1187 = vxor.u32 %v1183, %v1185
    %v1188 = vshrl.u32 %v1186, 8
    %v1189 = vshrl.u32 %v1187, 8
    %vm1190 = vcmp.ge.s32.totalorder %v1188, %v1076
    %vm1191 = vcmp.ge.s32.totalorder %v1189, %v1077
    %v1192 = vsel %vm1190, 1, 0
    %v1193 = vsel %vm1191, 1, 0
    %vm1194 = vcmp.ge.s32.totalorder %v1188, %v1084
    %vm1195 = vcmp.ge.s32.totalorder %v1189, %v1085
    %v1196 = vsel %vm1194, 1, 0
    %v1197 = vsel %vm1195, 1, 0
    %v1198 = vadd.s32 %v1192, %v1196
    %v1199 = vadd.s32 %v1193, %v1197
    %vm1200 = vcmp.ge.s32.totalorder %v1188, %v1094
    %vm1201 = vcmp.ge.s32.totalorder %v1189, %v1095
    %v1202 = vsel %vm1200, 1, 0
    %v1203 = vsel %vm1201, 1, 0
    %v1204 = vadd.s32 %v1198, %v1202
    %v1205 = vadd.s32 %v1199, %v1203
    %vm1206 = vcmp.ge.s32.totalorder %v1188, %v1104
    %vm1207 = vcmp.ge.s32.totalorder %v1189, %v1105
    %v1208 = vsel %vm1206, 1, 0
    %v1209 = vsel %vm1207, 1, 0
    %v1210 = vadd.s32 %v1204, %v1208
    %v1211 = vadd.s32 %v1205, %v1209
    %vm1212 = vcmp.ge.s32.totalorder %v1188, %v1114
    %vm1213 = vcmp.ge.s32.totalorder %v1189, %v1115
    %v1214 = vsel %vm1212, 1, 0
    %v1215 = vsel %vm1213, 1, 0
    %v1216 = vadd.s32 %v1210, %v1214
    %v1217 = vadd.s32 %v1211, %v1215
    %v1218 = vcvt.s32.f32 %v1216
    %v1219 = vcvt.s32.f32 %v1217
    %v1220 = vpack.c.bf16 %v1219, %v1218
    %1221 = vst [vmem:[#allocation2 + $0x88] sm:$0xff] %v1220
    %v1222 = vadd.s32 %v1118, 16384
    %v1223 = vadd.s32 %v1119, 16384
    %v1224 = vshrl.u32 %v1222, 16
    %v1225 = vshrl.u32 %v1223, 16
    %v1226 = vxor.u32 %v1222, %v1224
    %v1227 = vxor.u32 %v1223, %v1225
    %v1228 = vmul.u32 %v1226, 2246822507
    %v1229 = vmul.u32 %v1227, 2246822507
    %v1230 = vshrl.u32 %v1228, 13
    %v1231 = vshrl.u32 %v1229, 13
    %v1232 = vxor.u32 %v1228, %v1230
    %v1233 = vxor.u32 %v1229, %v1231
    %v1234 = vmul.u32 %v1232, 3266489909
    %v1235 = vmul.u32 %v1233, 3266489909
    %v1236 = vshrl.u32 %v1234, 16
    %v1237 = vshrl.u32 %v1235, 16
    %v1238 = vxor.u32 %v1234, %v1236
    %v1239 = vxor.u32 %v1235, %v1237
    %v1240 = vshrl.u32 %v1238, 8
    %v1241 = vshrl.u32 %v1239, 8
    %vm1242 = vcmp.ge.s32.totalorder %v1240, %v1076
    %vm1243 = vcmp.ge.s32.totalorder %v1241, %v1077
    %v1244 = vsel %vm1242, 1, 0
    %v1245 = vsel %vm1243, 1, 0
    %vm1246 = vcmp.ge.s32.totalorder %v1240, %v1084
    %vm1247 = vcmp.ge.s32.totalorder %v1241, %v1085
    %v1248 = vsel %vm1246, 1, 0
    %v1249 = vsel %vm1247, 1, 0
    %v1250 = vadd.s32 %v1244, %v1248
    %v1251 = vadd.s32 %v1245, %v1249
    %vm1252 = vcmp.ge.s32.totalorder %v1240, %v1094
    %vm1253 = vcmp.ge.s32.totalorder %v1241, %v1095
    %v1254 = vsel %vm1252, 1, 0
    %v1255 = vsel %vm1253, 1, 0
    %v1256 = vadd.s32 %v1250, %v1254
    %v1257 = vadd.s32 %v1251, %v1255
    %vm1258 = vcmp.ge.s32.totalorder %v1240, %v1104
    %vm1259 = vcmp.ge.s32.totalorder %v1241, %v1105
    %v1260 = vsel %vm1258, 1, 0
    %v1261 = vsel %vm1259, 1, 0
    %v1262 = vadd.s32 %v1256, %v1260
    %v1263 = vadd.s32 %v1257, %v1261
    %vm1264 = vcmp.ge.s32.totalorder %v1240, %v1114
    %vm1265 = vcmp.ge.s32.totalorder %v1241, %v1115
    %v1266 = vsel %vm1264, 1, 0
    %v1267 = vsel %vm1265, 1, 0
    %v1268 = vadd.s32 %v1262, %v1266
    %v1269 = vadd.s32 %v1263, %v1267
    %v1270 = vcvt.s32.f32 %v1268
    %v1271 = vcvt.s32.f32 %v1269
    %v1272 = vpack.c.bf16 %v1271, %v1270
    %1273 = vst [vmem:[#allocation2 + $0x90] sm:$0xff] %v1272
    %v1274 = vadd.s32 %v1118, 24576
    %v1275 = vadd.s32 %v1119, 24576
    %v1276 = vshrl.u32 %v1274, 16
    %v1277 = vshrl.u32 %v1275, 16
    %v1278 = vxor.u32 %v1274, %v1276
    %v1279 = vxor.u32 %v1275, %v1277
    %v1280 = vmul.u32 %v1278, 2246822507
    %v1281 = vmul.u32 %v1279, 2246822507
    %v1282 = vshrl.u32 %v1280, 13
    %v1283 = vshrl.u32 %v1281, 13
    %v1284 = vxor.u32 %v1280, %v1282
    %v1285 = vxor.u32 %v1281, %v1283
    %v1286 = vmul.u32 %v1284, 3266489909
    %v1287 = vmul.u32 %v1285, 3266489909
    %v1288 = vshrl.u32 %v1286, 16
    %v1289 = vshrl.u32 %v1287, 16
    %v1290 = vxor.u32 %v1286, %v1288
    %v1291 = vxor.u32 %v1287, %v1289
    %v1292 = vshrl.u32 %v1290, 8
    %v1293 = vshrl.u32 %v1291, 8
    %vm1294 = vcmp.ge.s32.totalorder %v1292, %v1076
    %vm1295 = vcmp.ge.s32.totalorder %v1293, %v1077
    %v1296 = vsel %vm1294, 1, 0
    %v1297 = vsel %vm1295, 1, 0
    %vm1298 = vcmp.ge.s32.totalorder %v1292, %v1084
    %vm1299 = vcmp.ge.s32.totalorder %v1293, %v1085
    %v1300 = vsel %vm1298, 1, 0
    %v1301 = vsel %vm1299, 1, 0
    %v1302 = vadd.s32 %v1296, %v1300
    %v1303 = vadd.s32 %v1297, %v1301
    %vm1304 = vcmp.ge.s32.totalorder %v1292, %v1094
    %vm1305 = vcmp.ge.s32.totalorder %v1293, %v1095
    %v1306 = vsel %vm1304, 1, 0
    %v1307 = vsel %vm1305, 1, 0
    %v1308 = vadd.s32 %v1302, %v1306
    %v1309 = vadd.s32 %v1303, %v1307
    %vm1310 = vcmp.ge.s32.totalorder %v1292, %v1104
    %vm1311 = vcmp.ge.s32.totalorder %v1293, %v1105
    %v1312 = vsel %vm1310, 1, 0
    %v1313 = vsel %vm1311, 1, 0
    %v1314 = vadd.s32 %v1308, %v1312
    %v1315 = vadd.s32 %v1309, %v1313
    %vm1316 = vcmp.ge.s32.totalorder %v1292, %v1114
    %vm1317 = vcmp.ge.s32.totalorder %v1293, %v1115
    %v1318 = vsel %vm1316, 1, 0
    %v1319 = vsel %vm1317, 1, 0
    %v1320 = vadd.s32 %v1314, %v1318
    %v1321 = vadd.s32 %v1315, %v1319
    %v1322 = vcvt.s32.f32 %v1320
    %v1323 = vcvt.s32.f32 %v1321
    %v1324 = vpack.c.bf16 %v1323, %v1322
    %1325 = vst [vmem:[#allocation2 + $0x98] sm:$0xff] %v1324
    %v1326 = vadd.s32 %v1118, 32768
    %v1327 = vadd.s32 %v1119, 32768
    %v1328 = vshrl.u32 %v1326, 16
    %v1329 = vshrl.u32 %v1327, 16
    %v1330 = vxor.u32 %v1326, %v1328
    %v1331 = vxor.u32 %v1327, %v1329
    %v1332 = vmul.u32 %v1330, 2246822507
    %v1333 = vmul.u32 %v1331, 2246822507
    %v1334 = vshrl.u32 %v1332, 13
    %v1335 = vshrl.u32 %v1333, 13
    %v1336 = vxor.u32 %v1332, %v1334
    %v1337 = vxor.u32 %v1333, %v1335
    %v1338 = vmul.u32 %v1336, 3266489909
    %v1339 = vmul.u32 %v1337, 3266489909
    %v1340 = vshrl.u32 %v1338, 16
    %v1341 = vshrl.u32 %v1339, 16
    %v1342 = vxor.u32 %v1338, %v1340
    %v1343 = vxor.u32 %v1339, %v1341
    %v1344 = vshrl.u32 %v1342, 8
    %v1345 = vshrl.u32 %v1343, 8
    %vm1346 = vcmp.ge.s32.totalorder %v1344, %v1076
    %vm1347 = vcmp.ge.s32.totalorder %v1345, %v1077
    %v1348 = vsel %vm1346, 1, 0
    %v1349 = vsel %vm1347, 1, 0
    %vm1350 = vcmp.ge.s32.totalorder %v1344, %v1084
    %vm1351 = vcmp.ge.s32.totalorder %v1345, %v1085
    %v1352 = vsel %vm1350, 1, 0
    %v1353 = vsel %vm1351, 1, 0
    %v1354 = vadd.s32 %v1348, %v1352
    %v1355 = vadd.s32 %v1349, %v1353
    %vm1356 = vcmp.ge.s32.totalorder %v1344, %v1094
    %vm1357 = vcmp.ge.s32.totalorder %v1345, %v1095
    %v1358 = vsel %vm1356, 1, 0
    %v1359 = vsel %vm1357, 1, 0
    %v1360 = vadd.s32 %v1354, %v1358
    %v1361 = vadd.s32 %v1355, %v1359
    %vm1362 = vcmp.ge.s32.totalorder %v1344, %v1104
    %vm1363 = vcmp.ge.s32.totalorder %v1345, %v1105
    %v1364 = vsel %vm1362, 1, 0
    %v1365 = vsel %vm1363, 1, 0
    %v1366 = vadd.s32 %v1360, %v1364
    %v1367 = vadd.s32 %v1361, %v1365
    %vm1368 = vcmp.ge.s32.totalorder %v1344, %v1114
    %vm1369 = vcmp.ge.s32.totalorder %v1345, %v1115
    %v1370 = vsel %vm1368, 1, 0
    %v1371 = vsel %vm1369, 1, 0
    %v1372 = vadd.s32 %v1366, %v1370
    %v1373 = vadd.s32 %v1367, %v1371
    %v1374 = vcvt.s32.f32 %v1372
    %v1375 = vcvt.s32.f32 %v1373
    %v1376 = vpack.c.bf16 %v1375, %v1374
    %1377 = vst [vmem:[#allocation2 + $0xa0] sm:$0xff] %v1376
    %v1378 = vadd.s32 %v1118, 40960
    %v1379 = vadd.s32 %v1119, 40960
    %v1380 = vshrl.u32 %v1378, 16
    %v1381 = vshrl.u32 %v1379, 16
    %v1382 = vxor.u32 %v1378, %v1380
    %v1383 = vxor.u32 %v1379, %v1381
    %v1384 = vmul.u32 %v1382, 2246822507
    %v1385 = vmul.u32 %v1383, 2246822507
    %v1386 = vshrl.u32 %v1384, 13
    %v1387 = vshrl.u32 %v1385, 13
    %v1388 = vxor.u32 %v1384, %v1386
    %v1389 = vxor.u32 %v1385, %v1387
    %v1390 = vmul.u32 %v1388, 3266489909
    %v1391 = vmul.u32 %v1389, 3266489909
    %v1392 = vshrl.u32 %v1390, 16
    %v1393 = vshrl.u32 %v1391, 16
    %v1394 = vxor.u32 %v1390, %v1392
    %v1395 = vxor.u32 %v1391, %v1393
    %v1396 = vshrl.u32 %v1394, 8
    %v1397 = vshrl.u32 %v1395, 8
    %vm1398 = vcmp.ge.s32.totalorder %v1396, %v1076
    %vm1399 = vcmp.ge.s32.totalorder %v1397, %v1077
    %v1400 = vsel %vm1398, 1, 0
    %v1401 = vsel %vm1399, 1, 0
    %vm1402 = vcmp.ge.s32.totalorder %v1396, %v1084
    %vm1403 = vcmp.ge.s32.totalorder %v1397, %v1085
    %v1404 = vsel %vm1402, 1, 0
    %v1405 = vsel %vm1403, 1, 0
    %v1406 = vadd.s32 %v1400, %v1404
    %v1407 = vadd.s32 %v1401, %v1405
    %vm1408 = vcmp.ge.s32.totalorder %v1396, %v1094
    %vm1409 = vcmp.ge.s32.totalorder %v1397, %v1095
    %v1410 = vsel %vm1408, 1, 0
    %v1411 = vsel %vm1409, 1, 0
    %v1412 = vadd.s32 %v1406, %v1410
    %v1413 = vadd.s32 %v1407, %v1411
    %vm1414 = vcmp.ge.s32.totalorder %v1396, %v1104
    %vm1415 = vcmp.ge.s32.totalorder %v1397, %v1105
    %v1416 = vsel %vm1414, 1, 0
    %v1417 = vsel %vm1415, 1, 0
    %v1418 = vadd.s32 %v1412, %v1416
    %v1419 = vadd.s32 %v1413, %v1417
    %vm1420 = vcmp.ge.s32.totalorder %v1396, %v1114
    %vm1421 = vcmp.ge.s32.totalorder %v1397, %v1115
    %v1422 = vsel %vm1420, 1, 0
    %v1423 = vsel %vm1421, 1, 0
    %v1424 = vadd.s32 %v1418, %v1422
    %v1425 = vadd.s32 %v1419, %v1423
    %v1426 = vcvt.s32.f32 %v1424
    %v1427 = vcvt.s32.f32 %v1425
    %v1428 = vpack.c.bf16 %v1427, %v1426
    %1429 = vst [vmem:[#allocation2 + $0xa8] sm:$0xff] %v1428
    %v1430 = vadd.s32 %v1118, 49152
    %v1431 = vadd.s32 %v1119, 49152
    %v1432 = vshrl.u32 %v1430, 16
    %v1433 = vshrl.u32 %v1431, 16
    %v1434 = vxor.u32 %v1430, %v1432
    %v1435 = vxor.u32 %v1431, %v1433
    %v1436 = vmul.u32 %v1434, 2246822507
    %v1437 = vmul.u32 %v1435, 2246822507
    %v1438 = vshrl.u32 %v1436, 13
    %v1439 = vshrl.u32 %v1437, 13
    %v1440 = vxor.u32 %v1436, %v1438
    %v1441 = vxor.u32 %v1437, %v1439
    %v1442 = vmul.u32 %v1440, 3266489909
    %v1443 = vmul.u32 %v1441, 3266489909
    %v1444 = vshrl.u32 %v1442, 16
    %v1445 = vshrl.u32 %v1443, 16
    %v1446 = vxor.u32 %v1442, %v1444
    %v1447 = vxor.u32 %v1443, %v1445
    %v1448 = vshrl.u32 %v1446, 8
    %v1449 = vshrl.u32 %v1447, 8
    %vm1450 = vcmp.ge.s32.totalorder %v1448, %v1076
    %vm1451 = vcmp.ge.s32.totalorder %v1449, %v1077
    %v1452 = vsel %vm1450, 1, 0
    %v1453 = vsel %vm1451, 1, 0
    %vm1454 = vcmp.ge.s32.totalorder %v1448, %v1084
    %vm1455 = vcmp.ge.s32.totalorder %v1449, %v1085
    %v1456 = vsel %vm1454, 1, 0
    %v1457 = vsel %vm1455, 1, 0
    %v1458 = vadd.s32 %v1452, %v1456
    %v1459 = vadd.s32 %v1453, %v1457
    %vm1460 = vcmp.ge.s32.totalorder %v1448, %v1094
    %vm1461 = vcmp.ge.s32.totalorder %v1449, %v1095
    %v1462 = vsel %vm1460, 1, 0
    %v1463 = vsel %vm1461, 1, 0
    %v1464 = vadd.s32 %v1458, %v1462
    %v1465 = vadd.s32 %v1459, %v1463
    %vm1466 = vcmp.ge.s32.totalorder %v1448, %v1104
    %vm1467 = vcmp.ge.s32.totalorder %v1449, %v1105
    %v1468 = vsel %vm1466, 1, 0
    %v1469 = vsel %vm1467, 1, 0
    %v1470 = vadd.s32 %v1464, %v1468
    %v1471 = vadd.s32 %v1465, %v1469
    %vm1472 = vcmp.ge.s32.totalorder %v1448, %v1114
    %vm1473 = vcmp.ge.s32.totalorder %v1449, %v1115
    %v1474 = vsel %vm1472, 1, 0
    %v1475 = vsel %vm1473, 1, 0
    %v1476 = vadd.s32 %v1470, %v1474
    %v1477 = vadd.s32 %v1471, %v1475
    %v1478 = vcvt.s32.f32 %v1476
    %v1479 = vcvt.s32.f32 %v1477
    %v1480 = vpack.c.bf16 %v1479, %v1478
    %1481 = vst [vmem:[#allocation2 + $0xb0] sm:$0xff] %v1480
    %v1482 = vadd.s32 %v1118, 57344
    %v1483 = vadd.s32 %v1119, 57344
    %v1484 = vshrl.u32 %v1482, 16
    %v1485 = vshrl.u32 %v1483, 16
    %v1486 = vxor.u32 %v1482, %v1484
    %v1487 = vxor.u32 %v1483, %v1485
    %v1488 = vmul.u32 %v1486, 2246822507
    %v1489 = vmul.u32 %v1487, 2246822507
    %v1490 = vshrl.u32 %v1488, 13
    %v1491 = vshrl.u32 %v1489, 13
    %v1492 = vxor.u32 %v1488, %v1490
    %v1493 = vxor.u32 %v1489, %v1491
    %v1494 = vmul.u32 %v1492, 3266489909
    %v1495 = vmul.u32 %v1493, 3266489909
    %v1496 = vshrl.u32 %v1494, 16
    %v1497 = vshrl.u32 %v1495, 16
    %v1498 = vxor.u32 %v1494, %v1496
    %v1499 = vxor.u32 %v1495, %v1497
    %v1500 = vshrl.u32 %v1498, 8
    %v1501 = vshrl.u32 %v1499, 8
    %vm1502 = vcmp.ge.s32.totalorder %v1500, %v1076
    %vm1503 = vcmp.ge.s32.totalorder %v1501, %v1077
    %v1504 = vsel %vm1502, 1, 0
    %v1505 = vsel %vm1503, 1, 0
    %vm1506 = vcmp.ge.s32.totalorder %v1500, %v1084
    %vm1507 = vcmp.ge.s32.totalorder %v1501, %v1085
    %v1508 = vsel %vm1506, 1, 0
    %v1509 = vsel %vm1507, 1, 0
    %v1510 = vadd.s32 %v1504, %v1508
    %v1511 = vadd.s32 %v1505, %v1509
    %vm1512 = vcmp.ge.s32.totalorder %v1500, %v1094
    %vm1513 = vcmp.ge.s32.totalorder %v1501, %v1095
    %v1514 = vsel %vm1512, 1, 0
    %v1515 = vsel %vm1513, 1, 0
    %v1516 = vadd.s32 %v1510, %v1514
    %v1517 = vadd.s32 %v1511, %v1515
    %vm1518 = vcmp.ge.s32.totalorder %v1500, %v1104
    %vm1519 = vcmp.ge.s32.totalorder %v1501, %v1105
    %v1520 = vsel %vm1518, 1, 0
    %v1521 = vsel %vm1519, 1, 0
    %v1522 = vadd.s32 %v1516, %v1520
    %v1523 = vadd.s32 %v1517, %v1521
    %vm1524 = vcmp.ge.s32.totalorder %v1500, %v1114
    %vm1525 = vcmp.ge.s32.totalorder %v1501, %v1115
    %v1526 = vsel %vm1524, 1, 0
    %v1527 = vsel %vm1525, 1, 0
    %v1528 = vadd.s32 %v1522, %v1526
    %v1529 = vadd.s32 %v1523, %v1527
    %v1530 = vcvt.s32.f32 %v1528
    %v1531 = vcvt.s32.f32 %v1529
    %v1532 = vpack.c.bf16 %v1531, %v1530
    %1533 = vst [vmem:[#allocation2 + $0xb8] sm:$0xff] %v1532
    %v1534 = vld [vmem:[%s2 + $0x30] sm:$0xff]
    %v1535 = vld [vmem:[%s2 + $0x38] sm:$0xff]
    %v1536 = vld [vmem:[%s1] sm:$0x1]
    %v1538 = vlaneseq
    %v1539 = vshrl.u32 %v1538, 7
    %v1540 = vsub.s32 0, %v1539
    %v1541 = vrot.slane %v1536, %v1540
    %1544 = vset.pattern.permute.xlu0 0
    %1545 = vperm.xlu0 %1544, %v1534
    %v1546 = vpop.permute.xlu0 %1545
    %1549 = vset.pattern.permute.xlu0 0
    %1550 = vperm.xlu0 %1549, %v1535
    %v1551 = vpop.permute.xlu0 %1550
    %v1553 = vsub.f32 %v1541, %v1546
    %v1554 = vsub.f32 %v1541, %v1551
    %v1555 = vmul.f32 %v1553, %v1553
    %v1556 = vmul.f32 %v1554, %v1554
    %v1557 = vmul.f32 %v1555, -200.0
    %v1558 = vmul.f32 %v1556, -200.0
    %v1559 = vmul.f32 %v1557, 1.442695
    %v1560 = vpow.pop %v1559
    %v1561 = vmul.f32 %v1558, 1.442695
    %v1562 = vpow.pop %v1561
    %v1563 = vmul.f32 %v1560, 0.5
    %v1564 = vmul.f32 %v1562, 0.5
    %v1565 = vsub.f32 0.0, %v1563
    %v1566 = vsub.f32 0.0, %v1564
    %v1567 = vmul.f32 %v1565, 1.442695
    %v1568 = vpow.pop %v1567
    %v1569 = vmul.f32 %v1566, 1.442695
    %v1570 = vpow.pop %v1569
    %v1571 = vmul.f32 %v1568, 16777216.0
    %v1572 = vmul.f32 %v1570, 16777216.0
    %v1573 = vcvt.f32.s32.to.zero.pseudo %v1571
    %v1574 = vcvt.f32.s32.to.zero.pseudo %v1572
    %v1575 = vmul.f32 %v1568, %v1563
    %v1576 = vmul.f32 %v1570, %v1564
    %v1577 = vadd.f32 %v1568, %v1575
    %v1578 = vadd.f32 %v1570, %v1576
    %v1579 = vmul.f32 %v1577, 16777216.0
    %v1580 = vmul.f32 %v1578, 16777216.0
    %v1581 = vcvt.f32.s32.to.zero.pseudo %v1579
    %v1582 = vcvt.f32.s32.to.zero.pseudo %v1580
    %v1583 = vmul.f32 %v1575, %v1563
    %v1584 = vmul.f32 %v1576, %v1564
    %v1585 = vmul.f32 %v1583, 0.5
    %v1586 = vmul.f32 %v1584, 0.5
    %v1587 = vadd.f32 %v1577, %v1585
    %v1588 = vadd.f32 %v1578, %v1586
    %v1589 = vmul.f32 %v1587, 16777216.0
    %v1590 = vmul.f32 %v1588, 16777216.0
    %v1591 = vcvt.f32.s32.to.zero.pseudo %v1589
    %v1592 = vcvt.f32.s32.to.zero.pseudo %v1590
    %v1593 = vmul.f32 %v1585, %v1563
    %v1594 = vmul.f32 %v1586, %v1564
    %v1595 = vmul.f32 %v1593, 0.33333334
    %v1596 = vmul.f32 %v1594, 0.33333334
    %v1597 = vadd.f32 %v1587, %v1595
    %v1598 = vadd.f32 %v1588, %v1596
    %v1599 = vmul.f32 %v1597, 16777216.0
    %v1600 = vmul.f32 %v1598, 16777216.0
    %v1601 = vcvt.f32.s32.to.zero.pseudo %v1599
    %v1602 = vcvt.f32.s32.to.zero.pseudo %v1600
    %v1603 = vmul.f32 %v1595, %v1563
    %v1604 = vmul.f32 %v1596, %v1564
    %v1605 = vmul.f32 %v1603, 0.25
    %v1606 = vmul.f32 %v1604, 0.25
    %v1607 = vadd.f32 %v1597, %v1605
    %v1608 = vadd.f32 %v1598, %v1606
    %v1609 = vmul.f32 %v1607, 16777216.0
    %v1610 = vmul.f32 %v1608, 16777216.0
    %v1611 = vcvt.f32.s32.to.zero.pseudo %v1609
    %v1612 = vcvt.f32.s32.to.zero.pseudo %v1610
    %v1613 = vadd.s32 %v121, 6144
    %v1614 = vadd.s32 %v122, 6144
    %v1615 = vxor.u32 %v1613, %v123
    %v1616 = vxor.u32 %v1614, %v123
    %v1617 = vshrl.u32 %v1615, 16
    %v1618 = vshrl.u32 %v1616, 16
    %v1619 = vxor.u32 %v1615, %v1617
    %v1620 = vxor.u32 %v1616, %v1618
    %v1621 = vmul.u32 %v1619, 2246822507
    %v1622 = vmul.u32 %v1620, 2246822507
    %v1623 = vshrl.u32 %v1621, 13
    %v1624 = vshrl.u32 %v1622, 13
    %v1625 = vxor.u32 %v1621, %v1623
    %v1626 = vxor.u32 %v1622, %v1624
    %v1627 = vmul.u32 %v1625, 3266489909
    %v1628 = vmul.u32 %v1626, 3266489909
    %v1629 = vshrl.u32 %v1627, 16
    %v1630 = vshrl.u32 %v1628, 16
    %v1631 = vxor.u32 %v1627, %v1629
    %v1632 = vxor.u32 %v1628, %v1630
    %v1633 = vshrl.u32 %v1631, 8
    %v1634 = vshrl.u32 %v1632, 8
    %vm1635 = vcmp.ge.s32.totalorder %v1633, %v1573
    %vm1636 = vcmp.ge.s32.totalorder %v1634, %v1574
    %v1637 = vsel %vm1635, 1, 0
    %v1638 = vsel %vm1636, 1, 0
    %vm1639 = vcmp.ge.s32.totalorder %v1633, %v1581
    %vm1640 = vcmp.ge.s32.totalorder %v1634, %v1582
    %v1641 = vsel %vm1639, 1, 0
    %v1642 = vsel %vm1640, 1, 0
    %v1643 = vadd.s32 %v1637, %v1641
    %v1644 = vadd.s32 %v1638, %v1642
    %vm1645 = vcmp.ge.s32.totalorder %v1633, %v1591
    %vm1646 = vcmp.ge.s32.totalorder %v1634, %v1592
    %v1647 = vsel %vm1645, 1, 0
    %v1648 = vsel %vm1646, 1, 0
    %v1649 = vadd.s32 %v1643, %v1647
    %v1650 = vadd.s32 %v1644, %v1648
    %vm1651 = vcmp.ge.s32.totalorder %v1633, %v1601
    %vm1652 = vcmp.ge.s32.totalorder %v1634, %v1602
    %v1653 = vsel %vm1651, 1, 0
    %v1654 = vsel %vm1652, 1, 0
    %v1655 = vadd.s32 %v1649, %v1653
    %v1656 = vadd.s32 %v1650, %v1654
    %vm1657 = vcmp.ge.s32.totalorder %v1633, %v1611
    %vm1658 = vcmp.ge.s32.totalorder %v1634, %v1612
    %v1659 = vsel %vm1657, 1, 0
    %v1660 = vsel %vm1658, 1, 0
    %v1661 = vadd.s32 %v1655, %v1659
    %v1662 = vadd.s32 %v1656, %v1660
    %v1663 = vcvt.s32.f32 %v1661
    %v1664 = vcvt.s32.f32 %v1662
    %v1665 = vpack.c.bf16 %v1664, %v1663
    %1666 = vst [vmem:[#allocation2 + $0xc0] sm:$0xff] %v1665
    %v1667 = vadd.s32 %v1615, 8192
    %v1668 = vadd.s32 %v1616, 8192
    %v1669 = vshrl.u32 %v1667, 16
    %v1670 = vshrl.u32 %v1668, 16
    %v1671 = vxor.u32 %v1667, %v1669
    %v1672 = vxor.u32 %v1668, %v1670
    %v1673 = vmul.u32 %v1671, 2246822507
    %v1674 = vmul.u32 %v1672, 2246822507
    %v1675 = vshrl.u32 %v1673, 13
    %v1676 = vshrl.u32 %v1674, 13
    %v1677 = vxor.u32 %v1673, %v1675
    %v1678 = vxor.u32 %v1674, %v1676
    %v1679 = vmul.u32 %v1677, 3266489909
    %v1680 = vmul.u32 %v1678, 3266489909
    %v1681 = vshrl.u32 %v1679, 16
    %v1682 = vshrl.u32 %v1680, 16
    %v1683 = vxor.u32 %v1679, %v1681
    %v1684 = vxor.u32 %v1680, %v1682
    %v1685 = vshrl.u32 %v1683, 8
    %v1686 = vshrl.u32 %v1684, 8
    %vm1687 = vcmp.ge.s32.totalorder %v1685, %v1573
    %vm1688 = vcmp.ge.s32.totalorder %v1686, %v1574
    %v1689 = vsel %vm1687, 1, 0
    %v1690 = vsel %vm1688, 1, 0
    %vm1691 = vcmp.ge.s32.totalorder %v1685, %v1581
    %vm1692 = vcmp.ge.s32.totalorder %v1686, %v1582
    %v1693 = vsel %vm1691, 1, 0
    %v1694 = vsel %vm1692, 1, 0
    %v1695 = vadd.s32 %v1689, %v1693
    %v1696 = vadd.s32 %v1690, %v1694
    %vm1697 = vcmp.ge.s32.totalorder %v1685, %v1591
    %vm1698 = vcmp.ge.s32.totalorder %v1686, %v1592
    %v1699 = vsel %vm1697, 1, 0
    %v1700 = vsel %vm1698, 1, 0
    %v1701 = vadd.s32 %v1695, %v1699
    %v1702 = vadd.s32 %v1696, %v1700
    %vm1703 = vcmp.ge.s32.totalorder %v1685, %v1601
    %vm1704 = vcmp.ge.s32.totalorder %v1686, %v1602
    %v1705 = vsel %vm1703, 1, 0
    %v1706 = vsel %vm1704, 1, 0
    %v1707 = vadd.s32 %v1701, %v1705
    %v1708 = vadd.s32 %v1702, %v1706
    %vm1709 = vcmp.ge.s32.totalorder %v1685, %v1611
    %vm1710 = vcmp.ge.s32.totalorder %v1686, %v1612
    %v1711 = vsel %vm1709, 1, 0
    %v1712 = vsel %vm1710, 1, 0
    %v1713 = vadd.s32 %v1707, %v1711
    %v1714 = vadd.s32 %v1708, %v1712
    %v1715 = vcvt.s32.f32 %v1713
    %v1716 = vcvt.s32.f32 %v1714
    %v1717 = vpack.c.bf16 %v1716, %v1715
    %1718 = vst [vmem:[#allocation2 + $0xc8] sm:$0xff] %v1717
    %v1719 = vadd.s32 %v1615, 16384
    %v1720 = vadd.s32 %v1616, 16384
    %v1721 = vshrl.u32 %v1719, 16
    %v1722 = vshrl.u32 %v1720, 16
    %v1723 = vxor.u32 %v1719, %v1721
    %v1724 = vxor.u32 %v1720, %v1722
    %v1725 = vmul.u32 %v1723, 2246822507
    %v1726 = vmul.u32 %v1724, 2246822507
    %v1727 = vshrl.u32 %v1725, 13
    %v1728 = vshrl.u32 %v1726, 13
    %v1729 = vxor.u32 %v1725, %v1727
    %v1730 = vxor.u32 %v1726, %v1728
    %v1731 = vmul.u32 %v1729, 3266489909
    %v1732 = vmul.u32 %v1730, 3266489909
    %v1733 = vshrl.u32 %v1731, 16
    %v1734 = vshrl.u32 %v1732, 16
    %v1735 = vxor.u32 %v1731, %v1733
    %v1736 = vxor.u32 %v1732, %v1734
    %v1737 = vshrl.u32 %v1735, 8
    %v1738 = vshrl.u32 %v1736, 8
    %vm1739 = vcmp.ge.s32.totalorder %v1737, %v1573
    %vm1740 = vcmp.ge.s32.totalorder %v1738, %v1574
    %v1741 = vsel %vm1739, 1, 0
    %v1742 = vsel %vm1740, 1, 0
    %vm1743 = vcmp.ge.s32.totalorder %v1737, %v1581
    %vm1744 = vcmp.ge.s32.totalorder %v1738, %v1582
    %v1745 = vsel %vm1743, 1, 0
    %v1746 = vsel %vm1744, 1, 0
    %v1747 = vadd.s32 %v1741, %v1745
    %v1748 = vadd.s32 %v1742, %v1746
    %vm1749 = vcmp.ge.s32.totalorder %v1737, %v1591
    %vm1750 = vcmp.ge.s32.totalorder %v1738, %v1592
    %v1751 = vsel %vm1749, 1, 0
    %v1752 = vsel %vm1750, 1, 0
    %v1753 = vadd.s32 %v1747, %v1751
    %v1754 = vadd.s32 %v1748, %v1752
    %vm1755 = vcmp.ge.s32.totalorder %v1737, %v1601
    %vm1756 = vcmp.ge.s32.totalorder %v1738, %v1602
    %v1757 = vsel %vm1755, 1, 0
    %v1758 = vsel %vm1756, 1, 0
    %v1759 = vadd.s32 %v1753, %v1757
    %v1760 = vadd.s32 %v1754, %v1758
    %vm1761 = vcmp.ge.s32.totalorder %v1737, %v1611
    %vm1762 = vcmp.ge.s32.totalorder %v1738, %v1612
    %v1763 = vsel %vm1761, 1, 0
    %v1764 = vsel %vm1762, 1, 0
    %v1765 = vadd.s32 %v1759, %v1763
    %v1766 = vadd.s32 %v1760, %v1764
    %v1767 = vcvt.s32.f32 %v1765
    %v1768 = vcvt.s32.f32 %v1766
    %v1769 = vpack.c.bf16 %v1768, %v1767
    %1770 = vst [vmem:[#allocation2 + $0xd0] sm:$0xff] %v1769
    %v1771 = vadd.s32 %v1615, 24576
    %v1772 = vadd.s32 %v1616, 24576
    %v1773 = vshrl.u32 %v1771, 16
    %v1774 = vshrl.u32 %v1772, 16
    %v1775 = vxor.u32 %v1771, %v1773
    %v1776 = vxor.u32 %v1772, %v1774
    %v1777 = vmul.u32 %v1775, 2246822507
    %v1778 = vmul.u32 %v1776, 2246822507
    %v1779 = vshrl.u32 %v1777, 13
    %v1780 = vshrl.u32 %v1778, 13
    %v1781 = vxor.u32 %v1777, %v1779
    %v1782 = vxor.u32 %v1778, %v1780
    %v1783 = vmul.u32 %v1781, 3266489909
    %v1784 = vmul.u32 %v1782, 3266489909
    %v1785 = vshrl.u32 %v1783, 16
    %v1786 = vshrl.u32 %v1784, 16
    %v1787 = vxor.u32 %v1783, %v1785
    %v1788 = vxor.u32 %v1784, %v1786
    %v1789 = vshrl.u32 %v1787, 8
    %v1790 = vshrl.u32 %v1788, 8
    %vm1791 = vcmp.ge.s32.totalorder %v1789, %v1573
    %vm1792 = vcmp.ge.s32.totalorder %v1790, %v1574
    %v1793 = vsel %vm1791, 1, 0
    %v1794 = vsel %vm1792, 1, 0
    %vm1795 = vcmp.ge.s32.totalorder %v1789, %v1581
    %vm1796 = vcmp.ge.s32.totalorder %v1790, %v1582
    %v1797 = vsel %vm1795, 1, 0
    %v1798 = vsel %vm1796, 1, 0
    %v1799 = vadd.s32 %v1793, %v1797
    %v1800 = vadd.s32 %v1794, %v1798
    %vm1801 = vcmp.ge.s32.totalorder %v1789, %v1591
    %vm1802 = vcmp.ge.s32.totalorder %v1790, %v1592
    %v1803 = vsel %vm1801, 1, 0
    %v1804 = vsel %vm1802, 1, 0
    %v1805 = vadd.s32 %v1799, %v1803
    %v1806 = vadd.s32 %v1800, %v1804
    %vm1807 = vcmp.ge.s32.totalorder %v1789, %v1601
    %vm1808 = vcmp.ge.s32.totalorder %v1790, %v1602
    %v1809 = vsel %vm1807, 1, 0
    %v1810 = vsel %vm1808, 1, 0
    %v1811 = vadd.s32 %v1805, %v1809
    %v1812 = vadd.s32 %v1806, %v1810
    %vm1813 = vcmp.ge.s32.totalorder %v1789, %v1611
    %vm1814 = vcmp.ge.s32.totalorder %v1790, %v1612
    %v1815 = vsel %vm1813, 1, 0
    %v1816 = vsel %vm1814, 1, 0
    %v1817 = vadd.s32 %v1811, %v1815
    %v1818 = vadd.s32 %v1812, %v1816
    %v1819 = vcvt.s32.f32 %v1817
    %v1820 = vcvt.s32.f32 %v1818
    %v1821 = vpack.c.bf16 %v1820, %v1819
    %1822 = vst [vmem:[#allocation2 + $0xd8] sm:$0xff] %v1821
    %v1823 = vadd.s32 %v1615, 32768
    %v1824 = vadd.s32 %v1616, 32768
    %v1825 = vshrl.u32 %v1823, 16
    %v1826 = vshrl.u32 %v1824, 16
    %v1827 = vxor.u32 %v1823, %v1825
    %v1828 = vxor.u32 %v1824, %v1826
    %v1829 = vmul.u32 %v1827, 2246822507
    %v1830 = vmul.u32 %v1828, 2246822507
    %v1831 = vshrl.u32 %v1829, 13
    %v1832 = vshrl.u32 %v1830, 13
    %v1833 = vxor.u32 %v1829, %v1831
    %v1834 = vxor.u32 %v1830, %v1832
    %v1835 = vmul.u32 %v1833, 3266489909
    %v1836 = vmul.u32 %v1834, 3266489909
    %v1837 = vshrl.u32 %v1835, 16
    %v1838 = vshrl.u32 %v1836, 16
    %v1839 = vxor.u32 %v1835, %v1837
    %v1840 = vxor.u32 %v1836, %v1838
    %v1841 = vshrl.u32 %v1839, 8
    %v1842 = vshrl.u32 %v1840, 8
    %vm1843 = vcmp.ge.s32.totalorder %v1841, %v1573
    %vm1844 = vcmp.ge.s32.totalorder %v1842, %v1574
    %v1845 = vsel %vm1843, 1, 0
    %v1846 = vsel %vm1844, 1, 0
    %vm1847 = vcmp.ge.s32.totalorder %v1841, %v1581
    %vm1848 = vcmp.ge.s32.totalorder %v1842, %v1582
    %v1849 = vsel %vm1847, 1, 0
    %v1850 = vsel %vm1848, 1, 0
    %v1851 = vadd.s32 %v1845, %v1849
    %v1852 = vadd.s32 %v1846, %v1850
    %vm1853 = vcmp.ge.s32.totalorder %v1841, %v1591
    %vm1854 = vcmp.ge.s32.totalorder %v1842, %v1592
    %v1855 = vsel %vm1853, 1, 0
    %v1856 = vsel %vm1854, 1, 0
    %v1857 = vadd.s32 %v1851, %v1855
    %v1858 = vadd.s32 %v1852, %v1856
    %vm1859 = vcmp.ge.s32.totalorder %v1841, %v1601
    %vm1860 = vcmp.ge.s32.totalorder %v1842, %v1602
    %v1861 = vsel %vm1859, 1, 0
    %v1862 = vsel %vm1860, 1, 0
    %v1863 = vadd.s32 %v1857, %v1861
    %v1864 = vadd.s32 %v1858, %v1862
    %vm1865 = vcmp.ge.s32.totalorder %v1841, %v1611
    %vm1866 = vcmp.ge.s32.totalorder %v1842, %v1612
    %v1867 = vsel %vm1865, 1, 0
    %v1868 = vsel %vm1866, 1, 0
    %v1869 = vadd.s32 %v1863, %v1867
    %v1870 = vadd.s32 %v1864, %v1868
    %v1871 = vcvt.s32.f32 %v1869
    %v1872 = vcvt.s32.f32 %v1870
    %v1873 = vpack.c.bf16 %v1872, %v1871
    %1874 = vst [vmem:[#allocation2 + $0xe0] sm:$0xff] %v1873
    %v1875 = vadd.s32 %v1615, 40960
    %v1876 = vadd.s32 %v1616, 40960
    %v1877 = vshrl.u32 %v1875, 16
    %v1878 = vshrl.u32 %v1876, 16
    %v1879 = vxor.u32 %v1875, %v1877
    %v1880 = vxor.u32 %v1876, %v1878
    %v1881 = vmul.u32 %v1879, 2246822507
    %v1882 = vmul.u32 %v1880, 2246822507
    %v1883 = vshrl.u32 %v1881, 13
    %v1884 = vshrl.u32 %v1882, 13
    %v1885 = vxor.u32 %v1881, %v1883
    %v1886 = vxor.u32 %v1882, %v1884
    %v1887 = vmul.u32 %v1885, 3266489909
    %v1888 = vmul.u32 %v1886, 3266489909
    %v1889 = vshrl.u32 %v1887, 16
    %v1890 = vshrl.u32 %v1888, 16
    %v1891 = vxor.u32 %v1887, %v1889
    %v1892 = vxor.u32 %v1888, %v1890
    %v1893 = vshrl.u32 %v1891, 8
    %v1894 = vshrl.u32 %v1892, 8
    %vm1895 = vcmp.ge.s32.totalorder %v1893, %v1573
    %vm1896 = vcmp.ge.s32.totalorder %v1894, %v1574
    %v1897 = vsel %vm1895, 1, 0
    %v1898 = vsel %vm1896, 1, 0
    %vm1899 = vcmp.ge.s32.totalorder %v1893, %v1581
    %vm1900 = vcmp.ge.s32.totalorder %v1894, %v1582
    %v1901 = vsel %vm1899, 1, 0
    %v1902 = vsel %vm1900, 1, 0
    %v1903 = vadd.s32 %v1897, %v1901
    %v1904 = vadd.s32 %v1898, %v1902
    %vm1905 = vcmp.ge.s32.totalorder %v1893, %v1591
    %vm1906 = vcmp.ge.s32.totalorder %v1894, %v1592
    %v1907 = vsel %vm1905, 1, 0
    %v1908 = vsel %vm1906, 1, 0
    %v1909 = vadd.s32 %v1903, %v1907
    %v1910 = vadd.s32 %v1904, %v1908
    %vm1911 = vcmp.ge.s32.totalorder %v1893, %v1601
    %vm1912 = vcmp.ge.s32.totalorder %v1894, %v1602
    %v1913 = vsel %vm1911, 1, 0
    %v1914 = vsel %vm1912, 1, 0
    %v1915 = vadd.s32 %v1909, %v1913
    %v1916 = vadd.s32 %v1910, %v1914
    %vm1917 = vcmp.ge.s32.totalorder %v1893, %v1611
    %vm1918 = vcmp.ge.s32.totalorder %v1894, %v1612
    %v1919 = vsel %vm1917, 1, 0
    %v1920 = vsel %vm1918, 1, 0
    %v1921 = vadd.s32 %v1915, %v1919
    %v1922 = vadd.s32 %v1916, %v1920
    %v1923 = vcvt.s32.f32 %v1921
    %v1924 = vcvt.s32.f32 %v1922
    %v1925 = vpack.c.bf16 %v1924, %v1923
    %1926 = vst [vmem:[#allocation2 + $0xe8] sm:$0xff] %v1925
    %v1927 = vadd.s32 %v1615, 49152
    %v1928 = vadd.s32 %v1616, 49152
    %v1929 = vshrl.u32 %v1927, 16
    %v1930 = vshrl.u32 %v1928, 16
    %v1931 = vxor.u32 %v1927, %v1929
    %v1932 = vxor.u32 %v1928, %v1930
    %v1933 = vmul.u32 %v1931, 2246822507
    %v1934 = vmul.u32 %v1932, 2246822507
    %v1935 = vshrl.u32 %v1933, 13
    %v1936 = vshrl.u32 %v1934, 13
    %v1937 = vxor.u32 %v1933, %v1935
    %v1938 = vxor.u32 %v1934, %v1936
    %v1939 = vmul.u32 %v1937, 3266489909
    %v1940 = vmul.u32 %v1938, 3266489909
    %v1941 = vshrl.u32 %v1939, 16
    %v1942 = vshrl.u32 %v1940, 16
    %v1943 = vxor.u32 %v1939, %v1941
    %v1944 = vxor.u32 %v1940, %v1942
    %v1945 = vshrl.u32 %v1943, 8
    %v1946 = vshrl.u32 %v1944, 8
    %vm1947 = vcmp.ge.s32.totalorder %v1945, %v1573
    %vm1948 = vcmp.ge.s32.totalorder %v1946, %v1574
    %v1949 = vsel %vm1947, 1, 0
    %v1950 = vsel %vm1948, 1, 0
    %vm1951 = vcmp.ge.s32.totalorder %v1945, %v1581
    %vm1952 = vcmp.ge.s32.totalorder %v1946, %v1582
    %v1953 = vsel %vm1951, 1, 0
    %v1954 = vsel %vm1952, 1, 0
    %v1955 = vadd.s32 %v1949, %v1953
    %v1956 = vadd.s32 %v1950, %v1954
    %vm1957 = vcmp.ge.s32.totalorder %v1945, %v1591
    %vm1958 = vcmp.ge.s32.totalorder %v1946, %v1592
    %v1959 = vsel %vm1957, 1, 0
    %v1960 = vsel %vm1958, 1, 0
    %v1961 = vadd.s32 %v1955, %v1959
    %v1962 = vadd.s32 %v1956, %v1960
    %vm1963 = vcmp.ge.s32.totalorder %v1945, %v1601
    %vm1964 = vcmp.ge.s32.totalorder %v1946, %v1602
    %v1965 = vsel %vm1963, 1, 0
    %v1966 = vsel %vm1964, 1, 0
    %v1967 = vadd.s32 %v1961, %v1965
    %v1968 = vadd.s32 %v1962, %v1966
    %vm1969 = vcmp.ge.s32.totalorder %v1945, %v1611
    %vm1970 = vcmp.ge.s32.totalorder %v1946, %v1612
    %v1971 = vsel %vm1969, 1, 0
    %v1972 = vsel %vm1970, 1, 0
    %v1973 = vadd.s32 %v1967, %v1971
    %v1974 = vadd.s32 %v1968, %v1972
    %v1975 = vcvt.s32.f32 %v1973
    %v1976 = vcvt.s32.f32 %v1974
    %v1977 = vpack.c.bf16 %v1976, %v1975
    %1978 = vst [vmem:[#allocation2 + $0xf0] sm:$0xff] %v1977
    %v1979 = vadd.s32 %v1615, 57344
    %v1980 = vadd.s32 %v1616, 57344
    %v1981 = vshrl.u32 %v1979, 16
    %v1982 = vshrl.u32 %v1980, 16
    %v1983 = vxor.u32 %v1979, %v1981
    %v1984 = vxor.u32 %v1980, %v1982
    %v1985 = vmul.u32 %v1983, 2246822507
    %v1986 = vmul.u32 %v1984, 2246822507
    %v1987 = vshrl.u32 %v1985, 13
    %v1988 = vshrl.u32 %v1986, 13
    %v1989 = vxor.u32 %v1985, %v1987
    %v1990 = vxor.u32 %v1986, %v1988
    %v1991 = vmul.u32 %v1989, 3266489909
    %v1992 = vmul.u32 %v1990, 3266489909
    %v1993 = vshrl.u32 %v1991, 16
    %v1994 = vshrl.u32 %v1992, 16
    %v1995 = vxor.u32 %v1991, %v1993
    %v1996 = vxor.u32 %v1992, %v1994
    %v1997 = vshrl.u32 %v1995, 8
    %v1998 = vshrl.u32 %v1996, 8
    %vm1999 = vcmp.ge.s32.totalorder %v1997, %v1573
    %vm2000 = vcmp.ge.s32.totalorder %v1998, %v1574
    %v2001 = vsel %vm1999, 1, 0
    %v2002 = vsel %vm2000, 1, 0
    %vm2003 = vcmp.ge.s32.totalorder %v1997, %v1581
    %vm2004 = vcmp.ge.s32.totalorder %v1998, %v1582
    %v2005 = vsel %vm2003, 1, 0
    %v2006 = vsel %vm2004, 1, 0
    %v2007 = vadd.s32 %v2001, %v2005
    %v2008 = vadd.s32 %v2002, %v2006
    %vm2009 = vcmp.ge.s32.totalorder %v1997, %v1591
    %vm2010 = vcmp.ge.s32.totalorder %v1998, %v1592
    %v2011 = vsel %vm2009, 1, 0
    %v2012 = vsel %vm2010, 1, 0
    %v2013 = vadd.s32 %v2007, %v2011
    %v2014 = vadd.s32 %v2008, %v2012
    %vm2015 = vcmp.ge.s32.totalorder %v1997, %v1601
    %vm2016 = vcmp.ge.s32.totalorder %v1998, %v1602
    %v2017 = vsel %vm2015, 1, 0
    %v2018 = vsel %vm2016, 1, 0
    %v2019 = vadd.s32 %v2013, %v2017
    %v2020 = vadd.s32 %v2014, %v2018
    %vm2021 = vcmp.ge.s32.totalorder %v1997, %v1611
    %vm2022 = vcmp.ge.s32.totalorder %v1998, %v1612
    %v2023 = vsel %vm2021, 1, 0
    %v2024 = vsel %vm2022, 1, 0
    %v2025 = vadd.s32 %v2019, %v2023
    %v2026 = vadd.s32 %v2020, %v2024
    %v2027 = vcvt.s32.f32 %v2025
    %v2028 = vcvt.s32.f32 %v2026
    %v2029 = vpack.c.bf16 %v2028, %v2027
    %2030 = vst [vmem:[#allocation2 + $0xf8] sm:$0xff] %v2029
    %v2031 = vld [vmem:[%s3] sm:$0xf]
    %v2032 = vld [vmem:[%s3 + $0x4] sm:$0xf]
    %v2033 = vld [vmem:[%s3 + $0x8] sm:$0xf]
    %v2034 = vld [vmem:[%s3 + $0xc] sm:$0xf]
    %v2035 = vld [vmem:[#allocation2] sm:$0xff]
    %v2036 = vld [vmem:[#allocation2 + $0x8] sm:$0xff]
    %v2037 = vld [vmem:[#allocation2 + $0x10] sm:$0xff]
    %v2038 = vld [vmem:[#allocation2 + $0x18] sm:$0xff]
    %v2039 = vld [vmem:[#allocation2 + $0x20] sm:$0xff]
    %v2040 = vld [vmem:[#allocation2 + $0x28] sm:$0xff]
    %v2041 = vld [vmem:[#allocation2 + $0x30] sm:$0xff]
    %v2042 = vld [vmem:[#allocation2 + $0x38] sm:$0xff]
    %v2043 = vld [vmem:[#allocation2 + $0x40] sm:$0xff]
    %v2044 = vld [vmem:[#allocation2 + $0x48] sm:$0xff]
    %v2045 = vld [vmem:[#allocation2 + $0x50] sm:$0xff]
    %v2046 = vld [vmem:[#allocation2 + $0x58] sm:$0xff]
    %v2047 = vld [vmem:[#allocation2 + $0x60] sm:$0xff]
    %v2048 = vld [vmem:[#allocation2 + $0x68] sm:$0xff]
    %v2049 = vld [vmem:[#allocation2 + $0x70] sm:$0xff]
    %v2050 = vld [vmem:[#allocation2 + $0x78] sm:$0xff]
    %v2051 = vld [vmem:[#allocation2 + $0x80] sm:$0xff]
    %v2052 = vld [vmem:[#allocation2 + $0x88] sm:$0xff]
    %v2053 = vld [vmem:[#allocation2 + $0x90] sm:$0xff]
    %v2054 = vld [vmem:[#allocation2 + $0x98] sm:$0xff]
    %v2055 = vld [vmem:[#allocation2 + $0xa0] sm:$0xff]
    %v2056 = vld [vmem:[#allocation2 + $0xa8] sm:$0xff]
    %v2057 = vld [vmem:[#allocation2 + $0xb0] sm:$0xff]
    %v2058 = vld [vmem:[#allocation2 + $0xb8] sm:$0xff]
    %v2059 = vld [vmem:[#allocation2 + $0xc0] sm:$0xff]
    %v2060 = vld [vmem:[#allocation2 + $0xc8] sm:$0xff]
    %v2061 = vld [vmem:[#allocation2 + $0xd0] sm:$0xff]
    %v2062 = vld [vmem:[#allocation2 + $0xd8] sm:$0xff]
    %v2063 = vld [vmem:[#allocation2 + $0xe0] sm:$0xff]
    %v2064 = vld [vmem:[#allocation2 + $0xe8] sm:$0xff]
    %v2065 = vld [vmem:[#allocation2 + $0xf0] sm:$0xff]
    %v2066 = vld [vmem:[#allocation2 + $0xf8] sm:$0xff]
    %v2071 = vunpack.c.l.b16 %v2031
    %v2072 = vunpack.c.l.b16 %v2032
    %v2073 = vunpack.c.l.b16 %v2033
    %v2074 = vunpack.c.l.b16 %v2034
    %v2075 = vpack.c.b16 %v2072, %v2071
    %v2076 = vpack.c.b16 %v2074, %v2073
    %vm2077 = vcmask 523264
    %v2079 = vsel %vm2077, %v2075, 0
    %v2082 = vsel %vm2077, %v2076, 0
    %2084 = vmatprep.subr.bf16.mxu0 %v2036
    %2085 = vmatpush1.bf16.msra.mxu0 %v2035
    %2086 = vmatprep.subr.bf16.mxu0 %v2044
    %2087 = vmatpush1.bf16.msra.mxu0 %v2043
    %2088 = vmatprep.subr.bf16.mxu0 %v2052
    %2089 = vmatpush1.bf16.msra.mxu0 %v2051
    %2090 = vmatprep.subr.bf16.mxu0 %v2060
    %2091 = vmatpush1.bf16.msra.mxu0 %v2059
    %2092 = vmatprep.subr.bf16.mxu0 0
    %2093 = vmatpush1.bf16.msra.mxu0 0
    %2094 = vmatprep.subr.bf16.mxu0 0
    %2095 = vmatpush1.bf16.msra.mxu0 0
    %2096 = vmatprep.subr.bf16.mxu0 0
    %2097 = vmatpush1.bf16.msra.mxu0 0
    %2098 = vmatprep.subr.bf16.mxu0 0
    %2099 = vmatpush1.bf16.msra.mxu0 0
    %2100 = vmatprep.subr.bf16.mxu0 0
    %2101 = vmatpush1.bf16.msra.mxu0 0
    %2102 = vmatprep.subr.bf16.mxu0 0
    %2103 = vmatpush1.bf16.msra.mxu0 0
    %2104 = vmatprep.subr.bf16.mxu0 0
    %2105 = vmatpush1.bf16.msra.mxu0 0
    %2106 = vmatprep.subr.bf16.mxu0 0
    %2107 = vmatpush1.bf16.msra.mxu0 0
    %2108 = vmatprep.subr.bf16.mxu0 0
    %2109 = vmatpush1.bf16.msra.mxu0 0
    %2110 = vmatprep.subr.bf16.mxu0 0
    %2111 = vmatpush1.bf16.msra.mxu0 0
    %2112 = vmatprep.subr.bf16.mxu0 0
    %2113 = vmatpush1.bf16.msra.mxu0 0
    %2114 = vmatprep.subr.bf16.mxu0 0
    %2115 = vmatpush1.bf16.msra.mxu0 0
    %2116 = vmatprep.mubr.bf16.mxu0 0
    %2117 = vmatmul.mubr.bf16.gmra.mrb[0].mxu0 %v2079
    %v2118 = vpop.f32.mrb[0].mxu0
    %v2119 = vadd.f32 0.0, %v2118
    %v2120 = vpop.f32.mrb[0].mxu0
    %v2121 = vadd.f32 0.0, %v2120
    %v2122 = vpop.f32.mrb[0].mxu0
    %v2123 = vadd.f32 0.0, %v2122
    %v2124 = vpop.f32.mrb[0].mxu0
    %v2125 = vadd.f32 0.0, %v2124
    %2126 = vmatprep.mubr.bf16.mxu0 0
    %2127 = vmatmul.mubr.bf16.gmra.mrb[0].mxu0 %v2082
    %v2128 = vpop.f32.mrb[0].mxu0
    %v2129 = vadd.f32 0.0, %v2128
    %v2130 = vpop.f32.mrb[0].mxu0
    %v2131 = vadd.f32 0.0, %v2130
    %v2132 = vpop.f32.mrb[0].mxu0
    %v2133 = vadd.f32 0.0, %v2132
    %v2134 = vpop.f32.mrb[0].mxu0
    %v2135 = vadd.f32 0.0, %v2134
    %2136 = vdwg.mxu0
    %2137 = vmatprep.subr.bf16.mxu0 %v2038
    %2138 = vmatpush1.bf16.msra.mxu0 %v2037
    %2139 = vmatprep.subr.bf16.mxu0 %v2046
    %2140 = vmatpush1.bf16.msra.mxu0 %v2045
    %2141 = vmatprep.subr.bf16.mxu0 %v2054
    %2142 = vmatpush1.bf16.msra.mxu0 %v2053
    %2143 = vmatprep.subr.bf16.mxu0 %v2062
    %2144 = vmatpush1.bf16.msra.mxu0 %v2061
    %2145 = vmatprep.subr.bf16.mxu0 0
    %2146 = vmatpush1.bf16.msra.mxu0 0
    %2147 = vmatprep.subr.bf16.mxu0 0
    %2148 = vmatpush1.bf16.msra.mxu0 0
    %2149 = vmatprep.subr.bf16.mxu0 0
    %2150 = vmatpush1.bf16.msra.mxu0 0
    %2151 = vmatprep.subr.bf16.mxu0 0
    %2152 = vmatpush1.bf16.msra.mxu0 0
    %2153 = vmatprep.subr.bf16.mxu0 0
    %2154 = vmatpush1.bf16.msra.mxu0 0
    %2155 = vmatprep.subr.bf16.mxu0 0
    %2156 = vmatpush1.bf16.msra.mxu0 0
    %2157 = vmatprep.subr.bf16.mxu0 0
    %2158 = vmatpush1.bf16.msra.mxu0 0
    %2159 = vmatprep.subr.bf16.mxu0 0
    %2160 = vmatpush1.bf16.msra.mxu0 0
    %2161 = vmatprep.subr.bf16.mxu0 0
    %2162 = vmatpush1.bf16.msra.mxu0 0
    %2163 = vmatprep.subr.bf16.mxu0 0
    %2164 = vmatpush1.bf16.msra.mxu0 0
    %2165 = vmatprep.subr.bf16.mxu0 0
    %2166 = vmatpush1.bf16.msra.mxu0 0
    %2167 = vmatprep.subr.bf16.mxu0 0
    %2168 = vmatpush1.bf16.msra.mxu0 0
    %2169 = vmatprep.mubr.bf16.mxu0 0
    %2170 = vmatmul.mubr.bf16.gmra.mrb[0].mxu0 %v2079
    %v2171 = vpop.f32.mrb[0].mxu0
    %v2172 = vadd.f32 0.0, %v2171
    %v2173 = vpop.f32.mrb[0].mxu0
    %v2174 = vadd.f32 0.0, %v2173
    %v2175 = vpop.f32.mrb[0].mxu0
    %v2176 = vadd.f32 0.0, %v2175
    %v2177 = vpop.f32.mrb[0].mxu0
    %v2178 = vadd.f32 0.0, %v2177
    %2179 = vmatprep.mubr.bf16.mxu0 0
    %2180 = vmatmul.mubr.bf16.gmra.mrb[0].mxu0 %v2082
    %v2181 = vpop.f32.mrb[0].mxu0
    %v2182 = vadd.f32 0.0, %v2181
    %v2183 = vpop.f32.mrb[0].mxu0
    %v2184 = vadd.f32 0.0, %v2183
    %v2185 = vpop.f32.mrb[0].mxu0
    %v2186 = vadd.f32 0.0, %v2185
    %v2187 = vpop.f32.mrb[0].mxu0
    %v2188 = vadd.f32 0.0, %v2187
    %2189 = vdwg.mxu0
    %2190 = vmatprep.subr.bf16.mxu0 %v2040
    %2191 = vmatpush1.bf16.msra.mxu0 %v2039
    %2192 = vmatprep.subr.bf16.mxu0 %v2048
    %2193 = vmatpush1.bf16.msra.mxu0 %v2047
    %2194 = vmatprep.subr.bf16.mxu0 %v2056
    %2195 = vmatpush1.bf16.msra.mxu0 %v2055
    %2196 = vmatprep.subr.bf16.mxu0 %v2064
    %2197 = vmatpush1.bf16.msra.mxu0 %v2063
    %2198 = vmatprep.subr.bf16.mxu0 0
    %2199 = vmatpush1.bf16.msra.mxu0 0
    %2200 = vmatprep.subr.bf16.mxu0 0
    %2201 = vmatpush1.bf16.msra.mxu0 0
    %2202 = vmatprep.subr.bf16.mxu0 0
    %2203 = vmatpush1.bf16.msra.mxu0 0
    %2204 = vmatprep.subr.bf16.mxu0 0
    %2205 = vmatpush1.bf16.msra.mxu0 0
    %2206 = vmatprep.subr.bf16.mxu0 0
    %2207 = vmatpush1.bf16.msra.mxu0 0
    %2208 = vmatprep.subr.bf16.mxu0 0
    %2209 = vmatpush1.bf16.msra.mxu0 0
    %2210 = vmatprep.subr.bf16.mxu0 0
    %2211 = vmatpush1.bf16.msra.mxu0 0
    %2212 = vmatprep.subr.bf16.mxu0 0
    %2213 = vmatpush1.bf16.msra.mxu0 0
    %2214 = vmatprep.subr.bf16.mxu0 0
    %2215 = vmatpush1.bf16.msra.mxu0 0
    %2216 = vmatprep.subr.bf16.mxu0 0
    %2217 = vmatpush1.bf16.msra.mxu0 0
    %2218 = vmatprep.subr.bf16.mxu0 0
    %2219 = vmatpush1.bf16.msra.mxu0 0
    %2220 = vmatprep.subr.bf16.mxu0 0
    %2221 = vmatpush1.bf16.msra.mxu0 0
    %2222 = vmatprep.mubr.bf16.mxu0 0
    %2223 = vmatmul.mubr.bf16.gmra.mrb[0].mxu0 %v2079
    %v2224 = vpop.f32.mrb[0].mxu0
    %v2225 = vadd.f32 0.0, %v2224
    %v2226 = vpop.f32.mrb[0].mxu0
    %v2227 = vadd.f32 0.0, %v2226
    %v2228 = vpop.f32.mrb[0].mxu0
    %v2229 = vadd.f32 0.0, %v2228
    %v2230 = vpop.f32.mrb[0].mxu0
    %v2231 = vadd.f32 0.0, %v2230
    %2232 = vmatprep.mubr.bf16.mxu0 0
    %2233 = vmatmul.mubr.bf16.gmra.mrb[0].mxu0 %v2082
    %v2234 = vpop.f32.mrb[0].mxu0
    %v2235 = vadd.f32 0.0, %v2234
    %v2236 = vpop.f32.mrb[0].mxu0
    %v2237 = vadd.f32 0.0, %v2236
    %v2238 = vpop.f32.mrb[0].mxu0
    %v2239 = vadd.f32 0.0, %v2238
    %v2240 = vpop.f32.mrb[0].mxu0
    %v2241 = vadd.f32 0.0, %v2240
    %2242 = vdwg.mxu0
    %2243 = vmatprep.subr.bf16.mxu0 %v2042
    %2244 = vmatpush1.bf16.msra.mxu0 %v2041
    %2245 = vmatprep.subr.bf16.mxu0 %v2050
    %2246 = vmatpush1.bf16.msra.mxu0 %v2049
    %2247 = vmatprep.subr.bf16.mxu0 %v2058
    %2248 = vmatpush1.bf16.msra.mxu0 %v2057
    %2249 = vmatprep.subr.bf16.mxu0 %v2066
    %2250 = vmatpush1.bf16.msra.mxu0 %v2065
    %2251 = vmatprep.subr.bf16.mxu0 0
    %2252 = vmatpush1.bf16.msra.mxu0 0
    %2253 = vmatprep.subr.bf16.mxu0 0
    %2254 = vmatpush1.bf16.msra.mxu0 0
    %2255 = vmatprep.subr.bf16.mxu0 0
    %2256 = vmatpush1.bf16.msra.mxu0 0
    %2257 = vmatprep.subr.bf16.mxu0 0
    %2258 = vmatpush1.bf16.msra.mxu0 0
    %2259 = vmatprep.subr.bf16.mxu0 0
    %2260 = vmatpush1.bf16.msra.mxu0 0
    %2261 = vmatprep.subr.bf16.mxu0 0
    %2262 = vmatpush1.bf16.msra.mxu0 0
    %2263 = vmatprep.subr.bf16.mxu0 0
    %2264 = vmatpush1.bf16.msra.mxu0 0
    %2265 = vmatprep.subr.bf16.mxu0 0
    %2266 = vmatpush1.bf16.msra.mxu0 0
    %2267 = vmatprep.subr.bf16.mxu0 0
    %2268 = vmatpush1.bf16.msra.mxu0 0
    %2269 = vmatprep.subr.bf16.mxu0 0
    %2270 = vmatpush1.bf16.msra.mxu0 0
    %2271 = vmatprep.subr.bf16.mxu0 0
    %2272 = vmatpush1.bf16.msra.mxu0 0
    %2273 = vmatprep.subr.bf16.mxu0 0
    %2274 = vmatpush1.bf16.msra.mxu0 0
    %2275 = vmatprep.mubr.bf16.mxu0 0
    %2276 = vmatmul.mubr.bf16.gmra.mrb[0].mxu0 %v2079
    %v2277 = vpop.f32.mrb[0].mxu0
    %v2278 = vadd.f32 0.0, %v2277
    %v2279 = vpop.f32.mrb[0].mxu0
    %v2280 = vadd.f32 0.0, %v2279
    %v2281 = vpop.f32.mrb[0].mxu0
    %v2282 = vadd.f32 0.0, %v2281
    %v2283 = vpop.f32.mrb[0].mxu0
    %v2284 = vadd.f32 0.0, %v2283
    %2285 = vmatprep.mubr.bf16.mxu0 0
    %2286 = vmatmul.mubr.bf16.gmra.mrb[0].mxu0 %v2082
    %v2287 = vpop.f32.mrb[0].mxu0
    %v2288 = vadd.f32 0.0, %v2287
    %v2289 = vpop.f32.mrb[0].mxu0
    %v2290 = vadd.f32 0.0, %v2289
    %v2291 = vpop.f32.mrb[0].mxu0
    %v2292 = vadd.f32 0.0, %v2291
    %v2293 = vpop.f32.mrb[0].mxu0
    %v2294 = vadd.f32 0.0, %v2293
    %2295 = vdwg.mxu0
    %2296 = vst [vmem:[#allocation3] sm:$0xff] %v2119
    %2297 = vst [vmem:[#allocation3 + $0x8] sm:$0xff] %v2121
    %2298 = vst [vmem:[#allocation3 + $0x10] sm:$0xff] %v2172
    %2299 = vst [vmem:[#allocation3 + $0x18] sm:$0xff] %v2174
    %2300 = vst [vmem:[#allocation3 + $0x20] sm:$0xff] %v2225
    %2301 = vst [vmem:[#allocation3 + $0x28] sm:$0xff] %v2227
    %2302 = vst [vmem:[#allocation3 + $0x30] sm:$0xff] %v2278
    %2303 = vst [vmem:[#allocation3 + $0x38] sm:$0xff] %v2280
    %2304 = vst [vmem:[#allocation3 + $0x40] sm:$0xff] %v2123
    %2305 = vst [vmem:[#allocation3 + $0x48] sm:$0xff] %v2125
    %2306 = vst [vmem:[#allocation3 + $0x50] sm:$0xff] %v2176
    %2307 = vst [vmem:[#allocation3 + $0x58] sm:$0xff] %v2178
    %2308 = vst [vmem:[#allocation3 + $0x60] sm:$0xff] %v2229
    %2309 = vst [vmem:[#allocation3 + $0x68] sm:$0xff] %v2231
    %2310 = vst [vmem:[#allocation3 + $0x70] sm:$0xff] %v2282
    %2311 = vst [vmem:[#allocation3 + $0x78] sm:$0xff] %v2284
    %2312 = vst [vmem:[#allocation3 + $0x80] sm:$0xff] %v2129
    %2313 = vst [vmem:[#allocation3 + $0x88] sm:$0xff] %v2131
    %2314 = vst [vmem:[#allocation3 + $0x90] sm:$0xff] %v2182
    %2315 = vst [vmem:[#allocation3 + $0x98] sm:$0xff] %v2184
    %2316 = vst [vmem:[#allocation3 + $0xa0] sm:$0xff] %v2235
    %2317 = vst [vmem:[#allocation3 + $0xa8] sm:$0xff] %v2237
    %2318 = vst [vmem:[#allocation3 + $0xb0] sm:$0xff] %v2288
    %2319 = vst [vmem:[#allocation3 + $0xb8] sm:$0xff] %v2290
    %2320 = vst [vmem:[#allocation3 + $0xc0] sm:$0xff] %v2133
    %2321 = vst [vmem:[#allocation3 + $0xc8] sm:$0xff] %v2135
    %2322 = vst [vmem:[#allocation3 + $0xd0] sm:$0xff] %v2186
    %2323 = vst [vmem:[#allocation3 + $0xd8] sm:$0xff] %v2188
    %2324 = vst [vmem:[#allocation3 + $0xe0] sm:$0xff] %v2239
    %2325 = vst [vmem:[#allocation3 + $0xe8] sm:$0xff] %v2241
    %2326 = vst [vmem:[#allocation3 + $0xf0] sm:$0xff] %v2292
    %2327 = vst [vmem:[#allocation3 + $0xf8] sm:$0xff] %v2294
    %v2328 = vld [vmem:[%s4] sm:$0xff]
    %v2329 = vld [vmem:[%s4 + $0x8] sm:$0xff]
    %v2330 = vld [vmem:[%s4 + $0x10] sm:$0xff]
    %v2331 = vld [vmem:[%s4 + $0x18] sm:$0xff]
    %2333 = vset.pattern.permute.xlu0 0
    %2334 = vperm.xlu0 %2333, %v2328
    %v2335 = vpop.permute.xlu0 %2334
    %2338 = vset.pattern.permute.xlu0 0
    %2339 = vperm.xlu0 %2338, %v2329
    %v2340 = vpop.permute.xlu0 %2339
    %2343 = vset.pattern.permute.xlu0 0
    %2344 = vperm.xlu0 %2343, %v2330
    %v2345 = vpop.permute.xlu0 %2344
    %2348 = vset.pattern.permute.xlu0 0
    %2349 = vperm.xlu0 %2348, %v2331
    %v2350 = vpop.permute.xlu0 %2349
    %v2352 = vld [vmem:[#allocation3] sm:$0xff]
    %v2353 = vld [vmem:[#allocation3 + $0x40] sm:$0xff]
    %v2354 = vld [vmem:[#allocation3 + $0x80] sm:$0xff]
    %v2355 = vld [vmem:[#allocation3 + $0xc0] sm:$0xff]
    %v2356 = vadd.f32 %v2352, %v2335
    %v2357 = vadd.f32 %v2353, %v2340
    %v2358 = vadd.f32 %v2354, %v2345
    %v2359 = vadd.f32 %v2355, %v2350
    %v2360 = vadd.f32 %v2356, 0.0
    %v2361 = vadd.f32 %v2357, 0.0
    %v2362 = vadd.f32 %v2358, 0.0
    %v2363 = vadd.f32 %v2359, 0.0
    %vm2364 = vcmp.gt.f32.partialorder %v2360, 0.5
    %vm2365 = vcmp.gt.f32.partialorder %v2361, 0.5
    %vm2366 = vcmp.gt.f32.partialorder %v2362, 0.5
    %vm2367 = vcmp.gt.f32.partialorder %v2363, 0.5
    %v2368 = vsel %vm2364, 1, 0
    %v2369 = vsel %vm2365, 1, 0
    %v2370 = vsel %vm2366, 1, 0
    %v2371 = vsel %vm2367, 1, 0
    %v2372 = vcvt.s32.f32 %v2368
    %v2373 = vcvt.s32.f32 %v2369
    %v2374 = vcvt.s32.f32 %v2370
    %v2375 = vcvt.s32.f32 %v2371
    %v2376 = vpack.c.bf16 %v2373, %v2372
    %v2377 = vpack.c.bf16 %v2375, %v2374
    %v2380 = vunpack.c.l.b16 %v2376
    %v2381 = vunpack.c.h.b16 %v2376
    %v2382 = vunpack.c.l.b16 %v2377
    %v2383 = vunpack.c.h.b16 %v2377
    %v2384 = vpack.c.b16 %v2380, %v2380
    %v2385 = vpack.c.b16 %v2381, %v2381
    %v2386 = vpack.c.b16 %v2382, %v2382
    %v2387 = vpack.c.b16 %v2383, %v2383
    %2392 = vst [vmem:[#allocation6] sm:$0xf] %v2384
    %2393 = vst [vmem:[#allocation6 + $0x4] sm:$0xf] %v2385
    %2394 = vst [vmem:[#allocation6 + $0x8] sm:$0xf] %v2386
    %2395 = vst [vmem:[#allocation6 + $0xc] sm:$0xf] %v2387
    %v2396 = vld [vmem:[#allocation3 + $0x8] sm:$0xff]
    %v2397 = vld [vmem:[#allocation3 + $0x48] sm:$0xff]
    %v2398 = vld [vmem:[#allocation3 + $0x88] sm:$0xff]
    %v2399 = vld [vmem:[#allocation3 + $0xc8] sm:$0xff]
    %v2400 = vadd.f32 %v2396, %v2335
    %v2401 = vadd.f32 %v2397, %v2340
    %v2402 = vadd.f32 %v2398, %v2345
    %v2403 = vadd.f32 %v2399, %v2350
    %v2404 = vmul.f32 %v2360, %v2372
    %v2405 = vmul.f32 %v2361, %v2373
    %v2406 = vmul.f32 %v2362, %v2374
    %v2407 = vmul.f32 %v2363, %v2375
    %v2408 = vsub.f32 %v2360, %v2404
    %v2409 = vsub.f32 %v2361, %v2405
    %v2410 = vsub.f32 %v2362, %v2406
    %v2411 = vsub.f32 %v2363, %v2407
    %v2412 = vmul.f32 %v2408, 0.5
    %v2413 = vmul.f32 %v2409, 0.5
    %v2414 = vmul.f32 %v2410, 0.5
    %v2415 = vmul.f32 %v2411, 0.5
    %v2416 = vadd.f32 %v2412, %v2400
    %v2417 = vadd.f32 %v2413, %v2401
    %v2418 = vadd.f32 %v2414, %v2402
    %v2419 = vadd.f32 %v2415, %v2403
    %vm2420 = vcmp.gt.f32.partialorder %v2416, 0.5
    %vm2421 = vcmp.gt.f32.partialorder %v2417, 0.5
    %vm2422 = vcmp.gt.f32.partialorder %v2418, 0.5
    %vm2423 = vcmp.gt.f32.partialorder %v2419, 0.5
    %v2424 = vsel %vm2420, 1, 0
    %v2425 = vsel %vm2421, 1, 0
    %v2426 = vsel %vm2422, 1, 0
    %v2427 = vsel %vm2423, 1, 0
    %v2428 = vcvt.s32.f32 %v2424
    %v2429 = vcvt.s32.f32 %v2425
    %v2430 = vcvt.s32.f32 %v2426
    %v2431 = vcvt.s32.f32 %v2427
    %v2432 = vpack.c.bf16 %v2429, %v2428
    %v2433 = vpack.c.bf16 %v2431, %v2430
    %v2436 = vunpack.c.l.b16 %v2432
    %v2437 = vunpack.c.h.b16 %v2432
    %v2438 = vunpack.c.l.b16 %v2433
    %v2439 = vunpack.c.h.b16 %v2433
    %v2440 = vpack.c.b16 %v2436, %v2436
    %v2441 = vpack.c.b16 %v2437, %v2437
    %v2442 = vpack.c.b16 %v2438, %v2438
    %v2443 = vpack.c.b16 %v2439, %v2439
    %s2448 = scalar_lea.vmem [#allocation6], 16
    %2449 = vst [vmem:[%s2448] sm:$0xf] %v2440
    %2450 = vst [vmem:[%s2448 + $0x4] sm:$0xf] %v2441
    %2451 = vst [vmem:[%s2448 + $0x8] sm:$0xf] %v2442
    %2452 = vst [vmem:[%s2448 + $0xc] sm:$0xf] %v2443
    %v2453 = vld [vmem:[#allocation3 + $0x10] sm:$0xff]
    %v2454 = vld [vmem:[#allocation3 + $0x50] sm:$0xff]
    %v2455 = vld [vmem:[#allocation3 + $0x90] sm:$0xff]
    %v2456 = vld [vmem:[#allocation3 + $0xd0] sm:$0xff]
    %v2457 = vadd.f32 %v2453, %v2335
    %v2458 = vadd.f32 %v2454, %v2340
    %v2459 = vadd.f32 %v2455, %v2345
    %v2460 = vadd.f32 %v2456, %v2350
    %v2461 = vmul.f32 %v2416, %v2428
    %v2462 = vmul.f32 %v2417, %v2429
    %v2463 = vmul.f32 %v2418, %v2430
    %v2464 = vmul.f32 %v2419, %v2431
    %v2465 = vsub.f32 %v2416, %v2461
    %v2466 = vsub.f32 %v2417, %v2462
    %v2467 = vsub.f32 %v2418, %v2463
    %v2468 = vsub.f32 %v2419, %v2464
    %v2469 = vmul.f32 %v2465, 0.5
    %v2470 = vmul.f32 %v2466, 0.5
    %v2471 = vmul.f32 %v2467, 0.5
    %v2472 = vmul.f32 %v2468, 0.5
    %v2473 = vadd.f32 %v2469, %v2457
    %v2474 = vadd.f32 %v2470, %v2458
    %v2475 = vadd.f32 %v2471, %v2459
    %v2476 = vadd.f32 %v2472, %v2460
    %vm2477 = vcmp.gt.f32.partialorder %v2473, 0.5
    %vm2478 = vcmp.gt.f32.partialorder %v2474, 0.5
    %vm2479 = vcmp.gt.f32.partialorder %v2475, 0.5
    %vm2480 = vcmp.gt.f32.partialorder %v2476, 0.5
    %v2481 = vsel %vm2477, 1, 0
    %v2482 = vsel %vm2478, 1, 0
    %v2483 = vsel %vm2479, 1, 0
    %v2484 = vsel %vm2480, 1, 0
    %v2485 = vcvt.s32.f32 %v2481
    %v2486 = vcvt.s32.f32 %v2482
    %v2487 = vcvt.s32.f32 %v2483
    %v2488 = vcvt.s32.f32 %v2484
    %v2489 = vpack.c.bf16 %v2486, %v2485
    %v2490 = vpack.c.bf16 %v2488, %v2487
    %v2493 = vunpack.c.l.b16 %v2489
    %v2494 = vunpack.c.h.b16 %v2489
    %v2495 = vunpack.c.l.b16 %v2490
    %v2496 = vunpack.c.h.b16 %v2490
    %v2497 = vpack.c.b16 %v2493, %v2493
    %v2498 = vpack.c.b16 %v2494, %v2494
    %v2499 = vpack.c.b16 %v2495, %v2495
    %v2500 = vpack.c.b16 %v2496, %v2496
    %s2505 = scalar_lea.vmem [#allocation6], 32
    %2506 = vst [vmem:[%s2505] sm:$0xf] %v2497
    %2507 = vst [vmem:[%s2505 + $0x4] sm:$0xf] %v2498
    %2508 = vst [vmem:[%s2505 + $0x8] sm:$0xf] %v2499
    %2509 = vst [vmem:[%s2505 + $0xc] sm:$0xf] %v2500
    %v2510 = vld [vmem:[#allocation3 + $0x18] sm:$0xff]
    %v2511 = vld [vmem:[#allocation3 + $0x58] sm:$0xff]
    %v2512 = vld [vmem:[#allocation3 + $0x98] sm:$0xff]
    %v2513 = vld [vmem:[#allocation3 + $0xd8] sm:$0xff]
    %v2514 = vadd.f32 %v2510, %v2335
    %v2515 = vadd.f32 %v2511, %v2340
    %v2516 = vadd.f32 %v2512, %v2345
    %v2517 = vadd.f32 %v2513, %v2350
    %v2518 = vmul.f32 %v2473, %v2485
    %v2519 = vmul.f32 %v2474, %v2486
    %v2520 = vmul.f32 %v2475, %v2487
    %v2521 = vmul.f32 %v2476, %v2488
    %v2522 = vsub.f32 %v2473, %v2518
    %v2523 = vsub.f32 %v2474, %v2519
    %v2524 = vsub.f32 %v2475, %v2520
    %v2525 = vsub.f32 %v2476, %v2521
    %v2526 = vmul.f32 %v2522, 0.5
    %v2527 = vmul.f32 %v2523, 0.5
    %v2528 = vmul.f32 %v2524, 0.5
    %v2529 = vmul.f32 %v2525, 0.5
    %v2530 = vadd.f32 %v2526, %v2514
    %v2531 = vadd.f32 %v2527, %v2515
    %v2532 = vadd.f32 %v2528, %v2516
    %v2533 = vadd.f32 %v2529, %v2517
    %vm2534 = vcmp.gt.f32.partialorder %v2530, 0.5
    %vm2535 = vcmp.gt.f32.partialorder %v2531, 0.5
    %vm2536 = vcmp.gt.f32.partialorder %v2532, 0.5
    %vm2537 = vcmp.gt.f32.partialorder %v2533, 0.5
    %v2538 = vsel %vm2534, 1, 0
    %v2539 = vsel %vm2535, 1, 0
    %v2540 = vsel %vm2536, 1, 0
    %v2541 = vsel %vm2537, 1, 0
    %v2542 = vcvt.s32.f32 %v2538
    %v2543 = vcvt.s32.f32 %v2539
    %v2544 = vcvt.s32.f32 %v2540
    %v2545 = vcvt.s32.f32 %v2541
    %v2546 = vpack.c.bf16 %v2543, %v2542
    %v2547 = vpack.c.bf16 %v2545, %v2544
    %v2550 = vunpack.c.l.b16 %v2546
    %v2551 = vunpack.c.h.b16 %v2546
    %v2552 = vunpack.c.l.b16 %v2547
    %v2553 = vunpack.c.h.b16 %v2547
    %v2554 = vpack.c.b16 %v2550, %v2550
    %v2555 = vpack.c.b16 %v2551, %v2551
    %v2556 = vpack.c.b16 %v2552, %v2552
    %v2557 = vpack.c.b16 %v2553, %v2553
    %s2562 = scalar_lea.vmem [#allocation6], 48
    %2563 = vst [vmem:[%s2562] sm:$0xf] %v2554
    %2564 = vst [vmem:[%s2562 + $0x4] sm:$0xf] %v2555
    %2565 = vst [vmem:[%s2562 + $0x8] sm:$0xf] %v2556
    %2566 = vst [vmem:[%s2562 + $0xc] sm:$0xf] %v2557
    %v2567 = vld [vmem:[#allocation3 + $0x20] sm:$0xff]
    %v2568 = vld [vmem:[#allocation3 + $0x60] sm:$0xff]
    %v2569 = vld [vmem:[#allocation3 + $0xa0] sm:$0xff]
    %v2570 = vld [vmem:[#allocation3 + $0xe0] sm:$0xff]
    %v2571 = vadd.f32 %v2567, %v2335
    %v2572 = vadd.f32 %v2568, %v2340
    %v2573 = vadd.f32 %v2569, %v2345
    %v2574 = vadd.f32 %v2570, %v2350
    %v2575 = vmul.f32 %v2530, %v2542
    %v2576 = vmul.f32 %v2531, %v2543
    %v2577 = vmul.f32 %v2532, %v2544
    %v2578 = vmul.f32 %v2533, %v2545
    %v2579 = vsub.f32 %v2530, %v2575
    %v2580 = vsub.f32 %v2531, %v2576
    %v2581 = vsub.f32 %v2532, %v2577
    %v2582 = vsub.f32 %v2533, %v2578
    %v2583 = vmul.f32 %v2579, 0.5
    %v2584 = vmul.f32 %v2580, 0.5
    %v2585 = vmul.f32 %v2581, 0.5
    %v2586 = vmul.f32 %v2582, 0.5
    %v2587 = vadd.f32 %v2583, %v2571
    %v2588 = vadd.f32 %v2584, %v2572
    %v2589 = vadd.f32 %v2585, %v2573
    %v2590 = vadd.f32 %v2586, %v2574
    %vm2591 = vcmp.gt.f32.partialorder %v2587, 0.5
    %vm2592 = vcmp.gt.f32.partialorder %v2588, 0.5
    %vm2593 = vcmp.gt.f32.partialorder %v2589, 0.5
    %vm2594 = vcmp.gt.f32.partialorder %v2590, 0.5
    %v2595 = vsel %vm2591, 1, 0
    %v2596 = vsel %vm2592, 1, 0
    %v2597 = vsel %vm2593, 1, 0
    %v2598 = vsel %vm2594, 1, 0
    %v2599 = vcvt.s32.f32 %v2595
    %v2600 = vcvt.s32.f32 %v2596
    %v2601 = vcvt.s32.f32 %v2597
    %v2602 = vcvt.s32.f32 %v2598
    %v2603 = vpack.c.bf16 %v2600, %v2599
    %v2604 = vpack.c.bf16 %v2602, %v2601
    %v2607 = vunpack.c.l.b16 %v2603
    %v2608 = vunpack.c.h.b16 %v2603
    %v2609 = vunpack.c.l.b16 %v2604
    %v2610 = vunpack.c.h.b16 %v2604
    %v2611 = vpack.c.b16 %v2607, %v2607
    %v2612 = vpack.c.b16 %v2608, %v2608
    %v2613 = vpack.c.b16 %v2609, %v2609
    %v2614 = vpack.c.b16 %v2610, %v2610
    %s2619 = scalar_lea.vmem [#allocation6], 64
    %2620 = vst [vmem:[%s2619] sm:$0xf] %v2611
    %2621 = vst [vmem:[%s2619 + $0x4] sm:$0xf] %v2612
    %2622 = vst [vmem:[%s2619 + $0x8] sm:$0xf] %v2613
    %2623 = vst [vmem:[%s2619 + $0xc] sm:$0xf] %v2614
    %v2624 = vld [vmem:[#allocation3 + $0x28] sm:$0xff]
    %v2625 = vld [vmem:[#allocation3 + $0x68] sm:$0xff]
    %v2626 = vld [vmem:[#allocation3 + $0xa8] sm:$0xff]
    %v2627 = vld [vmem:[#allocation3 + $0xe8] sm:$0xff]
    %v2628 = vadd.f32 %v2624, %v2335
    %v2629 = vadd.f32 %v2625, %v2340
    %v2630 = vadd.f32 %v2626, %v2345
    %v2631 = vadd.f32 %v2627, %v2350
    %v2632 = vmul.f32 %v2587, %v2599
    %v2633 = vmul.f32 %v2588, %v2600
    %v2634 = vmul.f32 %v2589, %v2601
    %v2635 = vmul.f32 %v2590, %v2602
    %v2636 = vsub.f32 %v2587, %v2632
    %v2637 = vsub.f32 %v2588, %v2633
    %v2638 = vsub.f32 %v2589, %v2634
    %v2639 = vsub.f32 %v2590, %v2635
    %v2640 = vmul.f32 %v2636, 0.5
    %v2641 = vmul.f32 %v2637, 0.5
    %v2642 = vmul.f32 %v2638, 0.5
    %v2643 = vmul.f32 %v2639, 0.5
    %v2644 = vadd.f32 %v2640, %v2628
    %v2645 = vadd.f32 %v2641, %v2629
    %v2646 = vadd.f32 %v2642, %v2630
    %v2647 = vadd.f32 %v2643, %v2631
    %vm2648 = vcmp.gt.f32.partialorder %v2644, 0.5
    %vm2649 = vcmp.gt.f32.partialorder %v2645, 0.5
    %vm2650 = vcmp.gt.f32.partialorder %v2646, 0.5
    %vm2651 = vcmp.gt.f32.partialorder %v2647, 0.5
    %v2652 = vsel %vm2648, 1, 0
    %v2653 = vsel %vm2649, 1, 0
    %v2654 = vsel %vm2650, 1, 0
    %v2655 = vsel %vm2651, 1, 0
    %v2656 = vcvt.s32.f32 %v2652
    %v2657 = vcvt.s32.f32 %v2653
    %v2658 = vcvt.s32.f32 %v2654
    %v2659 = vcvt.s32.f32 %v2655
    %v2660 = vpack.c.bf16 %v2657, %v2656
    %v2661 = vpack.c.bf16 %v2659, %v2658
    %v2664 = vunpack.c.l.b16 %v2660
    %v2665 = vunpack.c.h.b16 %v2660
    %v2666 = vunpack.c.l.b16 %v2661
    %v2667 = vunpack.c.h.b16 %v2661
    %v2668 = vpack.c.b16 %v2664, %v2664
    %v2669 = vpack.c.b16 %v2665, %v2665
    %v2670 = vpack.c.b16 %v2666, %v2666
    %v2671 = vpack.c.b16 %v2667, %v2667
    %s2676 = scalar_lea.vmem [#allocation6], 80
    %2677 = vst [vmem:[%s2676] sm:$0xf] %v2668
    %2678 = vst [vmem:[%s2676 + $0x4] sm:$0xf] %v2669
    %2679 = vst [vmem:[%s2676 + $0x8] sm:$0xf] %v2670
    %2680 = vst [vmem:[%s2676 + $0xc] sm:$0xf] %v2671
    %v2681 = vld [vmem:[#allocation3 + $0x30] sm:$0xff]
    %v2682 = vld [vmem:[#allocation3 + $0x70] sm:$0xff]
    %v2683 = vld [vmem:[#allocation3 + $0xb0] sm:$0xff]
    %v2684 = vld [vmem:[#allocation3 + $0xf0] sm:$0xff]
    %v2685 = vadd.f32 %v2681, %v2335
    %v2686 = vadd.f32 %v2682, %v2340
    %v2687 = vadd.f32 %v2683, %v2345
    %v2688 = vadd.f32 %v2684, %v2350
    %v2689 = vmul.f32 %v2644, %v2656
    %v2690 = vmul.f32 %v2645, %v2657
    %v2691 = vmul.f32 %v2646, %v2658
    %v2692 = vmul.f32 %v2647, %v2659
    %v2693 = vsub.f32 %v2644, %v2689
    %v2694 = vsub.f32 %v2645, %v2690
    %v2695 = vsub.f32 %v2646, %v2691
    %v2696 = vsub.f32 %v2647, %v2692
    %v2697 = vmul.f32 %v2693, 0.5
    %v2698 = vmul.f32 %v2694, 0.5
    %v2699 = vmul.f32 %v2695, 0.5
    %v2700 = vmul.f32 %v2696, 0.5
    %v2701 = vadd.f32 %v2697, %v2685
    %v2702 = vadd.f32 %v2698, %v2686
    %v2703 = vadd.f32 %v2699, %v2687
    %v2704 = vadd.f32 %v2700, %v2688
    %vm2705 = vcmp.gt.f32.partialorder %v2701, 0.5
    %vm2706 = vcmp.gt.f32.partialorder %v2702, 0.5
    %vm2707 = vcmp.gt.f32.partialorder %v2703, 0.5
    %vm2708 = vcmp.gt.f32.partialorder %v2704, 0.5
    %v2709 = vsel %vm2705, 1, 0
    %v2710 = vsel %vm2706, 1, 0
    %v2711 = vsel %vm2707, 1, 0
    %v2712 = vsel %vm2708, 1, 0
    %v2713 = vcvt.s32.f32 %v2709
    %v2714 = vcvt.s32.f32 %v2710
    %v2715 = vcvt.s32.f32 %v2711
    %v2716 = vcvt.s32.f32 %v2712
    %v2717 = vpack.c.bf16 %v2714, %v2713
    %v2718 = vpack.c.bf16 %v2716, %v2715
    %v2721 = vunpack.c.l.b16 %v2717
    %v2722 = vunpack.c.h.b16 %v2717
    %v2723 = vunpack.c.l.b16 %v2718
    %v2724 = vunpack.c.h.b16 %v2718
    %v2725 = vpack.c.b16 %v2721, %v2721
    %v2726 = vpack.c.b16 %v2722, %v2722
    %v2727 = vpack.c.b16 %v2723, %v2723
    %v2728 = vpack.c.b16 %v2724, %v2724
    %s2733 = scalar_lea.vmem [#allocation6], 96
    %2734 = vst [vmem:[%s2733] sm:$0xf] %v2725
    %2735 = vst [vmem:[%s2733 + $0x4] sm:$0xf] %v2726
    %2736 = vst [vmem:[%s2733 + $0x8] sm:$0xf] %v2727
    %2737 = vst [vmem:[%s2733 + $0xc] sm:$0xf] %v2728
    %v2738 = vld [vmem:[#allocation3 + $0x38] sm:$0xff]
    %v2739 = vld [vmem:[#allocation3 + $0x78] sm:$0xff]
    %v2740 = vld [vmem:[#allocation3 + $0xb8] sm:$0xff]
    %v2741 = vld [vmem:[#allocation3 + $0xf8] sm:$0xff]
    %v2742 = vadd.f32 %v2738, %v2335
    %v2743 = vadd.f32 %v2739, %v2340
    %v2744 = vadd.f32 %v2740, %v2345
    %v2745 = vadd.f32 %v2741, %v2350
    %v2746 = vmul.f32 %v2701, %v2713
    %v2747 = vmul.f32 %v2702, %v2714
    %v2748 = vmul.f32 %v2703, %v2715
    %v2749 = vmul.f32 %v2704, %v2716
    %v2750 = vsub.f32 %v2701, %v2746
    %v2751 = vsub.f32 %v2702, %v2747
    %v2752 = vsub.f32 %v2703, %v2748
    %v2753 = vsub.f32 %v2704, %v2749
    %v2754 = vmul.f32 %v2750, 0.5
    %v2755 = vmul.f32 %v2751, 0.5
    %v2756 = vmul.f32 %v2752, 0.5
    %v2757 = vmul.f32 %v2753, 0.5
    %v2758 = vadd.f32 %v2754, %v2742
    %v2759 = vadd.f32 %v2755, %v2743
    %v2760 = vadd.f32 %v2756, %v2744
    %v2761 = vadd.f32 %v2757, %v2745
    %vm2762 = vcmp.gt.f32.partialorder %v2758, 0.5
    %vm2763 = vcmp.gt.f32.partialorder %v2759, 0.5
    %vm2764 = vcmp.gt.f32.partialorder %v2760, 0.5
    %vm2765 = vcmp.gt.f32.partialorder %v2761, 0.5
    %v2766 = vsel %vm2762, 1, 0
    %v2767 = vsel %vm2763, 1, 0
    %v2768 = vsel %vm2764, 1, 0
    %v2769 = vsel %vm2765, 1, 0
    %v2770 = vcvt.s32.f32 %v2766
    %v2771 = vcvt.s32.f32 %v2767
    %v2772 = vcvt.s32.f32 %v2768
    %v2773 = vcvt.s32.f32 %v2769
    %v2774 = vpack.c.bf16 %v2771, %v2770
    %v2775 = vpack.c.bf16 %v2773, %v2772
    %v2778 = vunpack.c.l.b16 %v2774
    %v2779 = vunpack.c.h.b16 %v2774
    %v2780 = vunpack.c.l.b16 %v2775
    %v2781 = vunpack.c.h.b16 %v2775
    %v2782 = vpack.c.b16 %v2778, %v2778
    %v2783 = vpack.c.b16 %v2779, %v2779
    %v2784 = vpack.c.b16 %v2780, %v2780
    %v2785 = vpack.c.b16 %v2781, %v2781
    %s2790 = scalar_lea.vmem [#allocation6], 112
    %2791 = vst [vmem:[%s2790] sm:$0xf] %v2782
    %2792 = vst [vmem:[%s2790 + $0x4] sm:$0xf] %v2783
    %2793 = vst [vmem:[%s2790 + $0x8] sm:$0xf] %v2784
    %2794 = vst [vmem:[%s2790 + $0xc] sm:$0xf] %v2785
    // Predicated region
    $region18: #{tpu_custom_call.1} parent=1 // pred_check
      _
    $region19: #{tpu_custom_call.1} parent=1 // pred_check_branch
      %2796 = sbr.rel (0) target = $region21
    $region20: #{tpu_custom_call.1} parent=1 // pred_region
      %s2798 = ssub.s32 2048, 2048
      %2799 = vsyncadd [#allocation7], %s2798
      %s2800 = sshll.u32 [#allocation6], 4
      %s2801 = int_to_ptr.vmem [resolvable:$true] %s2800
      %2806 = dma.vmem_to_hbm [thread:$0]  %s2801, 2048, %s5, [#allocation7], 64, 64, 4
    $region21: #{tpu_custom_call.1} parent=1 // pred_fallthru
      _
    // Predicated region
    $region22: #{tpu_custom_call.1} parent=1 // pred_check
      _
    $region23: #{tpu_custom_call.1} parent=1 // pred_check_branch
      %2808 = sbr.rel (0) target = $region25
    $region24: #{tpu_custom_call.1} parent=1 // pred_region
      %2809 = dma.done [#allocation7], 2048
    $region25: #{tpu_custom_call.1} parent=1 // pred_fallthru
      _
    %2810 = vsyncpa [#allocation7], 1

</llo_original>
